<compile_context>
chip_gen: v5e
topology: v5e:2x2
jax: 0.10.0
libtpu: 0.0.40
codegen_flags: <defaults>
</compile_context>

<pallas_src>
import functools

import jax
import jax.numpy as jnp
from jax.experimental import pallas as pl
from jax.experimental.pallas import tpu as pltpu


def _round_up(x, m):
    return (x + m - 1) // m * m


def _pick_divisor(n, candidates):
    """Largest candidate that divides n, else n itself (full extent)."""
    for c in candidates:
        if c <= n and n % c == 0:
            return c
    return n


# ----------------------------------------------------------------------------
# Kernel 1: hoisted input projection.
#   gi[d] = sum_over_input_slabs( x[s] @ W[d, s] ) + b[d]
# x: (Din, M, K)   W: (2, Din, K, 3*Hp)   b: (2, 1, 3*Hp)   gi: (2, M, 3*Hp)
# Din = 1 for layer 0 (embedding input), 2 for deeper layers (fwd/bwd slabs).
# Grid = (direction, M-tile, input-slab); the slab axis is the reduction and
# accumulates into the resident output block.
# ----------------------------------------------------------------------------
def _proj_kernel(x_ref, w_ref, b_ref, gi_ref):
    contrib = jnp.dot(x_ref[0], w_ref[0, 0], preferred_element_type=jnp.float32)

    @pl.when(pl.program_id(2) == 0)
    def _():
        gi_ref[0] = contrib + b_ref[0]

    @pl.when(pl.program_id(2) > 0)
    def _():
        gi_ref[0] = gi_ref[0] + contrib


def input_projection(x, w, b):
    din, m, k = x.shape
    g = w.shape[-1]  # 3*Hp
    tm = _pick_divisor(m, (512, 256, 128, 64, 32, 16, 8))
    nm = m // tm
    return pl.pallas_call(
        _proj_kernel,
        grid=(2, nm, din),
        in_specs=[
            pl.BlockSpec((1, tm, k), lambda d, mi, s: (s, mi, 0)),
            pl.BlockSpec((1, 1, k, g), lambda d, mi, s: (d, s, 0, 0)),
            pl.BlockSpec((1, 1, g), lambda d, mi, s: (d, 0, 0)),
        ],
        out_specs=pl.BlockSpec((1, tm, g), lambda d, mi, s: (d, mi, 0)),
        out_shape=jax.ShapeDtypeStruct((2, m, g), jnp.float32),
        compiler_params=pltpu.CompilerParams(
            dimension_semantics=("parallel", "parallel", "arbitrary")),
    )(x, w, b)


# ----------------------------------------------------------------------------
# Kernel 2: bidirectional GRU recurrence, time-blocked.
# Grid = (direction, time-block). Direction axis is "parallel" (2 TCs on v7x),
# the time-block axis is "arbitrary" and carries the hidden state in a VMEM
# scratch.  Inside a block, an unrolled fori_loop walks tblk timesteps with the
# hidden state carried in vregs.  The backward direction walks blocks in
# reverse via the index_map and steps in reverse via the in-block index.
# gi already contains b_ih + b_hh for the r/z gates; b_hh(n) is added here.
# ----------------------------------------------------------------------------
def _bigru_block_kernel(gi_ref, whh_ref, bhn_ref, out_ref, hlast_ref, h_scr):
    d = pl.program_id(0)
    tb = pl.program_id(1)
    tblk = gi_ref.shape[1]
    hp = h_scr.shape[-1]

    @pl.when(tb == 0)
    def _():
        h_scr[...] = jnp.zeros_like(h_scr)

    bhn = bhn_ref[0]  # (1, Hp), broadcasts over batch

    def step(i, h_prev):
        # forward (d=0): t_in = i ; backward (d=1): t_in = tblk-1-i
        t_in = i + d * (tblk - 1 - 2 * i)
        gi = gi_ref[0, t_in]                                     # (B, 3*Hp)
        gh = jnp.dot(h_prev, whh_ref[0], preferred_element_type=jnp.float32)

        # PyTorch gate order [r, z, n]; slices are 128-lane aligned.
        r = jax.nn.sigmoid(gi[:, 0:hp] + gh[:, 0:hp])
        z = jax.nn.sigmoid(gi[:, hp:2 * hp] + gh[:, hp:2 * hp])
        n = jnp.tanh(gi[:, 2 * hp:] + r * (gh[:, 2 * hp:] + bhn))
        h_new = n + z * (h_prev - n)        # == (1-z)*n + z*h_prev
        out_ref[0, t_in] = h_new
        return h_new

    h_final = jax.lax.fori_loop(0, tblk, step, h_scr[...], unroll=True)
    h_scr[...] = h_final

    @pl.when(tb == pl.num_programs(1) - 1)
    def _():
        hlast_ref[0] = h_final


def bigru_recurrence(gi, whh, bhn, *, seq, batch, hp):
    g = 3 * hp
    tblk = _pick_divisor(seq, (8, 4, 2, 1))
    nblk = seq // tblk

    def _blk(d, t):
        # d == 0 (forward): blocks 0..nblk-1 ; d == 1 (backward): nblk-1..0
        return t + d * (nblk - 1 - 2 * t)

    out, hlast = pl.pallas_call(
        _bigru_block_kernel,
        grid=(2, nblk),
        in_specs=[
            pl.BlockSpec((1, tblk, batch, g), lambda d, t: (d, _blk(d, t), 0, 0)),
            pl.BlockSpec((1, hp, g), lambda d, t: (d, 0, 0)),
            pl.BlockSpec((1, 1, hp), lambda d, t: (d, 0, 0)),
        ],
        out_specs=[
            pl.BlockSpec((1, tblk, batch, hp), lambda d, t: (d, _blk(d, t), 0, 0)),
            pl.BlockSpec((1, batch, hp), lambda d, t: (d, 0, 0)),
        ],
        out_shape=[
            jax.ShapeDtypeStruct((2, seq, batch, hp), jnp.float32),
            jax.ShapeDtypeStruct((2, batch, hp), jnp.float32),
        ],
        scratch_shapes=[pltpu.VMEM((batch, hp), jnp.float32)],
        compiler_params=pltpu.CompilerParams(
            dimension_semantics=("parallel", "arbitrary")),
    )(gi, whh, bhn)
    return out, hlast


# ----------------------------------------------------------------------------
# Model forward (glue in jitted JAX; hot loops in the Pallas kernels above).
# ----------------------------------------------------------------------------
@functools.partial(jax.jit, static_argnums=(2, 3))
def _forward_impl(text, tensors, hidden, hp):
    embedding, layers, fc_w_t, fc_b = tensors
    seq, batch = text.shape

    # embedding lookup (gather) + dropout (identity in eval mode)
    x = embedding[text].astype(jnp.float32)            # (seq, B, E)
    x = x.reshape(1, seq * batch, -1)                  # (Din=1, M, E)

    hlast = None
    for layer in layers:
        gi = input_projection(x, layer["w_proj"], layer["b_proj"])  # (2, M, 3Hp)
        gi = gi.reshape(2, seq, batch, 3 * hp)
        out, hlast = bigru_recurrence(gi, layer["whh"], layer["bhn"],
                                      seq=seq, batch=batch, hp=hp)
        x = out.reshape(2, seq * batch, hp)  # per-direction slabs for next layer
        # TODO(synk): inter-layer dropout (train mode only) omitted — eval forward.

    # hidden[-2] / hidden[-1] = last layer fwd / bwd final states.
    hcat = jnp.concatenate([hlast[0, :, :hidden], hlast[1, :, :hidden]], axis=1)
    # Tiny (B,2H)x(2H,out) FC deliberately left to XLA: a Pallas launch with
    # 4-lane masked stores would cost more than the compute.
    return hcat @ fc_w_t + fc_b


def gru_model_forward(text, params):
    tensors = (params["embedding"], params["layers"],
               params["fc_w_t"], params["fc_b"])
    return _forward_impl(text, tensors, params["hidden"], params["hp"])


# ----------------------------------------------------------------------------
# Parameter construction: PyTorch-layout raw weights + packed kernel layout.
# ----------------------------------------------------------------------------
def _pack_gate_cols(w_t, hidden, hp):
    """(in_dim, 3*H) gate-major cols [r|z|n] -> (in_dim, 3*Hp), lane-aligned."""
    out = jnp.zeros((w_t.shape[0], 3 * hp), jnp.float32)
    for g in range(3):
        out = out.at[:, g * hp:g * hp + hidden].set(
            w_t[:, g * hidden:(g + 1) * hidden])
    return out


def _pack_gate_vec(v, hidden, hp):
    out = jnp.zeros((3 * hp,), jnp.float32)
    for g in range(3):
        out = out.at[g * hp:g * hp + hidden].set(v[g * hidden:(g + 1) * hidden])
    return out


def init_raw_params(key, vocab, emb_dim, hidden, out_dim, num_layers):
    k_emb, k_rnn, k_fc = jax.random.split(key, 3)
    raw = {"embedding": jax.random.normal(k_emb, (vocab, emb_dim), jnp.float32)}
    bound = 1.0 / (hidden ** 0.5)
    rk = jax.random.split(k_rnn, num_layers * 2 * 4).reshape(num_layers, 2, 4, 2)
    layers = []
    for li in range(num_layers):
        in_dim = emb_dim if li == 0 else 2 * hidden
        dirs = []
        for d in range(2):
            ks = rk[li, d]
            wih = jax.random.uniform(ks[0], (3 * hidden, in_dim), jnp.float32, -bound, bound)
            whh = jax.random.uniform(ks[1], (3 * hidden, hidden), jnp.float32, -bound, bound)
            bih = jax.random.uniform(ks[2], (3 * hidden,), jnp.float32, -bound, bound)
            bhh = jax.random.uniform(ks[3], (3 * hidden,), jnp.float32, -bound, bound)
            dirs.append((wih, whh, bih, bhh))
        layers.append(dirs)
    raw["layers"] = layers
    kf1, kf2 = jax.random.split(k_fc)
    fb = 1.0 / ((2 * hidden) ** 0.5)
    raw["fc_w"] = jax.random.uniform(kf1, (out_dim, 2 * hidden), jnp.float32, -fb, fb)
    raw["fc_b"] = jax.random.uniform(kf2, (out_dim,), jnp.float32, -fb, fb)
    return raw


def pack_params(raw, hidden):
    hp = _round_up(hidden, 128)
    h = hidden
    packed = {"hidden": h, "hp": hp, "embedding": raw["embedding"],
              "fc_w_t": raw["fc_w"].T, "fc_b": raw["fc_b"], "layers": []}
    for li, layer in enumerate(raw["layers"]):
        wps, bps, whhs, bhns = [], [], [], []
        for d in range(2):
            wih, whh, bih, bhh = layer[d]
            if li == 0:
                wp = _pack_gate_cols(wih.T, h, hp)[None]               # (1, E, 3Hp)
            else:
                halves = []
                for din in range(2):                                   # fwd / bwd input slab
                    w_half = _pack_gate_cols(wih[:, din * h:(din + 1) * h].T, h, hp)
                    halves.append(jnp.zeros((hp, 3 * hp), jnp.float32).at[:h].set(w_half))
                wp = jnp.stack(halves)                                 # (2, Hp, 3Hp)
            wps.append(wp)
            # fold b_ih + b_hh for r,z gates into the hoisted projection bias
            bhh_rz = jnp.concatenate([bhh[:2 * h], jnp.zeros((h,), jnp.float32)])
            bps.append((_pack_gate_vec(bih, h, hp) + _pack_gate_vec(bhh_rz, h, hp))[None])
            w_hh_p = _pack_gate_cols(whh.T, h, hp)                     # (H, 3Hp)
            whhs.append(jnp.zeros((hp, 3 * hp), jnp.float32).at[:h].set(w_hh_p))
            bhns.append(jnp.zeros((hp,), jnp.float32).at[:h].set(bhh[2 * h:])[None])
        packed["layers"].append({
            "w_proj": jnp.stack(wps),   # (2, Din, K, 3Hp)
            "b_proj": jnp.stack(bps),   # (2, 1, 3Hp)
            "whh": jnp.stack(whhs),     # (2, Hp, 3Hp)
            "bhn": jnp.stack(bhns),     # (2, 1, Hp)
        })
    return packed


# ----------------------------------------------------------------------------
# Pure-JAX reference (PyTorch-equivalent math) for validation.
# ----------------------------------------------------------------------------
def ref_gru_direction(x, wih, whh, bih, bhh, hidden):
    batch = x.shape[1]

    def step(hh, x_t):
        gi = x_t @ wih.T + bih
        gh = hh @ whh.T + bhh
        r = jax.nn.sigmoid(gi[:, :hidden] + gh[:, :hidden])
        z = jax.nn.sigmoid(gi[:, hidden:2 * hidden] + gh[:, hidden:2 * hidden])
        n = jnp.tanh(gi[:, 2 * hidden:] + r * gh[:, 2 * hidden:])
        h_new = (1.0 - z) * n + z * hh
        return h_new, h_new

    h0 = jnp.zeros((batch, hidden), jnp.float32)
    h_last, out = jax.lax.scan(step, h0, x)
    return out, h_last


def ref_forward(text, raw, hidden):
    x = raw["embedding"][text].astype(jnp.float32)
    hf = hb = None
    for layer in raw["layers"]:
        of, hf = ref_gru_direction(x, *layer[0], hidden)
        ob_rev, hb = ref_gru_direction(jnp.flip(x, 0), *layer[1], hidden)
        x = jnp.concatenate([of, jnp.flip(ob_rev, 0)], axis=-1)
    hcat = jnp.concatenate([hf, hb], axis=1)
    return hcat @ raw["fc_w"].T + raw["fc_b"]


if __name__ == "__main__":
    VOCAB, EMB, HID, OUT, LAYERS = 50, 32, 32, 4, 2
    SEQ, BATCH = 8, 2

    key = jax.random.PRNGKey(0)
    k_par, k_txt = jax.random.split(key)
    raw = init_raw_params(k_par, VOCAB, EMB, HID, OUT, LAYERS)
    params = pack_params(raw, HID)
    text = jax.random.randint(k_txt, (SEQ, BATCH), 0, VOCAB, dtype=jnp.int32)

    out = jax.block_until_ready(gru_model_forward(text, params))
    ref = jax.block_until_ready(ref_forward(text, raw, HID))

    assert out.shape == (BATCH, OUT)
    assert jnp.allclose(out, ref, rtol=1e-3, atol=1e-3), (out, ref)

    print("KERNEL_OK")
</pallas_src>

<mosaic_0001>
module attributes {stable_mosaic.version = 11 : i64} {
  func.func @_proj_kernel(%arg0: i32, %arg1: i32, %arg2: i32, %arg3: memref<1x16x128xf32, #tpu.memory_space<vmem>>, %arg4: memref<1x1x128x384xf32, #tpu.memory_space<vmem>>, %arg5: memref<1x1x384xf32, #tpu.memory_space<vmem>>, %arg6: memref<1x16x384xf32, #tpu.memory_space<vmem>>) attributes {dimension_semantics = [#tpu.dimension_semantics<parallel>, #tpu.dimension_semantics<parallel>, #tpu.dimension_semantics<arbitrary>], iteration_bounds = array<i64: 2, 1, 2>, scalar_prefetch = 0 : i64, scratch_operands = 0 : i64, tpu.core_type = #tpu.core_type<tc>, window_params = [{transform_indices = @transform_0, window_bounds = array<i64: 1, 16, 128>}, {transform_indices = @transform_1, window_bounds = array<i64: 1, 1, 128, 384>}, {transform_indices = @transform_2, window_bounds = array<i64: 1, 1, 384>}, {transform_indices = @transform_3, window_bounds = array<i64: 1, 16, 384>}]} {
    %c0 = arith.constant 0 : index
    %c0_0 = arith.constant 0 : index
    %c0_1 = arith.constant 0 : index
    %0 = vector.load %arg3[%c0, %c0_0, %c0_1] : memref<1x16x128xf32, #tpu.memory_space<vmem>>, vector<1x16x128xf32>
    %1 = vector.shape_cast %0 : vector<1x16x128xf32> to vector<16x128xf32>
    %c0_2 = arith.constant 0 : index
    %c0_3 = arith.constant 0 : index
    %c0_4 = arith.constant 0 : index
    %c0_5 = arith.constant 0 : index
    %2 = vector.load %arg4[%c0_2, %c0_3, %c0_4, %c0_5] : memref<1x1x128x384xf32, #tpu.memory_space<vmem>>, vector<1x1x128x384xf32>
    %3 = vector.shape_cast %2 : vector<1x1x128x384xf32> to vector<128x384xf32>
    %cst = arith.constant dense<0.000000e+00> : vector<16x384xf32>
    %4 = tpu.matmul %1, %3, %cst {dimension_numbers = #tpu.dot_dimension_numbers<[1], [0], [0], [1], [0, 0, 1, 1], [], []>} : vector<16x128xf32>, vector<128x384xf32>, vector<16x384xf32> -> vector<16x384xf32>
    %c0_i32 = arith.constant 0 : i32
    %5 = arith.cmpi eq, %arg2, %c0_i32 : i32
    %6 = arith.extui %5 : i1 to i32
    %c0_i32_6 = arith.constant 0 : i32
    %7 = arith.cmpi ne, %6, %c0_i32_6 : i32
    scf.if %7 {
      %c0_9 = arith.constant 0 : index
      %c0_10 = arith.constant 0 : index
      %c0_11 = arith.constant 0 : index
      %11 = vector.load %arg5[%c0_9, %c0_10, %c0_11] : memref<1x1x384xf32, #tpu.memory_space<vmem>>, vector<1x1x384xf32>
      %12 = vector.shape_cast %11 : vector<1x1x384xf32> to vector<1x384xf32>
      %13 = vector.broadcast %12 : vector<1x384xf32> to vector<16x384xf32>
      %14 = arith.addf %4, %13 : vector<16x384xf32>
      %c0_12 = arith.constant 0 : index
      %c0_13 = arith.constant 0 : index
      %c0_14 = arith.constant 0 : index
      %15 = vector.load %arg6[%c0_12, %c0_13, %c0_14] : memref<1x16x384xf32, #tpu.memory_space<vmem>>, vector<1x16x384xf32>
      %16 = vector.shape_cast %15 : vector<1x16x384xf32> to vector<16x384xf32>
      %17 = vector.shape_cast %14 : vector<16x384xf32> to vector<1x16x384xf32>
      tpu.vector_store %arg6[%c0_12, %c0_13, %c0_14], %17 {strides = array<i32>} : memref<1x16x384xf32, #tpu.memory_space<vmem>>, vector<1x16x384xf32>,
    } else {
    }
    %c0_i32_7 = arith.constant 0 : i32
    %8 = arith.cmpi sgt, %arg2, %c0_i32_7 : i32
    %9 = arith.extui %8 : i1 to i32
    %c0_i32_8 = arith.constant 0 : i32
    %10 = arith.cmpi ne, %9, %c0_i32_8 : i32
    scf.if %10 {
      %c0_9 = arith.constant 0 : index
      %c0_10 = arith.constant 0 : index
      %c0_11 = arith.constant 0 : index
      %11 = vector.load %arg6[%c0_9, %c0_10, %c0_11] : memref<1x16x384xf32, #tpu.memory_space<vmem>>, vector<1x16x384xf32>
      %12 = vector.shape_cast %11 : vector<1x16x384xf32> to vector<16x384xf32>
      %13 = arith.addf %12, %4 : vector<16x384xf32>
      %c0_12 = arith.constant 0 : index
      %c0_13 = arith.constant 0 : index
      %c0_14 = arith.constant 0 : index
      %14 = vector.load %arg6[%c0_12, %c0_13, %c0_14] : memref<1x16x384xf32, #tpu.memory_space<vmem>>, vector<1x16x384xf32>
      %15 = vector.shape_cast %14 : vector<1x16x384xf32> to vector<16x384xf32>
      %16 = vector.shape_cast %13 : vector<16x384xf32> to vector<1x16x384xf32>
      tpu.vector_store %arg6[%c0_12, %c0_13, %c0_14], %16 {strides = array<i32>} : memref<1x16x384xf32, #tpu.memory_space<vmem>>, vector<1x16x384xf32>,
    } else {
    }
    return
  }
  func.func @transform_0(%arg0: i32, %arg1: i32, %arg2: i32) -> (i32, i32, i32) {
    %c0_i32 = arith.constant 0 : i32
    %c0_i32_0 = arith.constant 0 : i32
    return %arg2, %arg1, %c0_i32 : i32, i32, i32
  }
  func.func @transform_1(%arg0: i32, %arg1: i32, %arg2: i32) -> (i32, i32, i32, i32) {
    %c0_i32 = arith.constant 0 : i32
    %c0_i32_0 = arith.constant 0 : i32
    %c0_i32_1 = arith.constant 0 : i32
    return %arg0, %arg2, %c0_i32, %c0_i32_0 : i32, i32, i32, i32
  }
  func.func @transform_2(%arg0: i32, %arg1: i32, %arg2: i32) -> (i32, i32, i32) {
    %c0_i32 = arith.constant 0 : i32
    %c0_i32_0 = arith.constant 0 : i32
    %c0_i32_1 = arith.constant 0 : i32
    return %arg0, %c0_i32, %c0_i32_0 : i32, i32, i32
  }
  func.func @transform_3(%arg0: i32, %arg1: i32, %arg2: i32) -> (i32, i32, i32) {
    %c0_i32 = arith.constant 0 : i32
    %c0_i32_0 = arith.constant 0 : i32
    return %arg0, %arg1, %c0_i32 : i32, i32, i32
  }
}

module attributes {stable_mosaic.version = 11 : i64} {
  func.func @_proj_kernel(%arg0: i32, %arg1: i32, %arg2: i32, %arg3: memref<1x16x32xf32, #tpu.memory_space<vmem>>, %arg4: memref<1x1x32x384xf32, #tpu.memory_space<vmem>>, %arg5: memref<1x1x384xf32, #tpu.memory_space<vmem>>, %arg6: memref<1x16x384xf32, #tpu.memory_space<vmem>>) attributes {dimension_semantics = [#tpu.dimension_semantics<parallel>, #tpu.dimension_semantics<parallel>, #tpu.dimension_semantics<arbitrary>], iteration_bounds = array<i64: 2, 1, 1>, scalar_prefetch = 0 : i64, scratch_operands = 0 : i64, tpu.core_type = #tpu.core_type<tc>, window_params = [{transform_indices = @transform_0, window_bounds = array<i64: 1, 16, 32>}, {transform_indices = @transform_1, window_bounds = array<i64: 1, 1, 32, 384>}, {transform_indices = @transform_2, window_bounds = array<i64: 1, 1, 384>}, {transform_indices = @transform_3, window_bounds = array<i64: 1, 16, 384>}]} {
    %c0 = arith.constant 0 : index
    %c0_0 = arith.constant 0 : index
    %c0_1 = arith.constant 0 : index
    %0 = vector.load %arg3[%c0, %c0_0, %c0_1] : memref<1x16x32xf32, #tpu.memory_space<vmem>>, vector<1x16x32xf32>
    %1 = vector.shape_cast %0 : vector<1x16x32xf32> to vector<16x32xf32>
    %c0_2 = arith.constant 0 : index
    %c0_3 = arith.constant 0 : index
    %c0_4 = arith.constant 0 : index
    %c0_5 = arith.constant 0 : index
    %2 = vector.load %arg4[%c0_2, %c0_3, %c0_4, %c0_5] : memref<1x1x32x384xf32, #tpu.memory_space<vmem>>, vector<1x1x32x384xf32>
    %3 = vector.shape_cast %2 : vector<1x1x32x384xf32> to vector<32x384xf32>
    %cst = arith.constant dense<0.000000e+00> : vector<16x384xf32>
    %4 = tpu.matmul %1, %3, %cst {dimension_numbers = #tpu.dot_dimension_numbers<[1], [0], [0], [1], [0, 0, 1, 1], [], []>} : vector<16x32xf32>, vector<32x384xf32>, vector<16x384xf32> -> vector<16x384xf32>
    %c0_i32 = arith.constant 0 : i32
    %5 = arith.cmpi eq, %arg2, %c0_i32 : i32
    %6 = arith.extui %5 : i1 to i32
    %c0_i32_6 = arith.constant 0 : i32
    %7 = arith.cmpi ne, %6, %c0_i32_6 : i32
    scf.if %7 {
      %c0_9 = arith.constant 0 : index
      %c0_10 = arith.constant 0 : index
      %c0_11 = arith.constant 0 : index
      %11 = vector.load %arg5[%c0_9, %c0_10, %c0_11] : memref<1x1x384xf32, #tpu.memory_space<vmem>>, vector<1x1x384xf32>
      %12 = vector.shape_cast %11 : vector<1x1x384xf32> to vector<1x384xf32>
      %13 = vector.broadcast %12 : vector<1x384xf32> to vector<16x384xf32>
      %14 = arith.addf %4, %13 : vector<16x384xf32>
      %c0_12 = arith.constant 0 : index
      %c0_13 = arith.constant 0 : index
      %c0_14 = arith.constant 0 : index
      %15 = vector.load %arg6[%c0_12, %c0_13, %c0_14] : memref<1x16x384xf32, #tpu.memory_space<vmem>>, vector<1x16x384xf32>
      %16 = vector.shape_cast %15 : vector<1x16x384xf32> to vector<16x384xf32>
      %17 = vector.shape_cast %14 : vector<16x384xf32> to vector<1x16x384xf32>
      tpu.vector_store %arg6[%c0_12, %c0_13, %c0_14], %17 {strides = array<i32>} : memref<1x16x384xf32, #tpu.memory_space<vmem>>, vector<1x16x384xf32>,
    } else {
    }
    %c0_i32_7 = arith.constant 0 : i32
    %8 = arith.cmpi sgt, %arg2, %c0_i32_7 : i32
    %9 = arith.extui %8 : i1 to i32
    %c0_i32_8 = arith.constant 0 : i32
    %10 = arith.cmpi ne, %9, %c0_i32_8 : i32
    scf.if %10 {
      %c0_9 = arith.constant 0 : index
      %c0_10 = arith.constant 0 : index
      %c0_11 = arith.constant 0 : index
      %11 = vector.load %arg6[%c0_9, %c0_10, %c0_11] : memref<1x16x384xf32, #tpu.memory_space<vmem>>, vector<1x16x384xf32>
      %12 = vector.shape_cast %11 : vector<1x16x384xf32> to vector<16x384xf32>
      %13 = arith.addf %12, %4 : vector<16x384xf32>
      %c0_12 = arith.constant 0 : index
      %c0_13 = arith.constant 0 : index
      %c0_14 = arith.constant 0 : index
      %14 = vector.load %arg6[%c0_12, %c0_13, %c0_14] : memref<1x16x384xf32, #tpu.memory_space<vmem>>, vector<1x16x384xf32>
      %15 = vector.shape_cast %14 : vector<1x16x384xf32> to vector<16x384xf32>
      %16 = vector.shape_cast %13 : vector<16x384xf32> to vector<1x16x384xf32>
      tpu.vector_store %arg6[%c0_12, %c0_13, %c0_14], %16 {strides = array<i32>} : memref<1x16x384xf32, #tpu.memory_space<vmem>>, vector<1x16x384xf32>,
    } else {
    }
    return
  }
  func.func @transform_0(%arg0: i32, %arg1: i32, %arg2: i32) -> (i32, i32, i32) {
    %c0_i32 = arith.constant 0 : i32
    %c0_i32_0 = arith.constant 0 : i32
    return %arg2, %arg1, %c0_i32 : i32, i32, i32
  }
  func.func @transform_1(%arg0: i32, %arg1: i32, %arg2: i32) -> (i32, i32, i32, i32) {
    %c0_i32 = arith.constant 0 : i32
    %c0_i32_0 = arith.constant 0 : i32
    %c0_i32_1 = arith.constant 0 : i32
    return %arg0, %arg2, %c0_i32, %c0_i32_0 : i32, i32, i32, i32
  }
  func.func @transform_2(%arg0: i32, %arg1: i32, %arg2: i32) -> (i32, i32, i32) {
    %c0_i32 = arith.constant 0 : i32
    %c0_i32_0 = arith.constant 0 : i32
    %c0_i32_1 = arith.constant 0 : i32
    return %arg0, %c0_i32, %c0_i32_0 : i32, i32, i32
  }
  func.func @transform_3(%arg0: i32, %arg1: i32, %arg2: i32) -> (i32, i32, i32) {
    %c0_i32 = arith.constant 0 : i32
    %c0_i32_0 = arith.constant 0 : i32
    return %arg0, %arg1, %c0_i32 : i32, i32, i32
  }
}

module attributes {stable_mosaic.version = 11 : i64} {
  func.func @_bigru_block_kernel(%arg0: i32, %arg1: i32, %arg2: memref<1x8x2x384xf32, #tpu.memory_space<vmem>>, %arg3: memref<1x128x384xf32, #tpu.memory_space<vmem>>, %arg4: memref<1x1x128xf32, #tpu.memory_space<vmem>>, %arg5: memref<1x8x2x128xf32, #tpu.memory_space<vmem>>, %arg6: memref<1x2x128xf32, #tpu.memory_space<vmem>>, %arg7: memref<2x128xf32, #tpu.memory_space<vmem>>) attributes {dimension_semantics = [#tpu.dimension_semantics<parallel>, #tpu.dimension_semantics<arbitrary>], iteration_bounds = array<i64: 2, 1>, scalar_prefetch = 0 : i64, scratch_operands = 1 : i64, tpu.core_type = #tpu.core_type<tc>, window_params = [{transform_indices = @transform_0, window_bounds = array<i64: 1, 8, 2, 384>}, {transform_indices = @transform_1, window_bounds = array<i64: 1, 128, 384>}, {transform_indices = @transform_2, window_bounds = array<i64: 1, 1, 128>}, {transform_indices = @transform_3, window_bounds = array<i64: 1, 8, 2, 128>}, {transform_indices = @transform_4, window_bounds = array<i64: 1, 2, 128>}]} {
    %c0_i32 = arith.constant 0 : i32
    %0 = arith.cmpi eq, %arg1, %c0_i32 : i32
    %1 = arith.extui %0 : i1 to i32
    %c0_i32_0 = arith.constant 0 : i32
    %2 = arith.cmpi ne, %1, %c0_i32_0 : i32
    scf.if %2 {
      %cst_121 = arith.constant 0.000000e+00 : f32
      %330 = vector.broadcast %cst_121 : f32 to vector<2x128xf32>
      %c0_122 = arith.constant 0 : index
      %c0_123 = arith.constant 0 : index
      %331 = vector.load %arg7[%c0_122, %c0_123] : memref<2x128xf32, #tpu.memory_space<vmem>>, vector<2x128xf32>
      tpu.vector_store %arg7[%c0_122, %c0_123], %330 {strides = array<i32>} : memref<2x128xf32, #tpu.memory_space<vmem>>, vector<2x128xf32>,
    } else {
    }
    %c0 = arith.constant 0 : index
    %c0_1 = arith.constant 0 : index
    %c0_2 = arith.constant 0 : index
    %3 = vector.load %arg4[%c0, %c0_1, %c0_2] : memref<1x1x128xf32, #tpu.memory_space<vmem>>, vector<1x1x128xf32>
    %4 = vector.shape_cast %3 : vector<1x1x128xf32> to vector<1x128xf32>
    %c0_3 = arith.constant 0 : index
    %c0_4 = arith.constant 0 : index
    %5 = vector.load %arg7[%c0_3, %c0_4] : memref<2x128xf32, #tpu.memory_space<vmem>>, vector<2x128xf32>
    %c0_i32_5 = arith.constant 0 : i32
    %c2_i32 = arith.constant 2 : i32
    %6 = arith.muli %c2_i32, %c0_i32_5 : i32
    %c7_i32 = arith.constant 7 : i32
    %7 = arith.subi %c7_i32, %6 : i32
    %8 = arith.muli %arg0, %7 : i32
    %9 = arith.addi %c0_i32_5, %8 : i32
    %c0_6 = arith.constant 0 : index
    %10 = arith.index_cast %9 : i32 to index
    %c0_7 = arith.constant 0 : index
    %c0_8 = arith.constant 0 : index
    %11 = vector.load %arg2[%c0_6, %10, %c0_7, %c0_8] : memref<1x8x2x384xf32, #tpu.memory_space<vmem>>, vector<1x1x2x384xf32>
    %12 = vector.shape_cast %11 : vector<1x1x2x384xf32> to vector<2x384xf32>
    %c0_9 = arith.constant 0 : index
    %c0_10 = arith.constant 0 : index
    %c0_11 = arith.constant 0 : index
    %13 = vector.load %arg3[%c0_9, %c0_10, %c0_11] : memref<1x128x384xf32, #tpu.memory_space<vmem>>, vector<1x128x384xf32>
    %14 = vector.shape_cast %13 : vector<1x128x384xf32> to vector<128x384xf32>
    %cst = arith.constant dense<0.000000e+00> : vector<2x384xf32>
    %15 = tpu.matmul %5, %14, %cst {dimension_numbers = #tpu.dot_dimension_numbers<[1], [0], [0], [1], [0, 0, 1, 1], [], []>} : vector<2x128xf32>, vector<128x384xf32>, vector<2x384xf32> -> vector<2x384xf32>
    %16 = vector.extract_strided_slice %12 {offsets = [0, 0], sizes = [2, 128], strides = [1, 1]} : vector<2x384xf32> to vector<2x128xf32>
    %17 = vector.extract_strided_slice %15 {offsets = [0, 0], sizes = [2, 128], strides = [1, 1]} : vector<2x384xf32> to vector<2x128xf32>
    %18 = arith.addf %16, %17 : vector<2x128xf32>
    %19 = arith.negf %18 : vector<2x128xf32>
    %20 = math.exp %19 : vector<2x128xf32>
    %cst_12 = arith.constant 1.000000e+00 : f32
    %21 = vector.broadcast %cst_12 : f32 to vector<2x128xf32>
    %22 = arith.addf %21, %20 : vector<2x128xf32>
    %23 = arith.divf %21, %22 : vector<2x128xf32>
    %24 = vector.extract_strided_slice %12 {offsets = [0, 128], sizes = [2, 128], strides = [1, 1]} : vector<2x384xf32> to vector<2x128xf32>
    %25 = vector.extract_strided_slice %15 {offsets = [0, 128], sizes = [2, 128], strides = [1, 1]} : vector<2x384xf32> to vector<2x128xf32>
    %26 = arith.addf %24, %25 : vector<2x128xf32>
    %27 = arith.negf %26 : vector<2x128xf32>
    %28 = math.exp %27 : vector<2x128xf32>
    %cst_13 = arith.constant 1.000000e+00 : f32
    %29 = vector.broadcast %cst_13 : f32 to vector<2x128xf32>
    %30 = arith.addf %29, %28 : vector<2x128xf32>
    %31 = arith.divf %29, %30 : vector<2x128xf32>
    %32 = vector.extract_strided_slice %12 {offsets = [0, 256], sizes = [2, 128], strides = [1, 1]} : vector<2x384xf32> to vector<2x128xf32>
    %33 = vector.extract_strided_slice %15 {offsets = [0, 256], sizes = [2, 128], strides = [1, 1]} : vector<2x384xf32> to vector<2x128xf32>
    %34 = vector.broadcast %4 : vector<1x128xf32> to vector<2x128xf32>
    %35 = arith.addf %33, %34 : vector<2x128xf32>
    %36 = arith.mulf %23, %35 : vector<2x128xf32>
    %37 = arith.addf %32, %36 : vector<2x128xf32>
    %38 = math.tanh %37 : vector<2x128xf32>
    %39 = arith.subf %5, %38 : vector<2x128xf32>
    %40 = arith.mulf %31, %39 : vector<2x128xf32>
    %41 = arith.addf %38, %40 : vector<2x128xf32>
    %c0_14 = arith.constant 0 : index
    %42 = arith.index_cast %9 : i32 to index
    %c0_15 = arith.constant 0 : index
    %c0_16 = arith.constant 0 : index
    %43 = vector.load %arg5[%c0_14, %42, %c0_15, %c0_16] : memref<1x8x2x128xf32, #tpu.memory_space<vmem>>, vector<1x1x2x128xf32>
    %44 = vector.shape_cast %43 : vector<1x1x2x128xf32> to vector<2x128xf32>
    %45 = vector.shape_cast %41 : vector<2x128xf32> to vector<1x1x2x128xf32>
    tpu.vector_store %arg5[%c0_14, %42, %c0_15, %c0_16], %45 {strides = array<i32>} : memref<1x8x2x128xf32, #tpu.memory_space<vmem>>, vector<1x1x2x128xf32>,
    %c1_i32 = arith.constant 1 : i32
    %c2_i32_17 = arith.constant 2 : i32
    %46 = arith.muli %c2_i32_17, %c1_i32 : i32
    %c7_i32_18 = arith.constant 7 : i32
    %47 = arith.subi %c7_i32_18, %46 : i32
    %48 = arith.muli %arg0, %47 : i32
    %49 = arith.addi %c1_i32, %48 : i32
    %c0_19 = arith.constant 0 : index
    %50 = arith.index_cast %49 : i32 to index
    %c0_20 = arith.constant 0 : index
    %c0_21 = arith.constant 0 : index
    %51 = vector.load %arg2[%c0_19, %50, %c0_20, %c0_21] : memref<1x8x2x384xf32, #tpu.memory_space<vmem>>, vector<1x1x2x384xf32>
    %52 = vector.shape_cast %51 : vector<1x1x2x384xf32> to vector<2x384xf32>
    %c0_22 = arith.constant 0 : index
    %c0_23 = arith.constant 0 : index
    %c0_24 = arith.constant 0 : index
    %53 = vector.load %arg3[%c0_22, %c0_23, %c0_24] : memref<1x128x384xf32, #tpu.memory_space<vmem>>, vector<1x128x384xf32>
    %54 = vector.shape_cast %53 : vector<1x128x384xf32> to vector<128x384xf32>
    %cst_25 = arith.constant dense<0.000000e+00> : vector<2x384xf32>
    %55 = tpu.matmul %41, %54, %cst_25 {dimension_numbers = #tpu.dot_dimension_numbers<[1], [0], [0], [1], [0, 0, 1, 1], [], []>} : vector<2x128xf32>, vector<128x384xf32>, vector<2x384xf32> -> vector<2x384xf32>
    %56 = vector.extract_strided_slice %52 {offsets = [0, 0], sizes = [2, 128], strides = [1, 1]} : vector<2x384xf32> to vector<2x128xf32>
    %57 = vector.extract_strided_slice %55 {offsets = [0, 0], sizes = [2, 128], strides = [1, 1]} : vector<2x384xf32> to vector<2x128xf32>
    %58 = arith.addf %56, %57 : vector<2x128xf32>
    %59 = arith.negf %58 : vector<2x128xf32>
    %60 = math.exp %59 : vector<2x128xf32>
    %cst_26 = arith.constant 1.000000e+00 : f32
    %61 = vector.broadcast %cst_26 : f32 to vector<2x128xf32>
    %62 = arith.addf %61, %60 : vector<2x128xf32>
    %63 = arith.divf %61, %62 : vector<2x128xf32>
    %64 = vector.extract_strided_slice %52 {offsets = [0, 128], sizes = [2, 128], strides = [1, 1]} : vector<2x384xf32> to vector<2x128xf32>
    %65 = vector.extract_strided_slice %55 {offsets = [0, 128], sizes = [2, 128], strides = [1, 1]} : vector<2x384xf32> to vector<2x128xf32>
    %66 = arith.addf %64, %65 : vector<2x128xf32>
    %67 = arith.negf %66 : vector<2x128xf32>
    %68 = math.exp %67 : vector<2x128xf32>
    %cst_27 = arith.constant 1.000000e+00 : f32
    %69 = vector.broadcast %cst_27 : f32 to vector<2x128xf32>
    %70 = arith.addf %69, %68 : vector<2x128xf32>
    %71 = arith.divf %69, %70 : vector<2x128xf32>
    %72 = vector.extract_strided_slice %52 {offsets = [0, 256], sizes = [2, 128], strides = [1, 1]} : vector<2x384xf32> to vector<2x128xf32>
    %73 = vector.extract_strided_slice %55 {offsets = [0, 256], sizes = [2, 128], strides = [1, 1]} : vector<2x384xf32> to vector<2x128xf32>
    %74 = vector.broadcast %4 : vector<1x128xf32> to vector<2x128xf32>
    %75 = arith.addf %73, %74 : vector<2x128xf32>
    %76 = arith.mulf %63, %75 : vector<2x128xf32>
    %77 = arith.addf %72, %76 : vector<2x128xf32>
    %78 = math.tanh %77 : vector<2x128xf32>
    %79 = arith.subf %41, %78 : vector<2x128xf32>
    %80 = arith.mulf %71, %79 : vector<2x128xf32>
    %81 = arith.addf %78, %80 : vector<2x128xf32>
    %c0_28 = arith.constant 0 : index
    %82 = arith.index_cast %49 : i32 to index
    %c0_29 = arith.constant 0 : index
    %c0_30 = arith.constant 0 : index
    %83 = vector.load %arg5[%c0_28, %82, %c0_29, %c0_30] : memref<1x8x2x128xf32, #tpu.memory_space<vmem>>, vector<1x1x2x128xf32>
    %84 = vector.shape_cast %83 : vector<1x1x2x128xf32> to vector<2x128xf32>
    %85 = vector.shape_cast %81 : vector<2x128xf32> to vector<1x1x2x128xf32>
    tpu.vector_store %arg5[%c0_28, %82, %c0_29, %c0_30], %85 {strides = array<i32>} : memref<1x8x2x128xf32, #tpu.memory_space<vmem>>, vector<1x1x2x128xf32>,
    %c2_i32_31 = arith.constant 2 : i32
    %c2_i32_32 = arith.constant 2 : i32
    %86 = arith.muli %c2_i32_32, %c2_i32_31 : i32
    %c7_i32_33 = arith.constant 7 : i32
    %87 = arith.subi %c7_i32_33, %86 : i32
    %88 = arith.muli %arg0, %87 : i32
    %89 = arith.addi %c2_i32_31, %88 : i32
    %c0_34 = arith.constant 0 : index
    %90 = arith.index_cast %89 : i32 to index
    %c0_35 = arith.constant 0 : index
    %c0_36 = arith.constant 0 : index
    %91 = vector.load %arg2[%c0_34, %90, %c0_35, %c0_36] : memref<1x8x2x384xf32, #tpu.memory_space<vmem>>, vector<1x1x2x384xf32>
    %92 = vector.shape_cast %91 : vector<1x1x2x384xf32> to vector<2x384xf32>
    %c0_37 = arith.constant 0 : index
    %c0_38 = arith.constant 0 : index
    %c0_39 = arith.constant 0 : index
    %93 = vector.load %arg3[%c0_37, %c0_38, %c0_39] : memref<1x128x384xf32, #tpu.memory_space<vmem>>, vector<1x128x384xf32>
    %94 = vector.shape_cast %93 : vector<1x128x384xf32> to vector<128x384xf32>
    %cst_40 = arith.constant dense<0.000000e+00> : vector<2x384xf32>
    %95 = tpu.matmul %81, %94, %cst_40 {dimension_numbers = #tpu.dot_dimension_numbers<[1], [0], [0], [1], [0, 0, 1, 1], [], []>} : vector<2x128xf32>, vector<128x384xf32>, vector<2x384xf32> -> vector<2x384xf32>
    %96 = vector.extract_strided_slice %92 {offsets = [0, 0], sizes = [2, 128], strides = [1, 1]} : vector<2x384xf32> to vector<2x128xf32>
    %97 = vector.extract_strided_slice %95 {offsets = [0, 0], sizes = [2, 128], strides = [1, 1]} : vector<2x384xf32> to vector<2x128xf32>
    %98 = arith.addf %96, %97 : vector<2x128xf32>
    %99 = arith.negf %98 : vector<2x128xf32>
    %100 = math.exp %99 : vector<2x128xf32>
    %cst_41 = arith.constant 1.000000e+00 : f32
    %101 = vector.broadcast %cst_41 : f32 to vector<2x128xf32>
    %102 = arith.addf %101, %100 : vector<2x128xf32>
    %103 = arith.divf %101, %102 : vector<2x128xf32>
    %104 = vector.extract_strided_slice %92 {offsets = [0, 128], sizes = [2, 128], strides = [1, 1]} : vector<2x384xf32> to vector<2x128xf32>
    %105 = vector.extract_strided_slice %95 {offsets = [0, 128], sizes = [2, 128], strides = [1, 1]} : vector<2x384xf32> to vector<2x128xf32>
    %106 = arith.addf %104, %105 : vector<2x128xf32>
    %107 = arith.negf %106 : vector<2x128xf32>
    %108 = math.exp %107 : vector<2x128xf32>
    %cst_42 = arith.constant 1.000000e+00 : f32
    %109 = vector.broadcast %cst_42 : f32 to vector<2x128xf32>
    %110 = arith.addf %109, %108 : vector<2x128xf32>
    %111 = arith.divf %109, %110 : vector<2x128xf32>
    %112 = vector.extract_strided_slice %92 {offsets = [0, 256], sizes = [2, 128], strides = [1, 1]} : vector<2x384xf32> to vector<2x128xf32>
    %113 = vector.extract_strided_slice %95 {offsets = [0, 256], sizes = [2, 128], strides = [1, 1]} : vector<2x384xf32> to vector<2x128xf32>
    %114 = vector.broadcast %4 : vector<1x128xf32> to vector<2x128xf32>
    %115 = arith.addf %113, %114 : vector<2x128xf32>
    %116 = arith.mulf %103, %115 : vector<2x128xf32>
    %117 = arith.addf %112, %116 : vector<2x128xf32>
    %118 = math.tanh %117 : vector<2x128xf32>
    %119 = arith.subf %81, %118 : vector<2x128xf32>
    %120 = arith.mulf %111, %119 : vector<2x128xf32>
    %121 = arith.addf %118, %120 : vector<2x128xf32>
    %c0_43 = arith.constant 0 : index
    %122 = arith.index_cast %89 : i32 to index
    %c0_44 = arith.constant 0 : index
    %c0_45 = arith.constant 0 : index
    %123 = vector.load %arg5[%c0_43, %122, %c0_44, %c0_45] : memref<1x8x2x128xf32, #tpu.memory_space<vmem>>, vector<1x1x2x128xf32>
    %124 = vector.shape_cast %123 : vector<1x1x2x128xf32> to vector<2x128xf32>
    %125 = vector.shape_cast %121 : vector<2x128xf32> to vector<1x1x2x128xf32>
    tpu.vector_store %arg5[%c0_43, %122, %c0_44, %c0_45], %125 {strides = array<i32>} : memref<1x8x2x128xf32, #tpu.memory_space<vmem>>, vector<1x1x2x128xf32>,
    %c3_i32 = arith.constant 3 : i32
    %c2_i32_46 = arith.constant 2 : i32
    %126 = arith.muli %c2_i32_46, %c3_i32 : i32
    %c7_i32_47 = arith.constant 7 : i32
    %127 = arith.subi %c7_i32_47, %126 : i32
    %128 = arith.muli %arg0, %127 : i32
    %129 = arith.addi %c3_i32, %128 : i32
    %c0_48 = arith.constant 0 : index
    %130 = arith.index_cast %129 : i32 to index
    %c0_49 = arith.constant 0 : index
    %c0_50 = arith.constant 0 : index
    %131 = vector.load %arg2[%c0_48, %130, %c0_49, %c0_50] : memref<1x8x2x384xf32, #tpu.memory_space<vmem>>, vector<1x1x2x384xf32>
    %132 = vector.shape_cast %131 : vector<1x1x2x384xf32> to vector<2x384xf32>
    %c0_51 = arith.constant 0 : index
    %c0_52 = arith.constant 0 : index
    %c0_53 = arith.constant 0 : index
    %133 = vector.load %arg3[%c0_51, %c0_52, %c0_53] : memref<1x128x384xf32, #tpu.memory_space<vmem>>, vector<1x128x384xf32>
    %134 = vector.shape_cast %133 : vector<1x128x384xf32> to vector<128x384xf32>
    %cst_54 = arith.constant dense<0.000000e+00> : vector<2x384xf32>
    %135 = tpu.matmul %121, %134, %cst_54 {dimension_numbers = #tpu.dot_dimension_numbers<[1], [0], [0], [1], [0, 0, 1, 1], [], []>} : vector<2x128xf32>, vector<128x384xf32>, vector<2x384xf32> -> vector<2x384xf32>
    %136 = vector.extract_strided_slice %132 {offsets = [0, 0], sizes = [2, 128], strides = [1, 1]} : vector<2x384xf32> to vector<2x128xf32>
    %137 = vector.extract_strided_slice %135 {offsets = [0, 0], sizes = [2, 128], strides = [1, 1]} : vector<2x384xf32> to vector<2x128xf32>
    %138 = arith.addf %136, %137 : vector<2x128xf32>
    %139 = arith.negf %138 : vector<2x128xf32>
    %140 = math.exp %139 : vector<2x128xf32>
    %cst_55 = arith.constant 1.000000e+00 : f32
    %141 = vector.broadcast %cst_55 : f32 to vector<2x128xf32>
    %142 = arith.addf %141, %140 : vector<2x128xf32>
    %143 = arith.divf %141, %142 : vector<2x128xf32>
    %144 = vector.extract_strided_slice %132 {offsets = [0, 128], sizes = [2, 128], strides = [1, 1]} : vector<2x384xf32> to vector<2x128xf32>
    %145 = vector.extract_strided_slice %135 {offsets = [0, 128], sizes = [2, 128], strides = [1, 1]} : vector<2x384xf32> to vector<2x128xf32>
    %146 = arith.addf %144, %145 : vector<2x128xf32>
    %147 = arith.negf %146 : vector<2x128xf32>
    %148 = math.exp %147 : vector<2x128xf32>
    %cst_56 = arith.constant 1.000000e+00 : f32
    %149 = vector.broadcast %cst_56 : f32 to vector<2x128xf32>
    %150 = arith.addf %149, %148 : vector<2x128xf32>
    %151 = arith.divf %149, %150 : vector<2x128xf32>
    %152 = vector.extract_strided_slice %132 {offsets = [0, 256], sizes = [2, 128], strides = [1, 1]} : vector<2x384xf32> to vector<2x128xf32>
    %153 = vector.extract_strided_slice %135 {offsets = [0, 256], sizes = [2, 128], strides = [1, 1]} : vector<2x384xf32> to vector<2x128xf32>
    %154 = vector.broadcast %4 : vector<1x128xf32> to vector<2x128xf32>
    %155 = arith.addf %153, %154 : vector<2x128xf32>
    %156 = arith.mulf %143, %155 : vector<2x128xf32>
    %157 = arith.addf %152, %156 : vector<2x128xf32>
    %158 = math.tanh %157 : vector<2x128xf32>
    %159 = arith.subf %121, %158 : vector<2x128xf32>
    %160 = arith.mulf %151, %159 : vector<2x128xf32>
    %161 = arith.addf %158, %160 : vector<2x128xf32>
    %c0_57 = arith.constant 0 : index
    %162 = arith.index_cast %129 : i32 to index
    %c0_58 = arith.constant 0 : index
    %c0_59 = arith.constant 0 : index
    %163 = vector.load %arg5[%c0_57, %162, %c0_58, %c0_59] : memref<1x8x2x128xf32, #tpu.memory_space<vmem>>, vector<1x1x2x128xf32>
    %164 = vector.shape_cast %163 : vector<1x1x2x128xf32> to vector<2x128xf32>
    %165 = vector.shape_cast %161 : vector<2x128xf32> to vector<1x1x2x128xf32>
    tpu.vector_store %arg5[%c0_57, %162, %c0_58, %c0_59], %165 {strides = array<i32>} : memref<1x8x2x128xf32, #tpu.memory_space<vmem>>, vector<1x1x2x128xf32>,
    %c4_i32 = arith.constant 4 : i32
    %c2_i32_60 = arith.constant 2 : i32
    %166 = arith.muli %c2_i32_60, %c4_i32 : i32
    %c7_i32_61 = arith.constant 7 : i32
    %167 = arith.subi %c7_i32_61, %166 : i32
    %168 = arith.muli %arg0, %167 : i32
    %169 = arith.addi %c4_i32, %168 : i32
    %c0_62 = arith.constant 0 : index
    %170 = arith.index_cast %169 : i32 to index
    %c0_63 = arith.constant 0 : index
    %c0_64 = arith.constant 0 : index
    %171 = vector.load %arg2[%c0_62, %170, %c0_63, %c0_64] : memref<1x8x2x384xf32, #tpu.memory_space<vmem>>, vector<1x1x2x384xf32>
    %172 = vector.shape_cast %171 : vector<1x1x2x384xf32> to vector<2x384xf32>
    %c0_65 = arith.constant 0 : index
    %c0_66 = arith.constant 0 : index
    %c0_67 = arith.constant 0 : index
    %173 = vector.load %arg3[%c0_65, %c0_66, %c0_67] : memref<1x128x384xf32, #tpu.memory_space<vmem>>, vector<1x128x384xf32>
    %174 = vector.shape_cast %173 : vector<1x128x384xf32> to vector<128x384xf32>
    %cst_68 = arith.constant dense<0.000000e+00> : vector<2x384xf32>
    %175 = tpu.matmul %161, %174, %cst_68 {dimension_numbers = #tpu.dot_dimension_numbers<[1], [0], [0], [1], [0, 0, 1, 1], [], []>} : vector<2x128xf32>, vector<128x384xf32>, vector<2x384xf32> -> vector<2x384xf32>
    %176 = vector.extract_strided_slice %172 {offsets = [0, 0], sizes = [2, 128], strides = [1, 1]} : vector<2x384xf32> to vector<2x128xf32>
    %177 = vector.extract_strided_slice %175 {offsets = [0, 0], sizes = [2, 128], strides = [1, 1]} : vector<2x384xf32> to vector<2x128xf32>
    %178 = arith.addf %176, %177 : vector<2x128xf32>
    %179 = arith.negf %178 : vector<2x128xf32>
    %180 = math.exp %179 : vector<2x128xf32>
    %cst_69 = arith.constant 1.000000e+00 : f32
    %181 = vector.broadcast %cst_69 : f32 to vector<2x128xf32>
    %182 = arith.addf %181, %180 : vector<2x128xf32>
    %183 = arith.divf %181, %182 : vector<2x128xf32>
    %184 = vector.extract_strided_slice %172 {offsets = [0, 128], sizes = [2, 128], strides = [1, 1]} : vector<2x384xf32> to vector<2x128xf32>
    %185 = vector.extract_strided_slice %175 {offsets = [0, 128], sizes = [2, 128], strides = [1, 1]} : vector<2x384xf32> to vector<2x128xf32>
    %186 = arith.addf %184, %185 : vector<2x128xf32>
    %187 = arith.negf %186 : vector<2x128xf32>
    %188 = math.exp %187 : vector<2x128xf32>
    %cst_70 = arith.constant 1.000000e+00 : f32
    %189 = vector.broadcast %cst_70 : f32 to vector<2x128xf32>
    %190 = arith.addf %189, %188 : vector<2x128xf32>
    %191 = arith.divf %189, %190 : vector<2x128xf32>
    %192 = vector.extract_strided_slice %172 {offsets = [0, 256], sizes = [2, 128], strides = [1, 1]} : vector<2x384xf32> to vector<2x128xf32>
    %193 = vector.extract_strided_slice %175 {offsets = [0, 256], sizes = [2, 128], strides = [1, 1]} : vector<2x384xf32> to vector<2x128xf32>
    %194 = vector.broadcast %4 : vector<1x128xf32> to vector<2x128xf32>
    %195 = arith.addf %193, %194 : vector<2x128xf32>
    %196 = arith.mulf %183, %195 : vector<2x128xf32>
    %197 = arith.addf %192, %196 : vector<2x128xf32>
    %198 = math.tanh %197 : vector<2x128xf32>
    %199 = arith.subf %161, %198 : vector<2x128xf32>
    %200 = arith.mulf %191, %199 : vector<2x128xf32>
    %201 = arith.addf %198, %200 : vector<2x128xf32>
    %c0_71 = arith.constant 0 : index
    %202 = arith.index_cast %169 : i32 to index
    %c0_72 = arith.constant 0 : index
    %c0_73 = arith.constant 0 : index
    %203 = vector.load %arg5[%c0_71, %202, %c0_72, %c0_73] : memref<1x8x2x128xf32, #tpu.memory_space<vmem>>, vector<1x1x2x128xf32>
    %204 = vector.shape_cast %203 : vector<1x1x2x128xf32> to vector<2x128xf32>
    %205 = vector.shape_cast %201 : vector<2x128xf32> to vector<1x1x2x128xf32>
    tpu.vector_store %arg5[%c0_71, %202, %c0_72, %c0_73], %205 {strides = array<i32>} : memref<1x8x2x128xf32, #tpu.memory_space<vmem>>, vector<1x1x2x128xf32>,
    %c5_i32 = arith.constant 5 : i32
    %c2_i32_74 = arith.constant 2 : i32
    %206 = arith.muli %c2_i32_74, %c5_i32 : i32
    %c7_i32_75 = arith.constant 7 : i32
    %207 = arith.subi %c7_i32_75, %206 : i32
    %208 = arith.muli %arg0, %207 : i32
    %209 = arith.addi %c5_i32, %208 : i32
    %c0_76 = arith.constant 0 : index
    %210 = arith.index_cast %209 : i32 to index
    %c0_77 = arith.constant 0 : index
    %c0_78 = arith.constant 0 : index
    %211 = vector.load %arg2[%c0_76, %210, %c0_77, %c0_78] : memref<1x8x2x384xf32, #tpu.memory_space<vmem>>, vector<1x1x2x384xf32>
    %212 = vector.shape_cast %211 : vector<1x1x2x384xf32> to vector<2x384xf32>
    %c0_79 = arith.constant 0 : index
    %c0_80 = arith.constant 0 : index
    %c0_81 = arith.constant 0 : index
    %213 = vector.load %arg3[%c0_79, %c0_80, %c0_81] : memref<1x128x384xf32, #tpu.memory_space<vmem>>, vector<1x128x384xf32>
    %214 = vector.shape_cast %213 : vector<1x128x384xf32> to vector<128x384xf32>
    %cst_82 = arith.constant dense<0.000000e+00> : vector<2x384xf32>
    %215 = tpu.matmul %201, %214, %cst_82 {dimension_numbers = #tpu.dot_dimension_numbers<[1], [0], [0], [1], [0, 0, 1, 1], [], []>} : vector<2x128xf32>, vector<128x384xf32>, vector<2x384xf32> -> vector<2x384xf32>
    %216 = vector.extract_strided_slice %212 {offsets = [0, 0], sizes = [2, 128], strides = [1, 1]} : vector<2x384xf32> to vector<2x128xf32>
    %217 = vector.extract_strided_slice %215 {offsets = [0, 0], sizes = [2, 128], strides = [1, 1]} : vector<2x384xf32> to vector<2x128xf32>
    %218 = arith.addf %216, %217 : vector<2x128xf32>
    %219 = arith.negf %218 : vector<2x128xf32>
    %220 = math.exp %219 : vector<2x128xf32>
    %cst_83 = arith.constant 1.000000e+00 : f32
    %221 = vector.broadcast %cst_83 : f32 to vector<2x128xf32>
    %222 = arith.addf %221, %220 : vector<2x128xf32>
    %223 = arith.divf %221, %222 : vector<2x128xf32>
    %224 = vector.extract_strided_slice %212 {offsets = [0, 128], sizes = [2, 128], strides = [1, 1]} : vector<2x384xf32> to vector<2x128xf32>
    %225 = vector.extract_strided_slice %215 {offsets = [0, 128], sizes = [2, 128], strides = [1, 1]} : vector<2x384xf32> to vector<2x128xf32>
    %226 = arith.addf %224, %225 : vector<2x128xf32>
    %227 = arith.negf %226 : vector<2x128xf32>
    %228 = math.exp %227 : vector<2x128xf32>
    %cst_84 = arith.constant 1.000000e+00 : f32
    %229 = vector.broadcast %cst_84 : f32 to vector<2x128xf32>
    %230 = arith.addf %229, %228 : vector<2x128xf32>
    %231 = arith.divf %229, %230 : vector<2x128xf32>
    %232 = vector.extract_strided_slice %212 {offsets = [0, 256], sizes = [2, 128], strides = [1, 1]} : vector<2x384xf32> to vector<2x128xf32>
    %233 = vector.extract_strided_slice %215 {offsets = [0, 256], sizes = [2, 128], strides = [1, 1]} : vector<2x384xf32> to vector<2x128xf32>
    %234 = vector.broadcast %4 : vector<1x128xf32> to vector<2x128xf32>
    %235 = arith.addf %233, %234 : vector<2x128xf32>
    %236 = arith.mulf %223, %235 : vector<2x128xf32>
    %237 = arith.addf %232, %236 : vector<2x128xf32>
    %238 = math.tanh %237 : vector<2x128xf32>
    %239 = arith.subf %201, %238 : vector<2x128xf32>
    %240 = arith.mulf %231, %239 : vector<2x128xf32>
    %241 = arith.addf %238, %240 : vector<2x128xf32>
    %c0_85 = arith.constant 0 : index
    %242 = arith.index_cast %209 : i32 to index
    %c0_86 = arith.constant 0 : index
    %c0_87 = arith.constant 0 : index
    %243 = vector.load %arg5[%c0_85, %242, %c0_86, %c0_87] : memref<1x8x2x128xf32, #tpu.memory_space<vmem>>, vector<1x1x2x128xf32>
    %244 = vector.shape_cast %243 : vector<1x1x2x128xf32> to vector<2x128xf32>
    %245 = vector.shape_cast %241 : vector<2x128xf32> to vector<1x1x2x128xf32>
    tpu.vector_store %arg5[%c0_85, %242, %c0_86, %c0_87], %245 {strides = array<i32>} : memref<1x8x2x128xf32, #tpu.memory_space<vmem>>, vector<1x1x2x128xf32>,
    %c6_i32 = arith.constant 6 : i32
    %c2_i32_88 = arith.constant 2 : i32
    %246 = arith.muli %c2_i32_88, %c6_i32 : i32
    %c7_i32_89 = arith.constant 7 : i32
    %247 = arith.subi %c7_i32_89, %246 : i32
    %248 = arith.muli %arg0, %247 : i32
    %249 = arith.addi %c6_i32, %248 : i32
    %c0_90 = arith.constant 0 : index
    %250 = arith.index_cast %249 : i32 to index
    %c0_91 = arith.constant 0 : index
    %c0_92 = arith.constant 0 : index
    %251 = vector.load %arg2[%c0_90, %250, %c0_91, %c0_92] : memref<1x8x2x384xf32, #tpu.memory_space<vmem>>, vector<1x1x2x384xf32>
    %252 = vector.shape_cast %251 : vector<1x1x2x384xf32> to vector<2x384xf32>
    %c0_93 = arith.constant 0 : index
    %c0_94 = arith.constant 0 : index
    %c0_95 = arith.constant 0 : index
    %253 = vector.load %arg3[%c0_93, %c0_94, %c0_95] : memref<1x128x384xf32, #tpu.memory_space<vmem>>, vector<1x128x384xf32>
    %254 = vector.shape_cast %253 : vector<1x128x384xf32> to vector<128x384xf32>
    %cst_96 = arith.constant dense<0.000000e+00> : vector<2x384xf32>
    %255 = tpu.matmul %241, %254, %cst_96 {dimension_numbers = #tpu.dot_dimension_numbers<[1], [0], [0], [1], [0, 0, 1, 1], [], []>} : vector<2x128xf32>, vector<128x384xf32>, vector<2x384xf32> -> vector<2x384xf32>
    %256 = vector.extract_strided_slice %252 {offsets = [0, 0], sizes = [2, 128], strides = [1, 1]} : vector<2x384xf32> to vector<2x128xf32>
    %257 = vector.extract_strided_slice %255 {offsets = [0, 0], sizes = [2, 128], strides = [1, 1]} : vector<2x384xf32> to vector<2x128xf32>
    %258 = arith.addf %256, %257 : vector<2x128xf32>
    %259 = arith.negf %258 : vector<2x128xf32>
    %260 = math.exp %259 : vector<2x128xf32>
    %cst_97 = arith.constant 1.000000e+00 : f32
    %261 = vector.broadcast %cst_97 : f32 to vector<2x128xf32>
    %262 = arith.addf %261, %260 : vector<2x128xf32>
    %263 = arith.divf %261, %262 : vector<2x128xf32>
    %264 = vector.extract_strided_slice %252 {offsets = [0, 128], sizes = [2, 128], strides = [1, 1]} : vector<2x384xf32> to vector<2x128xf32>
    %265 = vector.extract_strided_slice %255 {offsets = [0, 128], sizes = [2, 128], strides = [1, 1]} : vector<2x384xf32> to vector<2x128xf32>
    %266 = arith.addf %264, %265 : vector<2x128xf32>
    %267 = arith.negf %266 : vector<2x128xf32>
    %268 = math.exp %267 : vector<2x128xf32>
    %cst_98 = arith.constant 1.000000e+00 : f32
    %269 = vector.broadcast %cst_98 : f32 to vector<2x128xf32>
    %270 = arith.addf %269, %268 : vector<2x128xf32>
    %271 = arith.divf %269, %270 : vector<2x128xf32>
    %272 = vector.extract_strided_slice %252 {offsets = [0, 256], sizes = [2, 128], strides = [1, 1]} : vector<2x384xf32> to vector<2x128xf32>
    %273 = vector.extract_strided_slice %255 {offsets = [0, 256], sizes = [2, 128], strides = [1, 1]} : vector<2x384xf32> to vector<2x128xf32>
    %274 = vector.broadcast %4 : vector<1x128xf32> to vector<2x128xf32>
    %275 = arith.addf %273, %274 : vector<2x128xf32>
    %276 = arith.mulf %263, %275 : vector<2x128xf32>
    %277 = arith.addf %272, %276 : vector<2x128xf32>
    %278 = math.tanh %277 : vector<2x128xf32>
    %279 = arith.subf %241, %278 : vector<2x128xf32>
    %280 = arith.mulf %271, %279 : vector<2x128xf32>
    %281 = arith.addf %278, %280 : vector<2x128xf32>
    %c0_99 = arith.constant 0 : index
    %282 = arith.index_cast %249 : i32 to index
    %c0_100 = arith.constant 0 : index
    %c0_101 = arith.constant 0 : index
    %283 = vector.load %arg5[%c0_99, %282, %c0_100, %c0_101] : memref<1x8x2x128xf32, #tpu.memory_space<vmem>>, vector<1x1x2x128xf32>
    %284 = vector.shape_cast %283 : vector<1x1x2x128xf32> to vector<2x128xf32>
    %285 = vector.shape_cast %281 : vector<2x128xf32> to vector<1x1x2x128xf32>
    tpu.vector_store %arg5[%c0_99, %282, %c0_100, %c0_101], %285 {strides = array<i32>} : memref<1x8x2x128xf32, #tpu.memory_space<vmem>>, vector<1x1x2x128xf32>,
    %c7_i32_102 = arith.constant 7 : i32
    %c2_i32_103 = arith.constant 2 : i32
    %286 = arith.muli %c2_i32_103, %c7_i32_102 : i32
    %c7_i32_104 = arith.constant 7 : i32
    %287 = arith.subi %c7_i32_104, %286 : i32
    %288 = arith.muli %arg0, %287 : i32
    %289 = arith.addi %c7_i32_102, %288 : i32
    %c0_105 = arith.constant 0 : index
    %290 = arith.index_cast %289 : i32 to index
    %c0_106 = arith.constant 0 : index
    %c0_107 = arith.constant 0 : index
    %291 = vector.load %arg2[%c0_105, %290, %c0_106, %c0_107] : memref<1x8x2x384xf32, #tpu.memory_space<vmem>>, vector<1x1x2x384xf32>
    %292 = vector.shape_cast %291 : vector<1x1x2x384xf32> to vector<2x384xf32>
    %c0_108 = arith.constant 0 : index
    %c0_109 = arith.constant 0 : index
    %c0_110 = arith.constant 0 : index
    %293 = vector.load %arg3[%c0_108, %c0_109, %c0_110] : memref<1x128x384xf32, #tpu.memory_space<vmem>>, vector<1x128x384xf32>
    %294 = vector.shape_cast %293 : vector<1x128x384xf32> to vector<128x384xf32>
    %cst_111 = arith.constant dense<0.000000e+00> : vector<2x384xf32>
    %295 = tpu.matmul %281, %294, %cst_111 {dimension_numbers = #tpu.dot_dimension_numbers<[1], [0], [0], [1], [0, 0, 1, 1], [], []>} : vector<2x128xf32>, vector<128x384xf32>, vector<2x384xf32> -> vector<2x384xf32>
    %296 = vector.extract_strided_slice %292 {offsets = [0, 0], sizes = [2, 128], strides = [1, 1]} : vector<2x384xf32> to vector<2x128xf32>
    %297 = vector.extract_strided_slice %295 {offsets = [0, 0], sizes = [2, 128], strides = [1, 1]} : vector<2x384xf32> to vector<2x128xf32>
    %298 = arith.addf %296, %297 : vector<2x128xf32>
    %299 = arith.negf %298 : vector<2x128xf32>
    %300 = math.exp %299 : vector<2x128xf32>
    %cst_112 = arith.constant 1.000000e+00 : f32
    %301 = vector.broadcast %cst_112 : f32 to vector<2x128xf32>
    %302 = arith.addf %301, %300 : vector<2x128xf32>
    %303 = arith.divf %301, %302 : vector<2x128xf32>
    %304 = vector.extract_strided_slice %292 {offsets = [0, 128], sizes = [2, 128], strides = [1, 1]} : vector<2x384xf32> to vector<2x128xf32>
    %305 = vector.extract_strided_slice %295 {offsets = [0, 128], sizes = [2, 128], strides = [1, 1]} : vector<2x384xf32> to vector<2x128xf32>
    %306 = arith.addf %304, %305 : vector<2x128xf32>
    %307 = arith.negf %306 : vector<2x128xf32>
    %308 = math.exp %307 : vector<2x128xf32>
    %cst_113 = arith.constant 1.000000e+00 : f32
    %309 = vector.broadcast %cst_113 : f32 to vector<2x128xf32>
    %310 = arith.addf %309, %308 : vector<2x128xf32>
    %311 = arith.divf %309, %310 : vector<2x128xf32>
    %312 = vector.extract_strided_slice %292 {offsets = [0, 256], sizes = [2, 128], strides = [1, 1]} : vector<2x384xf32> to vector<2x128xf32>
    %313 = vector.extract_strided_slice %295 {offsets = [0, 256], sizes = [2, 128], strides = [1, 1]} : vector<2x384xf32> to vector<2x128xf32>
    %314 = vector.broadcast %4 : vector<1x128xf32> to vector<2x128xf32>
    %315 = arith.addf %313, %314 : vector<2x128xf32>
    %316 = arith.mulf %303, %315 : vector<2x128xf32>
    %317 = arith.addf %312, %316 : vector<2x128xf32>
    %318 = math.tanh %317 : vector<2x128xf32>
    %319 = arith.subf %281, %318 : vector<2x128xf32>
    %320 = arith.mulf %311, %319 : vector<2x128xf32>
    %321 = arith.addf %318, %320 : vector<2x128xf32>
    %c0_114 = arith.constant 0 : index
    %322 = arith.index_cast %289 : i32 to index
    %c0_115 = arith.constant 0 : index
    %c0_116 = arith.constant 0 : index
    %323 = vector.load %arg5[%c0_114, %322, %c0_115, %c0_116] : memref<1x8x2x128xf32, #tpu.memory_space<vmem>>, vector<1x1x2x128xf32>
    %324 = vector.shape_cast %323 : vector<1x1x2x128xf32> to vector<2x128xf32>
    %325 = vector.shape_cast %321 : vector<2x128xf32> to vector<1x1x2x128xf32>
    tpu.vector_store %arg5[%c0_114, %322, %c0_115, %c0_116], %325 {strides = array<i32>} : memref<1x8x2x128xf32, #tpu.memory_space<vmem>>, vector<1x1x2x128xf32>,
    %c8_i32 = arith.constant 8 : i32
    %c0_117 = arith.constant 0 : index
    %c0_118 = arith.constant 0 : index
    %326 = vector.load %arg7[%c0_117, %c0_118] : memref<2x128xf32, #tpu.memory_space<vmem>>, vector<2x128xf32>
    tpu.vector_store %arg7[%c0_117, %c0_118], %321 {strides = array<i32>} : memref<2x128xf32, #tpu.memory_space<vmem>>, vector<2x128xf32>,
    %c0_i32_119 = arith.constant 0 : i32
    %327 = arith.cmpi eq, %arg1, %c0_i32_119 : i32
    %328 = arith.extui %327 : i1 to i32
    %c0_i32_120 = arith.constant 0 : i32
    %329 = arith.cmpi ne, %328, %c0_i32_120 : i32
    scf.if %329 {
      %c0_121 = arith.constant 0 : index
      %c0_122 = arith.constant 0 : index
      %c0_123 = arith.constant 0 : index
      %330 = vector.load %arg6[%c0_121, %c0_122, %c0_123] : memref<1x2x128xf32, #tpu.memory_space<vmem>>, vector<1x2x128xf32>
      %331 = vector.shape_cast %330 : vector<1x2x128xf32> to vector<2x128xf32>
      %332 = vector.shape_cast %321 : vector<2x128xf32> to vector<1x2x128xf32>
      tpu.vector_store %arg6[%c0_121, %c0_122, %c0_123], %332 {strides = array<i32>} : memref<1x2x128xf32, #tpu.memory_space<vmem>>, vector<1x2x128xf32>,
    } else {
    }
    return
  }
  func.func @transform_0(%arg0: i32, %arg1: i32) -> (i32, i32, i32, i32) {
    %c2_i32 = arith.constant 2 : i32
    %0 = arith.muli %c2_i32, %arg1 : i32
    %c0_i32 = arith.constant 0 : i32
    %1 = arith.subi %c0_i32, %0 : i32
    %2 = arith.muli %arg0, %1 : i32
    %3 = arith.addi %arg1, %2 : i32
    %c0_i32_0 = arith.constant 0 : i32
    %c0_i32_1 = arith.constant 0 : i32
    %c0_i32_2 = arith.constant 0 : i32
    return %arg0, %3, %c0_i32_0, %c0_i32_1 : i32, i32, i32, i32
  }
  func.func @transform_1(%arg0: i32, %arg1: i32) -> (i32, i32, i32) {
    %c0_i32 = arith.constant 0 : i32
    %c0_i32_0 = arith.constant 0 : i32
    %c0_i32_1 = arith.constant 0 : i32
    return %arg0, %c0_i32, %c0_i32_0 : i32, i32, i32
  }
  func.func @transform_2(%arg0: i32, %arg1: i32) -> (i32, i32, i32) {
    %c0_i32 = arith.constant 0 : i32
    %c0_i32_0 = arith.constant 0 : i32
    %c0_i32_1 = arith.constant 0 : i32
    return %arg0, %c0_i32, %c0_i32_0 : i32, i32, i32
  }
  func.func @transform_3(%arg0: i32, %arg1: i32) -> (i32, i32, i32, i32) {
    %c2_i32 = arith.constant 2 : i32
    %0 = arith.muli %c2_i32, %arg1 : i32
    %c0_i32 = arith.constant 0 : i32
    %1 = arith.subi %c0_i32, %0 : i32
    %2 = arith.muli %arg0, %1 : i32
    %3 = arith.addi %arg1, %2 : i32
    %c0_i32_0 = arith.constant 0 : i32
    %c0_i32_1 = arith.constant 0 : i32
    %c0_i32_2 = arith.constant 0 : i32
    return %arg0, %3, %c0_i32_0, %c0_i32_1 : i32, i32, i32, i32
  }
  func.func @transform_4(%arg0: i32, %arg1: i32) -> (i32, i32, i32) {
    %c0_i32 = arith.constant 0 : i32
    %c0_i32_0 = arith.constant 0 : i32
    %c0_i32_1 = arith.constant 0 : i32
    return %arg0, %c0_i32, %c0_i32_0 : i32, i32, i32
  }
}

module attributes {stable_mosaic.version = 11 : i64} {
  func.func @_bigru_block_kernel(%arg0: i32, %arg1: i32, %arg2: memref<1x8x2x384xf32, #tpu.memory_space<vmem>>, %arg3: memref<1x128x384xf32, #tpu.memory_space<vmem>>, %arg4: memref<1x1x128xf32, #tpu.memory_space<vmem>>, %arg5: memref<1x8x2x128xf32, #tpu.memory_space<vmem>>, %arg6: memref<1x2x128xf32, #tpu.memory_space<vmem>>, %arg7: memref<2x128xf32, #tpu.memory_space<vmem>>) attributes {dimension_semantics = [#tpu.dimension_semantics<parallel>, #tpu.dimension_semantics<arbitrary>], iteration_bounds = array<i64: 2, 1>, scalar_prefetch = 0 : i64, scratch_operands = 1 : i64, tpu.core_type = #tpu.core_type<tc>, window_params = [{transform_indices = @transform_0, window_bounds = array<i64: 1, 8, 2, 384>}, {transform_indices = @transform_1, window_bounds = array<i64: 1, 128, 384>}, {transform_indices = @transform_2, window_bounds = array<i64: 1, 1, 128>}, {transform_indices = @transform_3, window_bounds = array<i64: 1, 8, 2, 128>}, {transform_indices = @transform_4, window_bounds = array<i64: 1, 2, 128>}]} {
    %c0_i32 = arith.constant 0 : i32
    %0 = arith.cmpi eq, %arg1, %c0_i32 : i32
    %1 = arith.extui %0 : i1 to i32
    %c0_i32_0 = arith.constant 0 : i32
    %2 = arith.cmpi ne, %1, %c0_i32_0 : i32
    scf.if %2 {
      %cst_121 = arith.constant 0.000000e+00 : f32
      %330 = vector.broadcast %cst_121 : f32 to vector<2x128xf32>
      %c0_122 = arith.constant 0 : index
      %c0_123 = arith.constant 0 : index
      %331 = vector.load %arg7[%c0_122, %c0_123] : memref<2x128xf32, #tpu.memory_space<vmem>>, vector<2x128xf32>
      tpu.vector_store %arg7[%c0_122, %c0_123], %330 {strides = array<i32>} : memref<2x128xf32, #tpu.memory_space<vmem>>, vector<2x128xf32>,
    } else {
    }
    %c0 = arith.constant 0 : index
    %c0_1 = arith.constant 0 : index
    %c0_2 = arith.constant 0 : index
    %3 = vector.load %arg4[%c0, %c0_1, %c0_2] : memref<1x1x128xf32, #tpu.memory_space<vmem>>, vector<1x1x128xf32>
    %4 = vector.shape_cast %3 : vector<1x1x128xf32> to vector<1x128xf32>
    %c0_3 = arith.constant 0 : index
    %c0_4 = arith.constant 0 : index
    %5 = vector.load %arg7[%c0_3, %c0_4] : memref<2x128xf32, #tpu.memory_space<vmem>>, vector<2x128xf32>
    %c0_i32_5 = arith.constant 0 : i32
    %c2_i32 = arith.constant 2 : i32
    %6 = arith.muli %c2_i32, %c0_i32_5 : i32
    %c7_i32 = arith.constant 7 : i32
    %7 = arith.subi %c7_i32, %6 : i32
    %8 = arith.muli %arg0, %7 : i32
    %9 = arith.addi %c0_i32_5, %8 : i32
    %c0_6 = arith.constant 0 : index
    %10 = arith.index_cast %9 : i32 to index
    %c0_7 = arith.constant 0 : index
    %c0_8 = arith.constant 0 : index
    %11 = vector.load %arg2[%c0_6, %10, %c0_7, %c0_8] : memref<1x8x2x384xf32, #tpu.memory_space<vmem>>, vector<1x1x2x384xf32>
    %12 = vector.shape_cast %11 : vector<1x1x2x384xf32> to vector<2x384xf32>
    %c0_9 = arith.constant 0 : index
    %c0_10 = arith.constant 0 : index
    %c0_11 = arith.constant 0 : index
    %13 = vector.load %arg3[%c0_9, %c0_10, %c0_11] : memref<1x128x384xf32, #tpu.memory_space<vmem>>, vector<1x128x384xf32>
    %14 = vector.shape_cast %13 : vector<1x128x384xf32> to vector<128x384xf32>
    %cst = arith.constant dense<0.000000e+00> : vector<2x384xf32>
    %15 = tpu.matmul %5, %14, %cst {dimension_numbers = #tpu.dot_dimension_numbers<[1], [0], [0], [1], [0, 0, 1, 1], [], []>} : vector<2x128xf32>, vector<128x384xf32>, vector<2x384xf32> -> vector<2x384xf32>
    %16 = vector.extract_strided_slice %12 {offsets = [0, 0], sizes = [2, 128], strides = [1, 1]} : vector<2x384xf32> to vector<2x128xf32>
    %17 = vector.extract_strided_slice %15 {offsets = [0, 0], sizes = [2, 128], strides = [1, 1]} : vector<2x384xf32> to vector<2x128xf32>
    %18 = arith.addf %16, %17 : vector<2x128xf32>
    %19 = arith.negf %18 : vector<2x128xf32>
    %20 = math.exp %19 : vector<2x128xf32>
    %cst_12 = arith.constant 1.000000e+00 : f32
    %21 = vector.broadcast %cst_12 : f32 to vector<2x128xf32>
    %22 = arith.addf %21, %20 : vector<2x128xf32>
    %23 = arith.divf %21, %22 : vector<2x128xf32>
    %24 = vector.extract_strided_slice %12 {offsets = [0, 128], sizes = [2, 128], strides = [1, 1]} : vector<2x384xf32> to vector<2x128xf32>
    %25 = vector.extract_strided_slice %15 {offsets = [0, 128], sizes = [2, 128], strides = [1, 1]} : vector<2x384xf32> to vector<2x128xf32>
    %26 = arith.addf %24, %25 : vector<2x128xf32>
    %27 = arith.negf %26 : vector<2x128xf32>
    %28 = math.exp %27 : vector<2x128xf32>
    %cst_13 = arith.constant 1.000000e+00 : f32
    %29 = vector.broadcast %cst_13 : f32 to vector<2x128xf32>
    %30 = arith.addf %29, %28 : vector<2x128xf32>
    %31 = arith.divf %29, %30 : vector<2x128xf32>
    %32 = vector.extract_strided_slice %12 {offsets = [0, 256], sizes = [2, 128], strides = [1, 1]} : vector<2x384xf32> to vector<2x128xf32>
    %33 = vector.extract_strided_slice %15 {offsets = [0, 256], sizes = [2, 128], strides = [1, 1]} : vector<2x384xf32> to vector<2x128xf32>
    %34 = vector.broadcast %4 : vector<1x128xf32> to vector<2x128xf32>
    %35 = arith.addf %33, %34 : vector<2x128xf32>
    %36 = arith.mulf %23, %35 : vector<2x128xf32>
    %37 = arith.addf %32, %36 : vector<2x128xf32>
    %38 = math.tanh %37 : vector<2x128xf32>
    %39 = arith.subf %5, %38 : vector<2x128xf32>
    %40 = arith.mulf %31, %39 : vector<2x128xf32>
    %41 = arith.addf %38, %40 : vector<2x128xf32>
    %c0_14 = arith.constant 0 : index
    %42 = arith.index_cast %9 : i32 to index
    %c0_15 = arith.constant 0 : index
    %c0_16 = arith.constant 0 : index
    %43 = vector.load %arg5[%c0_14, %42, %c0_15, %c0_16] : memref<1x8x2x128xf32, #tpu.memory_space<vmem>>, vector<1x1x2x128xf32>
    %44 = vector.shape_cast %43 : vector<1x1x2x128xf32> to vector<2x128xf32>
    %45 = vector.shape_cast %41 : vector<2x128xf32> to vector<1x1x2x128xf32>
    tpu.vector_store %arg5[%c0_14, %42, %c0_15, %c0_16], %45 {strides = array<i32>} : memref<1x8x2x128xf32, #tpu.memory_space<vmem>>, vector<1x1x2x128xf32>,
    %c1_i32 = arith.constant 1 : i32
    %c2_i32_17 = arith.constant 2 : i32
    %46 = arith.muli %c2_i32_17, %c1_i32 : i32
    %c7_i32_18 = arith.constant 7 : i32
    %47 = arith.subi %c7_i32_18, %46 : i32
    %48 = arith.muli %arg0, %47 : i32
    %49 = arith.addi %c1_i32, %48 : i32
    %c0_19 = arith.constant 0 : index
    %50 = arith.index_cast %49 : i32 to index
    %c0_20 = arith.constant 0 : index
    %c0_21 = arith.constant 0 : index
    %51 = vector.load %arg2[%c0_19, %50, %c0_20, %c0_21] : memref<1x8x2x384xf32, #tpu.memory_space<vmem>>, vector<1x1x2x384xf32>
    %52 = vector.shape_cast %51 : vector<1x1x2x384xf32> to vector<2x384xf32>
    %c0_22 = arith.constant 0 : index
    %c0_23 = arith.constant 0 : index
    %c0_24 = arith.constant 0 : index
    %53 = vector.load %arg3[%c0_22, %c0_23, %c0_24] : memref<1x128x384xf32, #tpu.memory_space<vmem>>, vector<1x128x384xf32>
    %54 = vector.shape_cast %53 : vector<1x128x384xf32> to vector<128x384xf32>
    %cst_25 = arith.constant dense<0.000000e+00> : vector<2x384xf32>
    %55 = tpu.matmul %41, %54, %cst_25 {dimension_numbers = #tpu.dot_dimension_numbers<[1], [0], [0], [1], [0, 0, 1, 1], [], []>} : vector<2x128xf32>, vector<128x384xf32>, vector<2x384xf32> -> vector<2x384xf32>
    %56 = vector.extract_strided_slice %52 {offsets = [0, 0], sizes = [2, 128], strides = [1, 1]} : vector<2x384xf32> to vector<2x128xf32>
    %57 = vector.extract_strided_slice %55 {offsets = [0, 0], sizes = [2, 128], strides = [1, 1]} : vector<2x384xf32> to vector<2x128xf32>
    %58 = arith.addf %56, %57 : vector<2x128xf32>
    %59 = arith.negf %58 : vector<2x128xf32>
    %60 = math.exp %59 : vector<2x128xf32>
    %cst_26 = arith.constant 1.000000e+00 : f32
    %61 = vector.broadcast %cst_26 : f32 to vector<2x128xf32>
    %62 = arith.addf %61, %60 : vector<2x128xf32>
    %63 = arith.divf %61, %62 : vector<2x128xf32>
    %64 = vector.extract_strided_slice %52 {offsets = [0, 128], sizes = [2, 128], strides = [1, 1]} : vector<2x384xf32> to vector<2x128xf32>
    %65 = vector.extract_strided_slice %55 {offsets = [0, 128], sizes = [2, 128], strides = [1, 1]} : vector<2x384xf32> to vector<2x128xf32>
    %66 = arith.addf %64, %65 : vector<2x128xf32>
    %67 = arith.negf %66 : vector<2x128xf32>
    %68 = math.exp %67 : vector<2x128xf32>
    %cst_27 = arith.constant 1.000000e+00 : f32
    %69 = vector.broadcast %cst_27 : f32 to vector<2x128xf32>
    %70 = arith.addf %69, %68 : vector<2x128xf32>
    %71 = arith.divf %69, %70 : vector<2x128xf32>
    %72 = vector.extract_strided_slice %52 {offsets = [0, 256], sizes = [2, 128], strides = [1, 1]} : vector<2x384xf32> to vector<2x128xf32>
    %73 = vector.extract_strided_slice %55 {offsets = [0, 256], sizes = [2, 128], strides = [1, 1]} : vector<2x384xf32> to vector<2x128xf32>
    %74 = vector.broadcast %4 : vector<1x128xf32> to vector<2x128xf32>
    %75 = arith.addf %73, %74 : vector<2x128xf32>
    %76 = arith.mulf %63, %75 : vector<2x128xf32>
    %77 = arith.addf %72, %76 : vector<2x128xf32>
    %78 = math.tanh %77 : vector<2x128xf32>
    %79 = arith.subf %41, %78 : vector<2x128xf32>
    %80 = arith.mulf %71, %79 : vector<2x128xf32>
    %81 = arith.addf %78, %80 : vector<2x128xf32>
    %c0_28 = arith.constant 0 : index
    %82 = arith.index_cast %49 : i32 to index
    %c0_29 = arith.constant 0 : index
    %c0_30 = arith.constant 0 : index
    %83 = vector.load %arg5[%c0_28, %82, %c0_29, %c0_30] : memref<1x8x2x128xf32, #tpu.memory_space<vmem>>, vector<1x1x2x128xf32>
    %84 = vector.shape_cast %83 : vector<1x1x2x128xf32> to vector<2x128xf32>
    %85 = vector.shape_cast %81 : vector<2x128xf32> to vector<1x1x2x128xf32>
    tpu.vector_store %arg5[%c0_28, %82, %c0_29, %c0_30], %85 {strides = array<i32>} : memref<1x8x2x128xf32, #tpu.memory_space<vmem>>, vector<1x1x2x128xf32>,
    %c2_i32_31 = arith.constant 2 : i32
    %c2_i32_32 = arith.constant 2 : i32
    %86 = arith.muli %c2_i32_32, %c2_i32_31 : i32
    %c7_i32_33 = arith.constant 7 : i32
    %87 = arith.subi %c7_i32_33, %86 : i32
    %88 = arith.muli %arg0, %87 : i32
    %89 = arith.addi %c2_i32_31, %88 : i32
    %c0_34 = arith.constant 0 : index
    %90 = arith.index_cast %89 : i32 to index
    %c0_35 = arith.constant 0 : index
    %c0_36 = arith.constant 0 : index
    %91 = vector.load %arg2[%c0_34, %90, %c0_35, %c0_36] : memref<1x8x2x384xf32, #tpu.memory_space<vmem>>, vector<1x1x2x384xf32>
    %92 = vector.shape_cast %91 : vector<1x1x2x384xf32> to vector<2x384xf32>
    %c0_37 = arith.constant 0 : index
    %c0_38 = arith.constant 0 : index
    %c0_39 = arith.constant 0 : index
    %93 = vector.load %arg3[%c0_37, %c0_38, %c0_39] : memref<1x128x384xf32, #tpu.memory_space<vmem>>, vector<1x128x384xf32>
    %94 = vector.shape_cast %93 : vector<1x128x384xf32> to vector<128x384xf32>
    %cst_40 = arith.constant dense<0.000000e+00> : vector<2x384xf32>
    %95 = tpu.matmul %81, %94, %cst_40 {dimension_numbers = #tpu.dot_dimension_numbers<[1], [0], [0], [1], [0, 0, 1, 1], [], []>} : vector<2x128xf32>, vector<128x384xf32>, vector<2x384xf32> -> vector<2x384xf32>
    %96 = vector.extract_strided_slice %92 {offsets = [0, 0], sizes = [2, 128], strides = [1, 1]} : vector<2x384xf32> to vector<2x128xf32>
    %97 = vector.extract_strided_slice %95 {offsets = [0, 0], sizes = [2, 128], strides = [1, 1]} : vector<2x384xf32> to vector<2x128xf32>
    %98 = arith.addf %96, %97 : vector<2x128xf32>
    %99 = arith.negf %98 : vector<2x128xf32>
    %100 = math.exp %99 : vector<2x128xf32>
    %cst_41 = arith.constant 1.000000e+00 : f32
    %101 = vector.broadcast %cst_41 : f32 to vector<2x128xf32>
    %102 = arith.addf %101, %100 : vector<2x128xf32>
    %103 = arith.divf %101, %102 : vector<2x128xf32>
    %104 = vector.extract_strided_slice %92 {offsets = [0, 128], sizes = [2, 128], strides = [1, 1]} : vector<2x384xf32> to vector<2x128xf32>
    %105 = vector.extract_strided_slice %95 {offsets = [0, 128], sizes = [2, 128], strides = [1, 1]} : vector<2x384xf32> to vector<2x128xf32>
    %106 = arith.addf %104, %105 : vector<2x128xf32>
    %107 = arith.negf %106 : vector<2x128xf32>
    %108 = math.exp %107 : vector<2x128xf32>
    %cst_42 = arith.constant 1.000000e+00 : f32
    %109 = vector.broadcast %cst_42 : f32 to vector<2x128xf32>
    %110 = arith.addf %109, %108 : vector<2x128xf32>
    %111 = arith.divf %109, %110 : vector<2x128xf32>
    %112 = vector.extract_strided_slice %92 {offsets = [0, 256], sizes = [2, 128], strides = [1, 1]} : vector<2x384xf32> to vector<2x128xf32>
    %113 = vector.extract_strided_slice %95 {offsets = [0, 256], sizes = [2, 128], strides = [1, 1]} : vector<2x384xf32> to vector<2x128xf32>
    %114 = vector.broadcast %4 : vector<1x128xf32> to vector<2x128xf32>
    %115 = arith.addf %113, %114 : vector<2x128xf32>
    %116 = arith.mulf %103, %115 : vector<2x128xf32>
    %117 = arith.addf %112, %116 : vector<2x128xf32>
    %118 = math.tanh %117 : vector<2x128xf32>
    %119 = arith.subf %81, %118 : vector<2x128xf32>
    %120 = arith.mulf %111, %119 : vector<2x128xf32>
    %121 = arith.addf %118, %120 : vector<2x128xf32>
    %c0_43 = arith.constant 0 : index
    %122 = arith.index_cast %89 : i32 to index
    %c0_44 = arith.constant 0 : index
    %c0_45 = arith.constant 0 : index
    %123 = vector.load %arg5[%c0_43, %122, %c0_44, %c0_45] : memref<1x8x2x128xf32, #tpu.memory_space<vmem>>, vector<1x1x2x128xf32>
    %124 = vector.shape_cast %123 : vector<1x1x2x128xf32> to vector<2x128xf32>
    %125 = vector.shape_cast %121 : vector<2x128xf32> to vector<1x1x2x128xf32>
    tpu.vector_store %arg5[%c0_43, %122, %c0_44, %c0_45], %125 {strides = array<i32>} : memref<1x8x2x128xf32, #tpu.memory_space<vmem>>, vector<1x1x2x128xf32>,
    %c3_i32 = arith.constant 3 : i32
    %c2_i32_46 = arith.constant 2 : i32
    %126 = arith.muli %c2_i32_46, %c3_i32 : i32
    %c7_i32_47 = arith.constant 7 : i32
    %127 = arith.subi %c7_i32_47, %126 : i32
    %128 = arith.muli %arg0, %127 : i32
    %129 = arith.addi %c3_i32, %128 : i32
    %c0_48 = arith.constant 0 : index
    %130 = arith.index_cast %129 : i32 to index
    %c0_49 = arith.constant 0 : index
    %c0_50 = arith.constant 0 : index
    %131 = vector.load %arg2[%c0_48, %130, %c0_49, %c0_50] : memref<1x8x2x384xf32, #tpu.memory_space<vmem>>, vector<1x1x2x384xf32>
    %132 = vector.shape_cast %131 : vector<1x1x2x384xf32> to vector<2x384xf32>
    %c0_51 = arith.constant 0 : index
    %c0_52 = arith.constant 0 : index
    %c0_53 = arith.constant 0 : index
    %133 = vector.load %arg3[%c0_51, %c0_52, %c0_53] : memref<1x128x384xf32, #tpu.memory_space<vmem>>, vector<1x128x384xf32>
    %134 = vector.shape_cast %133 : vector<1x128x384xf32> to vector<128x384xf32>
    %cst_54 = arith.constant dense<0.000000e+00> : vector<2x384xf32>
    %135 = tpu.matmul %121, %134, %cst_54 {dimension_numbers = #tpu.dot_dimension_numbers<[1], [0], [0], [1], [0, 0, 1, 1], [], []>} : vector<2x128xf32>, vector<128x384xf32>, vector<2x384xf32> -> vector<2x384xf32>
    %136 = vector.extract_strided_slice %132 {offsets = [0, 0], sizes = [2, 128], strides = [1, 1]} : vector<2x384xf32> to vector<2x128xf32>
    %137 = vector.extract_strided_slice %135 {offsets = [0, 0], sizes = [2, 128], strides = [1, 1]} : vector<2x384xf32> to vector<2x128xf32>
    %138 = arith.addf %136, %137 : vector<2x128xf32>
    %139 = arith.negf %138 : vector<2x128xf32>
    %140 = math.exp %139 : vector<2x128xf32>
    %cst_55 = arith.constant 1.000000e+00 : f32
    %141 = vector.broadcast %cst_55 : f32 to vector<2x128xf32>
    %142 = arith.addf %141, %140 : vector<2x128xf32>
    %143 = arith.divf %141, %142 : vector<2x128xf32>
    %144 = vector.extract_strided_slice %132 {offsets = [0, 128], sizes = [2, 128], strides = [1, 1]} : vector<2x384xf32> to vector<2x128xf32>
    %145 = vector.extract_strided_slice %135 {offsets = [0, 128], sizes = [2, 128], strides = [1, 1]} : vector<2x384xf32> to vector<2x128xf32>
    %146 = arith.addf %144, %145 : vector<2x128xf32>
    %147 = arith.negf %146 : vector<2x128xf32>
    %148 = math.exp %147 : vector<2x128xf32>
    %cst_56 = arith.constant 1.000000e+00 : f32
    %149 = vector.broadcast %cst_56 : f32 to vector<2x128xf32>
    %150 = arith.addf %149, %148 : vector<2x128xf32>
    %151 = arith.divf %149, %150 : vector<2x128xf32>
    %152 = vector.extract_strided_slice %132 {offsets = [0, 256], sizes = [2, 128], strides = [1, 1]} : vector<2x384xf32> to vector<2x128xf32>
    %153 = vector.extract_strided_slice %135 {offsets = [0, 256], sizes = [2, 128], strides = [1, 1]} : vector<2x384xf32> to vector<2x128xf32>
    %154 = vector.broadcast %4 : vector<1x128xf32> to vector<2x128xf32>
    %155 = arith.addf %153, %154 : vector<2x128xf32>
    %156 = arith.mulf %143, %155 : vector<2x128xf32>
    %157 = arith.addf %152, %156 : vector<2x128xf32>
    %158 = math.tanh %157 : vector<2x128xf32>
    %159 = arith.subf %121, %158 : vector<2x128xf32>
    %160 = arith.mulf %151, %159 : vector<2x128xf32>
    %161 = arith.addf %158, %160 : vector<2x128xf32>
    %c0_57 = arith.constant 0 : index
    %162 = arith.index_cast %129 : i32 to index
    %c0_58 = arith.constant 0 : index
    %c0_59 = arith.constant 0 : index
    %163 = vector.load %arg5[%c0_57, %162, %c0_58, %c0_59] : memref<1x8x2x128xf32, #tpu.memory_space<vmem>>, vector<1x1x2x128xf32>
    %164 = vector.shape_cast %163 : vector<1x1x2x128xf32> to vector<2x128xf32>
    %165 = vector.shape_cast %161 : vector<2x128xf32> to vector<1x1x2x128xf32>
    tpu.vector_store %arg5[%c0_57, %162, %c0_58, %c0_59], %165 {strides = array<i32>} : memref<1x8x2x128xf32, #tpu.memory_space<vmem>>, vector<1x1x2x128xf32>,
    %c4_i32 = arith.constant 4 : i32
    %c2_i32_60 = arith.constant 2 : i32
    %166 = arith.muli %c2_i32_60, %c4_i32 : i32
    %c7_i32_61 = arith.constant 7 : i32
    %167 = arith.subi %c7_i32_61, %166 : i32
    %168 = arith.muli %arg0, %167 : i32
    %169 = arith.addi %c4_i32, %168 : i32
    %c0_62 = arith.constant 0 : index
    %170 = arith.index_cast %169 : i32 to index
    %c0_63 = arith.constant 0 : index
    %c0_64 = arith.constant 0 : index
    %171 = vector.load %arg2[%c0_62, %170, %c0_63, %c0_64] : memref<1x8x2x384xf32, #tpu.memory_space<vmem>>, vector<1x1x2x384xf32>
    %172 = vector.shape_cast %171 : vector<1x1x2x384xf32> to vector<2x384xf32>
    %c0_65 = arith.constant 0 : index
    %c0_66 = arith.constant 0 : index
    %c0_67 = arith.constant 0 : index
    %173 = vector.load %arg3[%c0_65, %c0_66, %c0_67] : memref<1x128x384xf32, #tpu.memory_space<vmem>>, vector<1x128x384xf32>
    %174 = vector.shape_cast %173 : vector<1x128x384xf32> to vector<128x384xf32>
    %cst_68 = arith.constant dense<0.000000e+00> : vector<2x384xf32>
    %175 = tpu.matmul %161, %174, %cst_68 {dimension_numbers = #tpu.dot_dimension_numbers<[1], [0], [0], [1], [0, 0, 1, 1], [], []>} : vector<2x128xf32>, vector<128x384xf32>, vector<2x384xf32> -> vector<2x384xf32>
    %176 = vector.extract_strided_slice %172 {offsets = [0, 0], sizes = [2, 128], strides = [1, 1]} : vector<2x384xf32> to vector<2x128xf32>
    %177 = vector.extract_strided_slice %175 {offsets = [0, 0], sizes = [2, 128], strides = [1, 1]} : vector<2x384xf32> to vector<2x128xf32>
    %178 = arith.addf %176, %177 : vector<2x128xf32>
    %179 = arith.negf %178 : vector<2x128xf32>
    %180 = math.exp %179 : vector<2x128xf32>
    %cst_69 = arith.constant 1.000000e+00 : f32
    %181 = vector.broadcast %cst_69 : f32 to vector<2x128xf32>
    %182 = arith.addf %181, %180 : vector<2x128xf32>
    %183 = arith.divf %181, %182 : vector<2x128xf32>
    %184 = vector.extract_strided_slice %172 {offsets = [0, 128], sizes = [2, 128], strides = [1, 1]} : vector<2x384xf32> to vector<2x128xf32>
    %185 = vector.extract_strided_slice %175 {offsets = [0, 128], sizes = [2, 128], strides = [1, 1]} : vector<2x384xf32> to vector<2x128xf32>
    %186 = arith.addf %184, %185 : vector<2x128xf32>
    %187 = arith.negf %186 : vector<2x128xf32>
    %188 = math.exp %187 : vector<2x128xf32>
    %cst_70 = arith.constant 1.000000e+00 : f32
    %189 = vector.broadcast %cst_70 : f32 to vector<2x128xf32>
    %190 = arith.addf %189, %188 : vector<2x128xf32>
    %191 = arith.divf %189, %190 : vector<2x128xf32>
    %192 = vector.extract_strided_slice %172 {offsets = [0, 256], sizes = [2, 128], strides = [1, 1]} : vector<2x384xf32> to vector<2x128xf32>
    %193 = vector.extract_strided_slice %175 {offsets = [0, 256], sizes = [2, 128], strides = [1, 1]} : vector<2x384xf32> to vector<2x128xf32>
    %194 = vector.broadcast %4 : vector<1x128xf32> to vector<2x128xf32>
    %195 = arith.addf %193, %194 : vector<2x128xf32>
    %196 = arith.mulf %183, %195 : vector<2x128xf32>
    %197 = arith.addf %192, %196 : vector<2x128xf32>
    %198 = math.tanh %197 : vector<2x128xf32>
    %199 = arith.subf %161, %198 : vector<2x128xf32>
    %200 = arith.mulf %191, %199 : vector<2x128xf32>
    %201 = arith.addf %198, %200 : vector<2x128xf32>
    %c0_71 = arith.constant 0 : index
    %202 = arith.index_cast %169 : i32 to index
    %c0_72 = arith.constant 0 : index
    %c0_73 = arith.constant 0 : index
    %203 = vector.load %arg5[%c0_71, %202, %c0_72, %c0_73] : memref<1x8x2x128xf32, #tpu.memory_space<vmem>>, vector<1x1x2x128xf32>
    %204 = vector.shape_cast %203 : vector<1x1x2x128xf32> to vector<2x128xf32>
    %205 = vector.shape_cast %201 : vector<2x128xf32> to vector<1x1x2x128xf32>
    tpu.vector_store %arg5[%c0_71, %202, %c0_72, %c0_73], %205 {strides = array<i32>} : memref<1x8x2x128xf32, #tpu.memory_space<vmem>>, vector<1x1x2x128xf32>,
    %c5_i32 = arith.constant 5 : i32
    %c2_i32_74 = arith.constant 2 : i32
    %206 = arith.muli %c2_i32_74, %c5_i32 : i32
    %c7_i32_75 = arith.constant 7 : i32
    %207 = arith.subi %c7_i32_75, %206 : i32
    %208 = arith.muli %arg0, %207 : i32
    %209 = arith.addi %c5_i32, %208 : i32
    %c0_76 = arith.constant 0 : index
    %210 = arith.index_cast %209 : i32 to index
    %c0_77 = arith.constant 0 : index
    %c0_78 = arith.constant 0 : index
    %211 = vector.load %arg2[%c0_76, %210, %c0_77, %c0_78] : memref<1x8x2x384xf32, #tpu.memory_space<vmem>>, vector<1x1x2x384xf32>
    %212 = vector.shape_cast %211 : vector<1x1x2x384xf32> to vector<2x384xf32>
    %c0_79 = arith.constant 0 : index
    %c0_80 = arith.constant 0 : index
    %c0_81 = arith.constant 0 : index
    %213 = vector.load %arg3[%c0_79, %c0_80, %c0_81] : memref<1x128x384xf32, #tpu.memory_space<vmem>>, vector<1x128x384xf32>
    %214 = vector.shape_cast %213 : vector<1x128x384xf32> to vector<128x384xf32>
    %cst_82 = arith.constant dense<0.000000e+00> : vector<2x384xf32>
    %215 = tpu.matmul %201, %214, %cst_82 {dimension_numbers = #tpu.dot_dimension_numbers<[1], [0], [0], [1], [0, 0, 1, 1], [], []>} : vector<2x128xf32>, vector<128x384xf32>, vector<2x384xf32> -> vector<2x384xf32>
    %216 = vector.extract_strided_slice %212 {offsets = [0, 0], sizes = [2, 128], strides = [1, 1]} : vector<2x384xf32> to vector<2x128xf32>
    %217 = vector.extract_strided_slice %215 {offsets = [0, 0], sizes = [2, 128], strides = [1, 1]} : vector<2x384xf32> to vector<2x128xf32>
    %218 = arith.addf %216, %217 : vector<2x128xf32>
    %219 = arith.negf %218 : vector<2x128xf32>
    %220 = math.exp %219 : vector<2x128xf32>
    %cst_83 = arith.constant 1.000000e+00 : f32
    %221 = vector.broadcast %cst_83 : f32 to vector<2x128xf32>
    %222 = arith.addf %221, %220 : vector<2x128xf32>
    %223 = arith.divf %221, %222 : vector<2x128xf32>
    %224 = vector.extract_strided_slice %212 {offsets = [0, 128], sizes = [2, 128], strides = [1, 1]} : vector<2x384xf32> to vector<2x128xf32>
    %225 = vector.extract_strided_slice %215 {offsets = [0, 128], sizes = [2, 128], strides = [1, 1]} : vector<2x384xf32> to vector<2x128xf32>
    %226 = arith.addf %224, %225 : vector<2x128xf32>
    %227 = arith.negf %226 : vector<2x128xf32>
    %228 = math.exp %227 : vector<2x128xf32>
    %cst_84 = arith.constant 1.000000e+00 : f32
    %229 = vector.broadcast %cst_84 : f32 to vector<2x128xf32>
    %230 = arith.addf %229, %228 : vector<2x128xf32>
    %231 = arith.divf %229, %230 : vector<2x128xf32>
    %232 = vector.extract_strided_slice %212 {offsets = [0, 256], sizes = [2, 128], strides = [1, 1]} : vector<2x384xf32> to vector<2x128xf32>
    %233 = vector.extract_strided_slice %215 {offsets = [0, 256], sizes = [2, 128], strides = [1, 1]} : vector<2x384xf32> to vector<2x128xf32>
    %234 = vector.broadcast %4 : vector<1x128xf32> to vector<2x128xf32>
    %235 = arith.addf %233, %234 : vector<2x128xf32>
    %236 = arith.mulf %223, %235 : vector<2x128xf32>
    %237 = arith.addf %232, %236 : vector<2x128xf32>
    %238 = math.tanh %237 : vector<2x128xf32>
    %239 = arith.subf %201, %238 : vector<2x128xf32>
    %240 = arith.mulf %231, %239 : vector<2x128xf32>
    %241 = arith.addf %238, %240 : vector<2x128xf32>
    %c0_85 = arith.constant 0 : index
    %242 = arith.index_cast %209 : i32 to index
    %c0_86 = arith.constant 0 : index
    %c0_87 = arith.constant 0 : index
    %243 = vector.load %arg5[%c0_85, %242, %c0_86, %c0_87] : memref<1x8x2x128xf32, #tpu.memory_space<vmem>>, vector<1x1x2x128xf32>
    %244 = vector.shape_cast %243 : vector<1x1x2x128xf32> to vector<2x128xf32>
    %245 = vector.shape_cast %241 : vector<2x128xf32> to vector<1x1x2x128xf32>
    tpu.vector_store %arg5[%c0_85, %242, %c0_86, %c0_87], %245 {strides = array<i32>} : memref<1x8x2x128xf32, #tpu.memory_space<vmem>>, vector<1x1x2x128xf32>,
    %c6_i32 = arith.constant 6 : i32
    %c2_i32_88 = arith.constant 2 : i32
    %246 = arith.muli %c2_i32_88, %c6_i32 : i32
    %c7_i32_89 = arith.constant 7 : i32
    %247 = arith.subi %c7_i32_89, %246 : i32
    %248 = arith.muli %arg0, %247 : i32
    %249 = arith.addi %c6_i32, %248 : i32
    %c0_90 = arith.constant 0 : index
    %250 = arith.index_cast %249 : i32 to index
    %c0_91 = arith.constant 0 : index
    %c0_92 = arith.constant 0 : index
    %251 = vector.load %arg2[%c0_90, %250, %c0_91, %c0_92] : memref<1x8x2x384xf32, #tpu.memory_space<vmem>>, vector<1x1x2x384xf32>
    %252 = vector.shape_cast %251 : vector<1x1x2x384xf32> to vector<2x384xf32>
    %c0_93 = arith.constant 0 : index
    %c0_94 = arith.constant 0 : index
    %c0_95 = arith.constant 0 : index
    %253 = vector.load %arg3[%c0_93, %c0_94, %c0_95] : memref<1x128x384xf32, #tpu.memory_space<vmem>>, vector<1x128x384xf32>
    %254 = vector.shape_cast %253 : vector<1x128x384xf32> to vector<128x384xf32>
    %cst_96 = arith.constant dense<0.000000e+00> : vector<2x384xf32>
    %255 = tpu.matmul %241, %254, %cst_96 {dimension_numbers = #tpu.dot_dimension_numbers<[1], [0], [0], [1], [0, 0, 1, 1], [], []>} : vector<2x128xf32>, vector<128x384xf32>, vector<2x384xf32> -> vector<2x384xf32>
    %256 = vector.extract_strided_slice %252 {offsets = [0, 0], sizes = [2, 128], strides = [1, 1]} : vector<2x384xf32> to vector<2x128xf32>
    %257 = vector.extract_strided_slice %255 {offsets = [0, 0], sizes = [2, 128], strides = [1, 1]} : vector<2x384xf32> to vector<2x128xf32>
    %258 = arith.addf %256, %257 : vector<2x128xf32>
    %259 = arith.negf %258 : vector<2x128xf32>
    %260 = math.exp %259 : vector<2x128xf32>
    %cst_97 = arith.constant 1.000000e+00 : f32
    %261 = vector.broadcast %cst_97 : f32 to vector<2x128xf32>
    %262 = arith.addf %261, %260 : vector<2x128xf32>
    %263 = arith.divf %261, %262 : vector<2x128xf32>
    %264 = vector.extract_strided_slice %252 {offsets = [0, 128], sizes = [2, 128], strides = [1, 1]} : vector<2x384xf32> to vector<2x128xf32>
    %265 = vector.extract_strided_slice %255 {offsets = [0, 128], sizes = [2, 128], strides = [1, 1]} : vector<2x384xf32> to vector<2x128xf32>
    %266 = arith.addf %264, %265 : vector<2x128xf32>
    %267 = arith.negf %266 : vector<2x128xf32>
    %268 = math.exp %267 : vector<2x128xf32>
    %cst_98 = arith.constant 1.000000e+00 : f32
    %269 = vector.broadcast %cst_98 : f32 to vector<2x128xf32>
    %270 = arith.addf %269, %268 : vector<2x128xf32>
    %271 = arith.divf %269, %270 : vector<2x128xf32>
    %272 = vector.extract_strided_slice %252 {offsets = [0, 256], sizes = [2, 128], strides = [1, 1]} : vector<2x384xf32> to vector<2x128xf32>
    %273 = vector.extract_strided_slice %255 {offsets = [0, 256], sizes = [2, 128], strides = [1, 1]} : vector<2x384xf32> to vector<2x128xf32>
    %274 = vector.broadcast %4 : vector<1x128xf32> to vector<2x128xf32>
    %275 = arith.addf %273, %274 : vector<2x128xf32>
    %276 = arith.mulf %263, %275 : vector<2x128xf32>
    %277 = arith.addf %272, %276 : vector<2x128xf32>
    %278 = math.tanh %277 : vector<2x128xf32>
    %279 = arith.subf %241, %278 : vector<2x128xf32>
    %280 = arith.mulf %271, %279 : vector<2x128xf32>
    %281 = arith.addf %278, %280 : vector<2x128xf32>
    %c0_99 = arith.constant 0 : index
    %282 = arith.index_cast %249 : i32 to index
    %c0_100 = arith.constant 0 : index
    %c0_101 = arith.constant 0 : index
    %283 = vector.load %arg5[%c0_99, %282, %c0_100, %c0_101] : memref<1x8x2x128xf32, #tpu.memory_space<vmem>>, vector<1x1x2x128xf32>
    %284 = vector.shape_cast %283 : vector<1x1x2x128xf32> to vector<2x128xf32>
    %285 = vector.shape_cast %281 : vector<2x128xf32> to vector<1x1x2x128xf32>
    tpu.vector_store %arg5[%c0_99, %282, %c0_100, %c0_101], %285 {strides = array<i32>} : memref<1x8x2x128xf32, #tpu.memory_space<vmem>>, vector<1x1x2x128xf32>,
    %c7_i32_102 = arith.constant 7 : i32
    %c2_i32_103 = arith.constant 2 : i32
    %286 = arith.muli %c2_i32_103, %c7_i32_102 : i32
    %c7_i32_104 = arith.constant 7 : i32
    %287 = arith.subi %c7_i32_104, %286 : i32
    %288 = arith.muli %arg0, %287 : i32
    %289 = arith.addi %c7_i32_102, %288 : i32
    %c0_105 = arith.constant 0 : index
    %290 = arith.index_cast %289 : i32 to index
    %c0_106 = arith.constant 0 : index
    %c0_107 = arith.constant 0 : index
    %291 = vector.load %arg2[%c0_105, %290, %c0_106, %c0_107] : memref<1x8x2x384xf32, #tpu.memory_space<vmem>>, vector<1x1x2x384xf32>
    %292 = vector.shape_cast %291 : vector<1x1x2x384xf32> to vector<2x384xf32>
    %c0_108 = arith.constant 0 : index
    %c0_109 = arith.constant 0 : index
    %c0_110 = arith.constant 0 : index
    %293 = vector.load %arg3[%c0_108, %c0_109, %c0_110] : memref<1x128x384xf32, #tpu.memory_space<vmem>>, vector<1x128x384xf32>
    %294 = vector.shape_cast %293 : vector<1x128x384xf32> to vector<128x384xf32>
    %cst_111 = arith.constant dense<0.000000e+00> : vector<2x384xf32>
    %295 = tpu.matmul %281, %294, %cst_111 {dimension_numbers = #tpu.dot_dimension_numbers<[1], [0], [0], [1], [0, 0, 1, 1], [], []>} : vector<2x128xf32>, vector<128x384xf32>, vector<2x384xf32> -> vector<2x384xf32>
    %296 = vector.extract_strided_slice %292 {offsets = [0, 0], sizes = [2, 128], strides = [1, 1]} : vector<2x384xf32> to vector<2x128xf32>
    %297 = vector.extract_strided_slice %295 {offsets = [0, 0], sizes = [2, 128], strides = [1, 1]} : vector<2x384xf32> to vector<2x128xf32>
    %298 = arith.addf %296, %297 : vector<2x128xf32>
    %299 = arith.negf %298 : vector<2x128xf32>
    %300 = math.exp %299 : vector<2x128xf32>
    %cst_112 = arith.constant 1.000000e+00 : f32
    %301 = vector.broadcast %cst_112 : f32 to vector<2x128xf32>
    %302 = arith.addf %301, %300 : vector<2x128xf32>
    %303 = arith.divf %301, %302 : vector<2x128xf32>
    %304 = vector.extract_strided_slice %292 {offsets = [0, 128], sizes = [2, 128], strides = [1, 1]} : vector<2x384xf32> to vector<2x128xf32>
    %305 = vector.extract_strided_slice %295 {offsets = [0, 128], sizes = [2, 128], strides = [1, 1]} : vector<2x384xf32> to vector<2x128xf32>
    %306 = arith.addf %304, %305 : vector<2x128xf32>
    %307 = arith.negf %306 : vector<2x128xf32>
    %308 = math.exp %307 : vector<2x128xf32>
    %cst_113 = arith.constant 1.000000e+00 : f32
    %309 = vector.broadcast %cst_113 : f32 to vector<2x128xf32>
    %310 = arith.addf %309, %308 : vector<2x128xf32>
    %311 = arith.divf %309, %310 : vector<2x128xf32>
    %312 = vector.extract_strided_slice %292 {offsets = [0, 256], sizes = [2, 128], strides = [1, 1]} : vector<2x384xf32> to vector<2x128xf32>
    %313 = vector.extract_strided_slice %295 {offsets = [0, 256], sizes = [2, 128], strides = [1, 1]} : vector<2x384xf32> to vector<2x128xf32>
    %314 = vector.broadcast %4 : vector<1x128xf32> to vector<2x128xf32>
    %315 = arith.addf %313, %314 : vector<2x128xf32>
    %316 = arith.mulf %303, %315 : vector<2x128xf32>
    %317 = arith.addf %312, %316 : vector<2x128xf32>
    %318 = math.tanh %317 : vector<2x128xf32>
    %319 = arith.subf %281, %318 : vector<2x128xf32>
    %320 = arith.mulf %311, %319 : vector<2x128xf32>
    %321 = arith.addf %318, %320 : vector<2x128xf32>
    %c0_114 = arith.constant 0 : index
    %322 = arith.index_cast %289 : i32 to index
    %c0_115 = arith.constant 0 : index
    %c0_116 = arith.constant 0 : index
    %323 = vector.load %arg5[%c0_114, %322, %c0_115, %c0_116] : memref<1x8x2x128xf32, #tpu.memory_space<vmem>>, vector<1x1x2x128xf32>
    %324 = vector.shape_cast %323 : vector<1x1x2x128xf32> to vector<2x128xf32>
    %325 = vector.shape_cast %321 : vector<2x128xf32> to vector<1x1x2x128xf32>
    tpu.vector_store %arg5[%c0_114, %322, %c0_115, %c0_116], %325 {strides = array<i32>} : memref<1x8x2x128xf32, #tpu.memory_space<vmem>>, vector<1x1x2x128xf32>,
    %c8_i32 = arith.constant 8 : i32
    %c0_117 = arith.constant 0 : index
    %c0_118 = arith.constant 0 : index
    %326 = vector.load %arg7[%c0_117, %c0_118] : memref<2x128xf32, #tpu.memory_space<vmem>>, vector<2x128xf32>
    tpu.vector_store %arg7[%c0_117, %c0_118], %321 {strides = array<i32>} : memref<2x128xf32, #tpu.memory_space<vmem>>, vector<2x128xf32>,
    %c0_i32_119 = arith.constant 0 : i32
    %327 = arith.cmpi eq, %arg1, %c0_i32_119 : i32
    %328 = arith.extui %327 : i1 to i32
    %c0_i32_120 = arith.constant 0 : i32
    %329 = arith.cmpi ne, %328, %c0_i32_120 : i32
    scf.if %329 {
      %c0_121 = arith.constant 0 : index
      %c0_122 = arith.constant 0 : index
      %c0_123 = arith.constant 0 : index
      %330 = vector.load %arg6[%c0_121, %c0_122, %c0_123] : memref<1x2x128xf32, #tpu.memory_space<vmem>>, vector<1x2x128xf32>
      %331 = vector.shape_cast %330 : vector<1x2x128xf32> to vector<2x128xf32>
      %332 = vector.shape_cast %321 : vector<2x128xf32> to vector<1x2x128xf32>
      tpu.vector_store %arg6[%c0_121, %c0_122, %c0_123], %332 {strides = array<i32>} : memref<1x2x128xf32, #tpu.memory_space<vmem>>, vector<1x2x128xf32>,
    } else {
    }
    return
  }
  func.func @transform_0(%arg0: i32, %arg1: i32) -> (i32, i32, i32, i32) {
    %c2_i32 = arith.constant 2 : i32
    %0 = arith.muli %c2_i32, %arg1 : i32
    %c0_i32 = arith.constant 0 : i32
    %1 = arith.subi %c0_i32, %0 : i32
    %2 = arith.muli %arg0, %1 : i32
    %3 = arith.addi %arg1, %2 : i32
    %c0_i32_0 = arith.constant 0 : i32
    %c0_i32_1 = arith.constant 0 : i32
    %c0_i32_2 = arith.constant 0 : i32
    return %arg0, %3, %c0_i32_0, %c0_i32_1 : i32, i32, i32, i32
  }
  func.func @transform_1(%arg0: i32, %arg1: i32) -> (i32, i32, i32) {
    %c0_i32 = arith.constant 0 : i32
    %c0_i32_0 = arith.constant 0 : i32
    %c0_i32_1 = arith.constant 0 : i32
    return %arg0, %c0_i32, %c0_i32_0 : i32, i32, i32
  }
  func.func @transform_2(%arg0: i32, %arg1: i32) -> (i32, i32, i32) {
    %c0_i32 = arith.constant 0 : i32
    %c0_i32_0 = arith.constant 0 : i32
    %c0_i32_1 = arith.constant 0 : i32
    return %arg0, %c0_i32, %c0_i32_0 : i32, i32, i32
  }
  func.func @transform_3(%arg0: i32, %arg1: i32) -> (i32, i32, i32, i32) {
    %c2_i32 = arith.constant 2 : i32
    %0 = arith.muli %c2_i32, %arg1 : i32
    %c0_i32 = arith.constant 0 : i32
    %1 = arith.subi %c0_i32, %0 : i32
    %2 = arith.muli %arg0, %1 : i32
    %3 = arith.addi %arg1, %2 : i32
    %c0_i32_0 = arith.constant 0 : i32
    %c0_i32_1 = arith.constant 0 : i32
    %c0_i32_2 = arith.constant 0 : i32
    return %arg0, %3, %c0_i32_0, %c0_i32_1 : i32, i32, i32, i32
  }
  func.func @transform_4(%arg0: i32, %arg1: i32) -> (i32, i32, i32) {
    %c0_i32 = arith.constant 0 : i32
    %c0_i32_0 = arith.constant 0 : i32
    %c0_i32_1 = arith.constant 0 : i32
    return %arg0, %c0_i32, %c0_i32_0 : i32, i32, i32
  }
}

</mosaic_0001>

<llo_original>
// kernel: _forward_impl.6
$region0: #{_forward_impl.6}
  #allocation0 [shape = 'u32[]', space=smem, size = 0x4, offset = 0x4, fixed_abs, tag = 'smem constant byte address 0x4 - core index']
  #allocation1 [shape = 'u32[72,128]{1,0:T(1,128)}', space=vmem, size = 0x9000, scoped, tag = 'internal scratch']
  %s0 = inlined_call_operand.vmem [shape: f32[2,16,128], index: 0, kind: input, shape index: {}]
  %s1 = inlined_call_operand.hbm [shape: f32[2,2,128,384], index: 1, kind: input, shape index: {}]
  %s2 = inlined_call_operand.vmem [shape: f32[2,1,384], index: 2, kind: input, shape index: {}]
  %s3 = inlined_call_operand.vmem [shape: f32[2,16,384], index: 3, kind: output, shape index: {}]
  %s4 = sld [smem:[#allocation0]]
  $region57: #{_forward_impl.6} parent=0
    _
  %s6 = ssub.s32 1, %s4
  %s7 = scalar_select 0, %s6, %s4
  $region1: #{_forward_impl.6} parent=0
    #allocation2 [shape = 'u8[393216]{0}', space=vmem, size = 0x60000, scoped, tag = 'input window, operand 1']
    #allocation3 [shape = 's32[2]{0}', space=sflag, size = 0x8, scoped, tag = 'scoped memory for _forward_impl.6']
    %8 = vsyncpa [#allocation3], 0
    %s9 = scalar_lea.sflag [#allocation3], 1
    %10 = vsyncpa %s9, 0
    loop: start=0, step=1, limit=6
    $region2: #{_forward_impl.6} parent=1 // loop_pre_header
      _
    $region3: #{_forward_impl.6} parent=1 // loop_header
      %s12 = sphi 0, %s16
      %p13 = scmp.ge.s32.totalorder %s12, 6
      %s19 = sphi 0, %s38
      %s20 = sphi 0, %s34
      %s21 = sphi 0, %s30
      %s22 = sphi 0, %s19
      %s23 = sphi 0, %s20
      %s24 = sphi 0, %s21
      %s25 = sphi 0, %s22
      %s26 = sphi 0, %s23
      %s27 = sphi 0, %s24
      %s43 = sphi 0, %s45
      %s46 = sphi 0, %s43
      %s47 = sphi 0, %s46
      %s63 = sphi 0, %s47
      %s71 = sphi 0, %s73
      %s74 = sphi 0, %s71
      %s75 = sphi 0, %s74
      %s91 = sphi 0, %s75
      %s97 = sphi 0, %s99
      %s100 = sphi 0, %s97
      %s101 = sphi 0, %s100
      %s117 = sphi 0, %s101
      %s125 = sphi 0, %s127
      %s128 = sphi 0, %s125
      %s129 = sphi 0, %s128
      %s145 = sphi 0, %s129
    $region4: #{_forward_impl.6} parent=1 // loop_header_branch
      %15 = sbr.rel (%p13) target = $region8
    $region5: #{_forward_impl.6} parent=1 // loop_body
      %s17 = ssub.s32 %s12, 1
      %s18 = ssub.s32 %s12, 2
      %s28 = sadd.s32 1, %s21
      %p29 = scmp.ge.s32.totalorder %s28, 2
      %s30 = scalar_select %p29, 0, %s28
      %s31 = sadd.s32 1, %s20
      %s32 = scalar_select %p29, %s31, %s20
      %p33 = scmp.ge.s32.totalorder %s32, 1
      %s34 = scalar_select %p33, 0, %s32
      %s35 = sadd.s32 1, %s19
      %s36 = scalar_select %p33, %s35, %s19
      %p37 = scmp.ge.s32.totalorder %s36, 2
      %s38 = scalar_select %p37, 0, %s36
      %s39 = ssub.s32 %s21, %s30
      %s40 = ssub.s32 %s20, %s34
      %s41 = sor.u32 %s39, %s40
      %p42 = scmp.eq.s32.totalorder %s41, 0
      %s44 = sadd.s32 %s43, 1
      %s45 = scalar_select %p42, %s43, %s44
      %p48 = pneg %p42
      %p49 = scmp.eq.s32.totalorder %s12, 3
      %p50 = por %p48, %p49
      %p51 = scmp.ne.s32.totalorder %s43, %s46
      %p52 = scmp.eq.s32.totalorder %s12, 0
      %p53 = por %p51, %p52
      %p54 = scmp.ne.s32.totalorder %s43, %s46
      %p55 = scmp.eq.s32.totalorder %s17, 3
      %p56 = por %p54, %p55
      %p57 = scmp.ne.s32.totalorder %s46, %s47
      %p58 = scmp.eq.s32.totalorder %s17, 0
      %p59 = por %p57, %p58
      %p60 = scmp.ne.s32.totalorder %s46, %s47
      %p61 = scmp.eq.s32.totalorder %s18, 3
      %p62 = por %p60, %p61
      %p64 = scmp.ne.s32.totalorder %s47, %s63
      %p65 = scmp.eq.s32.totalorder %s18, 0
      %p66 = por %p64, %p65
      %s67 = ssub.s32 %s19, %s38
      %s68 = ssub.s32 %s21, %s30
      %s69 = sor.u32 %s67, %s68
      %p70 = scmp.eq.s32.totalorder %s69, 0
      %s72 = sadd.s32 %s71, 1
      %s73 = scalar_select %p70, %s71, %s72
      %p76 = pneg %p70
      %p77 = scmp.eq.s32.totalorder %s12, 3
      %p78 = por %p76, %p77
      %p79 = scmp.ne.s32.totalorder %s71, %s74
      %p80 = scmp.eq.s32.totalorder %s12, 0
      %p81 = por %p79, %p80
      %p82 = scmp.ne.s32.totalorder %s71, %s74
      %p83 = scmp.eq.s32.totalorder %s17, 3
      %p84 = por %p82, %p83
      %p85 = scmp.ne.s32.totalorder %s74, %s75
      %p86 = scmp.eq.s32.totalorder %s17, 0
      %p87 = por %p85, %p86
      %p88 = scmp.ne.s32.totalorder %s74, %s75
      %p89 = scmp.eq.s32.totalorder %s18, 3
      %p90 = por %p88, %p89
      %p92 = scmp.ne.s32.totalorder %s75, %s91
      %p93 = scmp.eq.s32.totalorder %s18, 0
      %p94 = por %p92, %p93
      %s95 = ssub.s32 %s19, %s38
      %p96 = scmp.eq.s32.totalorder %s95, 0
      %s98 = sadd.s32 %s97, 1
      %s99 = scalar_select %p96, %s97, %s98
      %p102 = pneg %p96
      %p103 = scmp.eq.s32.totalorder %s12, 3
      %p104 = por %p102, %p103
      %p105 = scmp.ne.s32.totalorder %s97, %s100
      %p106 = scmp.eq.s32.totalorder %s12, 0
      %p107 = por %p105, %p106
      %p108 = scmp.ne.s32.totalorder %s97, %s100
      %p109 = scmp.eq.s32.totalorder %s17, 3
      %p110 = por %p108, %p109
      %p111 = scmp.ne.s32.totalorder %s100, %s101
      %p112 = scmp.eq.s32.totalorder %s17, 0
      %p113 = por %p111, %p112
      %p114 = scmp.ne.s32.totalorder %s100, %s101
      %p115 = scmp.eq.s32.totalorder %s18, 3
      %p116 = por %p114, %p115
      %p118 = scmp.ne.s32.totalorder %s101, %s117
      %p119 = scmp.eq.s32.totalorder %s18, 0
      %p120 = por %p118, %p119
      %s121 = ssub.s32 %s19, %s38
      %s122 = ssub.s32 %s20, %s34
      %s123 = sor.u32 %s121, %s122
      %p124 = scmp.eq.s32.totalorder %s123, 0
      %s126 = sadd.s32 %s125, 1
      %s127 = scalar_select %p124, %s125, %s126
      %p130 = pneg %p124
      %p131 = scmp.eq.s32.totalorder %s12, 3
      %p132 = por %p130, %p131
      %p133 = scmp.ne.s32.totalorder %s125, %s128
      %p134 = scmp.eq.s32.totalorder %s12, 0
      %p135 = por %p133, %p134
      %p136 = scmp.ne.s32.totalorder %s125, %s128
      %p137 = scmp.eq.s32.totalorder %s17, 3
      %p138 = por %p136, %p137
      %p139 = scmp.ne.s32.totalorder %s128, %s129
      %p140 = scmp.eq.s32.totalorder %s17, 0
      %p141 = por %p139, %p140
      %p142 = scmp.ne.s32.totalorder %s128, %s129
      %p143 = scmp.eq.s32.totalorder %s18, 3
      %p144 = por %p142, %p143
      %p146 = scmp.ne.s32.totalorder %s129, %s145
      %p147 = scmp.eq.s32.totalorder %s18, 0
      %p148 = por %p146, %p147
      %p149 = scmp.le.s32.totalorder 1, %s12
      %p150 = scmp.lt.s32.totalorder %s12, 5
      %p151 = pnand %p149, %p150
      %p152 = pneg %p151
      // Predicated region
      $region9: #{_forward_impl.6} parent=5 // pred_check
        _
      $region10: #{_forward_impl.6} parent=5 // pred_check_branch
        %154 = sbr.rel (%p151) target = $region12
      $region11: #{_forward_impl.6} parent=5 // pred_region
        %s155 = ssub.s32 %s12, 1
      $region12: #{_forward_impl.6} parent=5 // pred_fallthru
        _
      %p156 = scmp.lt.s32.totalorder %s12, 4
      // Predicated region
      $region13: #{_forward_impl.6} parent=5 // pred_check
        %p157 = pneg %p156
      $region14: #{_forward_impl.6} parent=5 // pred_check_branch
        %159 = sbr.rel (%p157) target = $region16
      $region15: #{_forward_impl.6} parent=5 // pred_region
        // Predicated region
        $region17: #{_forward_impl.6} parent=15 // pred_check
          %p160 = pneg %p53
        $region18: #{_forward_impl.6} parent=15 // pred_check_branch
          %162 = sbr.rel (%p160) target = $region20
        $region19: #{_forward_impl.6} parent=15 // pred_region
          %s163 = smul.u32 2, %s20
          %p164 = scmp.lt.s32.totalorder %s21, 1
          %s165 = scalar_select %p164, %s21, 1
          %p166 = scmp.lt.s32.totalorder %s163, 1
          %s167 = scalar_select %p166, %s163, 1
          %s168 = smul.addr %s165, 2
          %s169 = sadd.s32 %s167, %s168
          %s170 = smul.addr %s169, 8
          %s171 = scalar_lea.vmem %s0, %s170
          %s172 = smul.u32 2, %s20
        $region20: #{_forward_impl.6} parent=15 // pred_fallthru
          _
        // Predicated region
        $region21: #{_forward_impl.6} parent=15 // pred_check
          %p173 = pneg %p81
        $region22: #{_forward_impl.6} parent=15 // pred_check_branch
          %175 = sbr.rel (%p173) target = $region24
        $region23: #{_forward_impl.6} parent=15 // pred_region
          %s176 = sand.u32 %s71, 1
          %s177 = scalar_lea.sflag [#allocation3], %s176
          %s178 = sand.u32 %s71, 1
          %s179 = smul.addr %s178, 384
          %s180 = scalar_lea.vmem [#allocation2], %s179
          %182 = vsyncadd %s177, 0
          %s183 = smul.addr %s21, 48
          %s184 = smul.addr %s19, 96
          %s185 = sadd.s32 %s183, %s184
          %s186 = smul.addr %s185, 8
          %s187 = scalar_lea.hbm %s1, %s186
          %s188 = sshll.u32 %s187, 4
          %s189 = int_to_ptr.hbm [resolvable:$true] %s188
          %s190 = sshll.u32 %s180, 4
          %s191 = int_to_ptr.vmem [resolvable:$true] %s190
          %196 = dma.hbm_to_vmem [thread:$0]  %s189, 6144, %s191, %s177, 384, 384, 24
        $region24: #{_forward_impl.6} parent=15 // pred_fallthru
          _
        // Predicated region
        $region25: #{_forward_impl.6} parent=15 // pred_check
          %p197 = pneg %p107
        $region26: #{_forward_impl.6} parent=15 // pred_check_branch
          %199 = sbr.rel (%p197) target = $region28
        $region27: #{_forward_impl.6} parent=15 // pred_region
          %p200 = scmp.lt.s32.totalorder %s19, 1
          %s201 = scalar_select %p200, %s19, 1
          %s202 = smul.addr %s201, 3
          %s203 = scalar_lea.vmem %s2, %s202
        $region28: #{_forward_impl.6} parent=15 // pred_fallthru
          _
      $region16: #{_forward_impl.6} parent=5 // pred_fallthru
        _
      %p204 = scmp.le.s32.totalorder 1, %s12
      %p205 = scmp.lt.s32.totalorder %s12, 5
      %p206 = pnand %p204, %p205
      %p207 = pneg %p206
      // Predicated region
      $region29: #{_forward_impl.6} parent=5 // pred_check
        _
      $region30: #{_forward_impl.6} parent=5 // pred_check_branch
        %209 = sbr.rel (%p206) target = $region32
      $region31: #{_forward_impl.6} parent=5 // pred_region
        %s210 = ssub.s32 %s12, 1
        %s211 = sand.u32 %s74, 1
        %s212 = scalar_lea.sflag [#allocation3], %s211
        %s213 = sand.u32 %s74, 1
        %s214 = smul.addr %s213, 384
        %s215 = scalar_lea.vmem [#allocation2], %s214
        // Predicated region
        $region33: #{_forward_impl.6} parent=31 // pred_check
          %p216 = pneg %p87
        $region34: #{_forward_impl.6} parent=31 // pred_check_branch
          %218 = sbr.rel (%p216) target = $region36
        $region35: #{_forward_impl.6} parent=31 // pred_region
          %220 = dma.done %s212, 6144
        $region36: #{_forward_impl.6} parent=31 // pred_fallthru
          _
        %s221 = smul.u32 2, %s23
        %p222 = scmp.lt.s32.totalorder %s24, 1
        %s223 = scalar_select %p222, %s24, 1
        %p224 = scmp.lt.s32.totalorder %s221, 1
        %s225 = scalar_select %p224, %s221, 1
        %s226 = smul.addr %s223, 2
        %s227 = sadd.s32 %s225, %s226
        %s228 = smul.addr %s227, 8
        %s229 = scalar_lea.vmem %s0, %s228
        %p230 = pneg %p59
        %p231 = pneg %p56
        %s232 = sand.u32 %s74, 1
        %s233 = scalar_lea.sflag [#allocation3], %s232
        %s234 = sand.u32 %s74, 1
        %s235 = smul.addr %s234, 384
        %s236 = scalar_lea.vmem [#allocation2], %s235
        %p237 = pneg %p87
        %p238 = pneg %p84
        %p239 = scmp.lt.s32.totalorder %s22, 1
        %s240 = scalar_select %p239, %s22, 1
        %s241 = smul.addr %s240, 3
        %s242 = scalar_lea.vmem %s2, %s241
        %p243 = pneg %p113
        %p244 = pneg %p110
        %p245 = pneg %p141
        %p246 = pneg %p138
        %s247 = smul.u32 2, %s23
        %p248 = scmp.lt.s32.totalorder %s22, 1
        %s249 = scalar_select %p248, %s22, 1
        %p250 = scmp.lt.s32.totalorder %s247, 1
        %s251 = scalar_select %p250, %s247, 1
        %s252 = smul.addr %s251, 3
        %s253 = smul.addr %s249, 6
        %s254 = sadd.s32 %s252, %s253
        %s255 = smul.addr %s254, 8
        %s256 = scalar_lea.vmem %s3, %s255
        %s257 = smul.u32 2, %s23
        %p258 = scmp.lt.s32.totalorder %s24, 1
        %s259 = scalar_select %p258, %s24, 1
        %p260 = scmp.lt.s32.totalorder %s257, 1
        %s261 = scalar_select %p260, %s257, 1
        %s262 = smul.addr %s259, 2
        %s263 = sadd.s32 %s261, %s262
        %s264 = smul.addr %s263, 8
        %s265 = scalar_lea.vmem %s0, %s264
        %s266 = smul.u32 2, %s23
        %p267 = scmp.lt.s32.totalorder %s22, 1
        %s268 = scalar_select %p267, %s22, 1
        %s269 = smul.addr %s268, 3
        %s270 = scalar_lea.vmem %s2, %s269
        %s271 = smul.u32 2, %s23
        %p272 = scmp.lt.s32.totalorder %s22, 1
        %s273 = scalar_select %p272, %s22, 1
        %p274 = scmp.lt.s32.totalorder %s271, 1
        %s275 = scalar_select %p274, %s271, 1
        %s276 = smul.addr %s275, 3
        %s277 = smul.addr %s273, 6
        %s278 = sadd.s32 %s276, %s277
        %s279 = smul.addr %s278, 8
        %s280 = scalar_lea.vmem %s3, %s279
        %s281 = smul.u32 2, %s23
        %v282 = vld [vmem:[%s265] sm:$0xff]
        %v283 = vld [vmem:[%s265 + $0x8] sm:$0xff]
        %v284 = vld [vmem:[%s215] sm:$0xff]
        %v285 = vld [vmem:[%s215 + $0x8] sm:$0xff]
        %v286 = vld [vmem:[%s215 + $0x10] sm:$0xff]
        %v287 = vld [vmem:[%s215 + $0x18] sm:$0xff]
        %v288 = vld [vmem:[%s215 + $0x20] sm:$0xff]
        %v289 = vld [vmem:[%s215 + $0x28] sm:$0xff]
        %v290 = vld [vmem:[%s215 + $0x30] sm:$0xff]
        %v291 = vld [vmem:[%s215 + $0x38] sm:$0xff]
        %v292 = vld [vmem:[%s215 + $0x40] sm:$0xff]
        %v293 = vld [vmem:[%s215 + $0x48] sm:$0xff]
        %v294 = vld [vmem:[%s215 + $0x50] sm:$0xff]
        %v295 = vld [vmem:[%s215 + $0x58] sm:$0xff]
        %v296 = vld [vmem:[%s215 + $0x60] sm:$0xff]
        %v297 = vld [vmem:[%s215 + $0x68] sm:$0xff]
        %v298 = vld [vmem:[%s215 + $0x70] sm:$0xff]
        %v299 = vld [vmem:[%s215 + $0x78] sm:$0xff]
        %v300 = vld [vmem:[%s215 + $0x80] sm:$0xff]
        %v301 = vld [vmem:[%s215 + $0x88] sm:$0xff]
        %v302 = vld [vmem:[%s215 + $0x90] sm:$0xff]
        %v303 = vld [vmem:[%s215 + $0x98] sm:$0xff]
        %v304 = vld [vmem:[%s215 + $0xa0] sm:$0xff]
        %v305 = vld [vmem:[%s215 + $0xa8] sm:$0xff]
        %v306 = vld [vmem:[%s215 + $0xb0] sm:$0xff]
        %v307 = vld [vmem:[%s215 + $0xb8] sm:$0xff]
        %v308 = vld [vmem:[%s215 + $0xc0] sm:$0xff]
        %v309 = vld [vmem:[%s215 + $0xc8] sm:$0xff]
        %v310 = vld [vmem:[%s215 + $0xd0] sm:$0xff]
        %v311 = vld [vmem:[%s215 + $0xd8] sm:$0xff]
        %v312 = vld [vmem:[%s215 + $0xe0] sm:$0xff]
        %v313 = vld [vmem:[%s215 + $0xe8] sm:$0xff]
        %v314 = vld [vmem:[%s215 + $0xf0] sm:$0xff]
        %v315 = vld [vmem:[%s215 + $0xf8] sm:$0xff]
        %v316 = vld [vmem:[%s215 + $0x100] sm:$0xff]
        %v317 = vld [vmem:[%s215 + $0x108] sm:$0xff]
        %v318 = vld [vmem:[%s215 + $0x110] sm:$0xff]
        %v319 = vld [vmem:[%s215 + $0x118] sm:$0xff]
        %v320 = vld [vmem:[%s215 + $0x120] sm:$0xff]
        %v321 = vld [vmem:[%s215 + $0x128] sm:$0xff]
        %v322 = vld [vmem:[%s215 + $0x130] sm:$0xff]
        %v323 = vld [vmem:[%s215 + $0x138] sm:$0xff]
        %v324 = vld [vmem:[%s215 + $0x140] sm:$0xff]
        %v325 = vld [vmem:[%s215 + $0x148] sm:$0xff]
        %v326 = vld [vmem:[%s215 + $0x150] sm:$0xff]
        %v327 = vld [vmem:[%s215 + $0x158] sm:$0xff]
        %v328 = vld [vmem:[%s215 + $0x160] sm:$0xff]
        %v329 = vld [vmem:[%s215 + $0x168] sm:$0xff]
        %v330 = vld [vmem:[%s215 + $0x170] sm:$0xff]
        %v331 = vld [vmem:[%s215 + $0x178] sm:$0xff]
        %332 = vmatpush.msra.mxu0 %v329
        %333 = vmatpush.msra.mxu0 %v326
        %334 = vmatpush.msra.mxu0 %v323
        %335 = vmatpush.msra.mxu0 %v320
        %336 = vmatpush.msra.mxu0 %v317
        %337 = vmatpush.msra.mxu0 %v314
        %338 = vmatpush.msra.mxu0 %v311
        %339 = vmatpush.msra.mxu0 %v308
        %340 = vmatpush.msra.mxu0 %v305
        %341 = vmatpush.msra.mxu0 %v302
        %342 = vmatpush.msra.mxu0 %v299
        %343 = vmatpush.msra.mxu0 %v296
        %344 = vmatpush.msra.mxu0 %v293
        %345 = vmatpush.msra.mxu0 %v290
        %346 = vmatpush.msra.mxu0 %v287
        %347 = vmatpush.msra.mxu0 %v284
        %348 = vmatmul.f32.gmra.mxu0 %v282
        %v349 = vpop.f32.mrf.mxu0
        %v350 = vadd.f32 0.0, %v349
        %351 = vmatmul.f32.gmra.mxu0 %v283
        %v352 = vpop.f32.mrf.mxu0
        %v353 = vadd.f32 0.0, %v352
        %354 = vdwg.mxu0
        %355 = vmatpush.msra.mxu0 %v330
        %356 = vmatpush.msra.mxu0 %v327
        %357 = vmatpush.msra.mxu0 %v324
        %358 = vmatpush.msra.mxu0 %v321
        %359 = vmatpush.msra.mxu0 %v318
        %360 = vmatpush.msra.mxu0 %v315
        %361 = vmatpush.msra.mxu0 %v312
        %362 = vmatpush.msra.mxu0 %v309
        %363 = vmatpush.msra.mxu0 %v306
        %364 = vmatpush.msra.mxu0 %v303
        %365 = vmatpush.msra.mxu0 %v300
        %366 = vmatpush.msra.mxu0 %v297
        %367 = vmatpush.msra.mxu0 %v294
        %368 = vmatpush.msra.mxu0 %v291
        %369 = vmatpush.msra.mxu0 %v288
        %370 = vmatpush.msra.mxu0 %v285
        %371 = vmatmul.f32.gmra.mxu0 %v282
        %v372 = vpop.f32.mrf.mxu0
        %v373 = vadd.f32 0.0, %v372
        %374 = vmatmul.f32.gmra.mxu0 %v283
        %v375 = vpop.f32.mrf.mxu0
        %v376 = vadd.f32 0.0, %v375
        %377 = vdwg.mxu0
        %378 = vmatpush.msra.mxu0 %v331
        %379 = vmatpush.msra.mxu0 %v328
        %380 = vmatpush.msra.mxu0 %v325
        %381 = vmatpush.msra.mxu0 %v322
        %382 = vmatpush.msra.mxu0 %v319
        %383 = vmatpush.msra.mxu0 %v316
        %384 = vmatpush.msra.mxu0 %v313
        %385 = vmatpush.msra.mxu0 %v310
        %386 = vmatpush.msra.mxu0 %v307
        %387 = vmatpush.msra.mxu0 %v304
        %388 = vmatpush.msra.mxu0 %v301
        %389 = vmatpush.msra.mxu0 %v298
        %390 = vmatpush.msra.mxu0 %v295
        %391 = vmatpush.msra.mxu0 %v292
        %392 = vmatpush.msra.mxu0 %v289
        %393 = vmatpush.msra.mxu0 %v286
        %394 = vmatmul.f32.gmra.mxu0 %v282
        %v395 = vpop.f32.mrf.mxu0
        %v396 = vadd.f32 0.0, %v395
        %397 = vmatmul.f32.gmra.mxu0 %v283
        %v398 = vpop.f32.mrf.mxu0
        %v399 = vadd.f32 0.0, %v398
        %400 = vdwg.mxu0
        %p401 = scmp.eq.s32.totalorder %s24, 0
        // Predicated region
        $region37: #{_forward_impl.6} parent=31 // pred_check
          %p402 = pneg %p401
        $region38: #{_forward_impl.6} parent=31 // pred_check_branch
          %404 = sbr.rel (%p402) target = $region40
        $region39: #{_forward_impl.6} parent=31 // pred_region
          %v405 = vld [vmem:[%s270] sm:$0x7]
          %v407 = vperm.slane %v405, 0
          %v408 = vperm.slane %v405, 1
          %v409 = vperm.slane %v405, 2
          %v413 = vadd.f32 %v350, %v407
          %v414 = vadd.f32 %v373, %v408
          %v415 = vadd.f32 %v396, %v409
          %v416 = vadd.f32 %v353, %v407
          %v417 = vadd.f32 %v376, %v408
          %v418 = vadd.f32 %v399, %v409
          %419 = vst [vmem:[%s280] sm:$0xff] %v413
          %420 = vst [vmem:[%s280 + $0x8] sm:$0xff] %v414
          %421 = vst [vmem:[%s280 + $0x10] sm:$0xff] %v415
          %422 = vst [vmem:[%s280 + $0x18] sm:$0xff] %v416
          %423 = vst [vmem:[%s280 + $0x20] sm:$0xff] %v417
          %424 = vst [vmem:[%s280 + $0x28] sm:$0xff] %v418
        $region40: #{_forward_impl.6} parent=31 // pred_fallthru
          _
        %p425 = scmp.gt.s32.totalorder %s24, 0
        // Predicated region
        $region41: #{_forward_impl.6} parent=31 // pred_check
          %p426 = pneg %p425
        $region42: #{_forward_impl.6} parent=31 // pred_check_branch
          %428 = sbr.rel (%p426) target = $region44
        $region43: #{_forward_impl.6} parent=31 // pred_region
          %v429 = vld [vmem:[%s280] sm:$0xff]
          %v430 = vld [vmem:[%s280 + $0x8] sm:$0xff]
          %v431 = vld [vmem:[%s280 + $0x10] sm:$0xff]
          %v432 = vld [vmem:[%s280 + $0x18] sm:$0xff]
          %v433 = vld [vmem:[%s280 + $0x20] sm:$0xff]
          %v434 = vld [vmem:[%s280 + $0x28] sm:$0xff]
          %v435 = vadd.f32 %v429, %v350
          %v436 = vadd.f32 %v430, %v373
          %v437 = vadd.f32 %v431, %v396
          %v438 = vadd.f32 %v432, %v353
          %v439 = vadd.f32 %v433, %v376
          %v440 = vadd.f32 %v434, %v399
          %441 = vst [vmem:[%s280] sm:$0xff] %v435
          %442 = vst [vmem:[%s280 + $0x8] sm:$0xff] %v436
          %443 = vst [vmem:[%s280 + $0x10] sm:$0xff] %v437
          %444 = vst [vmem:[%s280 + $0x18] sm:$0xff] %v438
          %445 = vst [vmem:[%s280 + $0x20] sm:$0xff] %v439
          %446 = vst [vmem:[%s280 + $0x28] sm:$0xff] %v440
        $region44: #{_forward_impl.6} parent=31 // pred_fallthru
          _
        %s447 = smul.u32 2, %s23
        %p448 = scmp.lt.s32.totalorder %s22, 1
        %s449 = scalar_select %p448, %s22, 1
        %p450 = scmp.lt.s32.totalorder %s447, 1
        %s451 = scalar_select %p450, %s447, 1
        %s452 = smul.addr %s451, 3
        %s453 = smul.addr %s449, 6
        %s454 = sadd.s32 %s452, %s453
        %s455 = smul.addr %s454, 8
        %s456 = scalar_lea.vmem %s3, %s455
        // Predicated region
        $region45: #{_forward_impl.6} parent=31 // pred_check
          %p457 = pneg %p138
        $region46: #{_forward_impl.6} parent=31 // pred_check_branch
          %459 = sbr.rel (%p457) target = $region48
        $region47: #{_forward_impl.6} parent=31 // pred_region
          %s460 = smul.u32 2, %s23
        $region48: #{_forward_impl.6} parent=31 // pred_fallthru
          _
      $region32: #{_forward_impl.6} parent=5 // pred_fallthru
        _
      %p461 = scmp.le.s32.totalorder 2, %s12
      // Predicated region
      $region49: #{_forward_impl.6} parent=5 // pred_check
        %p462 = pneg %p461
      $region50: #{_forward_impl.6} parent=5 // pred_check_branch
        %464 = sbr.rel (%p462) target = $region52
      $region51: #{_forward_impl.6} parent=5 // pred_region
        %s465 = ssub.s32 %s12, 2
        // Predicated region
        $region53: #{_forward_impl.6} parent=51 // pred_check
          %p466 = pneg %p144
        $region54: #{_forward_impl.6} parent=51 // pred_check_branch
          %468 = sbr.rel (%p466) target = $region56
        $region55: #{_forward_impl.6} parent=51 // pred_region
          %s469 = smul.u32 2, %s26
          %p470 = scmp.lt.s32.totalorder %s25, 1
          %s471 = scalar_select %p470, %s25, 1
          %p472 = scmp.lt.s32.totalorder %s469, 1
          %s473 = scalar_select %p472, %s469, 1
          %s474 = smul.addr %s473, 3
          %s475 = smul.addr %s471, 6
          %s476 = sadd.s32 %s474, %s475
          %s477 = smul.addr %s476, 8
          %s478 = scalar_lea.vmem %s3, %s477
        $region56: #{_forward_impl.6} parent=51 // pred_fallthru
          _
      $region52: #{_forward_impl.6} parent=5 // pred_fallthru
        _
    $region6: #{_forward_impl.6} parent=1 // loop_footer
      %s16 = sadd.s32 1, %s12
    $region7: #{_forward_impl.6} parent=1 // loop_footer_branch
      %11 = sbr.rel target = $region3
    $region8: #{_forward_impl.6} parent=1 // loop_exit
      _
    %479 = vsyncpa [#allocation3], 1
    %s480 = scalar_lea.sflag [#allocation3], 1
    %481 = vsyncpa %s480, 1

// kernel: _forward_impl.4
$region0: #{_forward_impl.4}
  #allocation0 [shape = 'u32[]', space=smem, size = 0x4, offset = 0x4, fixed_abs, tag = 'smem constant byte address 0x4 - core index']
  #allocation1 [shape = 'u32[72,128]{1,0:T(1,128)}', space=vmem, size = 0x9000, scoped, tag = 'internal scratch']
  %s0 = inlined_call_operand.vmem [shape: f32[1,16,32], index: 0, kind: input, shape index: {}]
  %s1 = inlined_call_operand.vmem [shape: f32[2,1,32,384], index: 1, kind: input, shape index: {}]
  %s2 = inlined_call_operand.vmem [shape: f32[2,1,384], index: 2, kind: input, shape index: {}]
  %s3 = inlined_call_operand.vmem [shape: f32[2,16,384], index: 3, kind: output, shape index: {}]
  %s4 = sld [smem:[#allocation0]]
  $region53: #{_forward_impl.4} parent=0
    _
  %s6 = ssub.s32 1, %s4
  %s7 = scalar_select 0, %s6, %s4
  loop: start=0, step=1, limit=4
  $region2: #{_forward_impl.4} parent=0 // loop_pre_header
    _
  $region3: #{_forward_impl.4} parent=0 // loop_header
    %s9 = sphi 0, %s13
    %p10 = scmp.ge.s32.totalorder %s9, 4
    %s16 = sphi 0, %s35
    %s17 = sphi 0, %s31
    %s18 = sphi 0, %s27
    %s19 = sphi 0, %s16
    %s20 = sphi 0, %s17
    %s21 = sphi 0, %s18
    %s22 = sphi 0, %s19
    %s23 = sphi 0, %s20
    %s24 = sphi 0, %s21
    %s40 = sphi 0, %s42
    %s43 = sphi 0, %s40
    %s44 = sphi 0, %s43
    %s60 = sphi 0, %s44
    %s68 = sphi 0, %s70
    %s71 = sphi 0, %s68
    %s72 = sphi 0, %s71
    %s88 = sphi 0, %s72
    %s94 = sphi 0, %s96
    %s97 = sphi 0, %s94
    %s98 = sphi 0, %s97
    %s114 = sphi 0, %s98
    %s122 = sphi 0, %s124
    %s125 = sphi 0, %s122
    %s126 = sphi 0, %s125
    %s142 = sphi 0, %s126
  $region4: #{_forward_impl.4} parent=0 // loop_header_branch
    %12 = sbr.rel (%p10) target = $region8
  $region5: #{_forward_impl.4} parent=0 // loop_body
    %s14 = ssub.s32 %s9, 1
    %s15 = ssub.s32 %s9, 2
    %s25 = sadd.s32 1, %s18
    %p26 = scmp.ge.s32.totalorder %s25, 1
    %s27 = scalar_select %p26, 0, %s25
    %s28 = sadd.s32 1, %s17
    %s29 = scalar_select %p26, %s28, %s17
    %p30 = scmp.ge.s32.totalorder %s29, 1
    %s31 = scalar_select %p30, 0, %s29
    %s32 = sadd.s32 1, %s16
    %s33 = scalar_select %p30, %s32, %s16
    %p34 = scmp.ge.s32.totalorder %s33, 2
    %s35 = scalar_select %p34, 0, %s33
    %s36 = ssub.s32 %s18, %s27
    %s37 = ssub.s32 %s17, %s31
    %s38 = sor.u32 %s36, %s37
    %p39 = scmp.eq.s32.totalorder %s38, 0
    %s41 = sadd.s32 %s40, 1
    %s42 = scalar_select %p39, %s40, %s41
    %p45 = pneg %p39
    %p46 = scmp.eq.s32.totalorder %s9, 1
    %p47 = por %p45, %p46
    %p48 = scmp.ne.s32.totalorder %s40, %s43
    %p49 = scmp.eq.s32.totalorder %s9, 0
    %p50 = por %p48, %p49
    %p51 = scmp.ne.s32.totalorder %s40, %s43
    %p52 = scmp.eq.s32.totalorder %s14, 1
    %p53 = por %p51, %p52
    %p54 = scmp.ne.s32.totalorder %s43, %s44
    %p55 = scmp.eq.s32.totalorder %s14, 0
    %p56 = por %p54, %p55
    %p57 = scmp.ne.s32.totalorder %s43, %s44
    %p58 = scmp.eq.s32.totalorder %s15, 1
    %p59 = por %p57, %p58
    %p61 = scmp.ne.s32.totalorder %s44, %s60
    %p62 = scmp.eq.s32.totalorder %s15, 0
    %p63 = por %p61, %p62
    %s64 = ssub.s32 %s16, %s35
    %s65 = ssub.s32 %s18, %s27
    %s66 = sor.u32 %s64, %s65
    %p67 = scmp.eq.s32.totalorder %s66, 0
    %s69 = sadd.s32 %s68, 1
    %s70 = scalar_select %p67, %s68, %s69
    %p73 = pneg %p67
    %p74 = scmp.eq.s32.totalorder %s9, 1
    %p75 = por %p73, %p74
    %p76 = scmp.ne.s32.totalorder %s68, %s71
    %p77 = scmp.eq.s32.totalorder %s9, 0
    %p78 = por %p76, %p77
    %p79 = scmp.ne.s32.totalorder %s68, %s71
    %p80 = scmp.eq.s32.totalorder %s14, 1
    %p81 = por %p79, %p80
    %p82 = scmp.ne.s32.totalorder %s71, %s72
    %p83 = scmp.eq.s32.totalorder %s14, 0
    %p84 = por %p82, %p83
    %p85 = scmp.ne.s32.totalorder %s71, %s72
    %p86 = scmp.eq.s32.totalorder %s15, 1
    %p87 = por %p85, %p86
    %p89 = scmp.ne.s32.totalorder %s72, %s88
    %p90 = scmp.eq.s32.totalorder %s15, 0
    %p91 = por %p89, %p90
    %s92 = ssub.s32 %s16, %s35
    %p93 = scmp.eq.s32.totalorder %s92, 0
    %s95 = sadd.s32 %s94, 1
    %s96 = scalar_select %p93, %s94, %s95
    %p99 = pneg %p93
    %p100 = scmp.eq.s32.totalorder %s9, 1
    %p101 = por %p99, %p100
    %p102 = scmp.ne.s32.totalorder %s94, %s97
    %p103 = scmp.eq.s32.totalorder %s9, 0
    %p104 = por %p102, %p103
    %p105 = scmp.ne.s32.totalorder %s94, %s97
    %p106 = scmp.eq.s32.totalorder %s14, 1
    %p107 = por %p105, %p106
    %p108 = scmp.ne.s32.totalorder %s97, %s98
    %p109 = scmp.eq.s32.totalorder %s14, 0
    %p110 = por %p108, %p109
    %p111 = scmp.ne.s32.totalorder %s97, %s98
    %p112 = scmp.eq.s32.totalorder %s15, 1
    %p113 = por %p111, %p112
    %p115 = scmp.ne.s32.totalorder %s98, %s114
    %p116 = scmp.eq.s32.totalorder %s15, 0
    %p117 = por %p115, %p116
    %s118 = ssub.s32 %s16, %s35
    %s119 = ssub.s32 %s17, %s31
    %s120 = sor.u32 %s118, %s119
    %p121 = scmp.eq.s32.totalorder %s120, 0
    %s123 = sadd.s32 %s122, 1
    %s124 = scalar_select %p121, %s122, %s123
    %p127 = pneg %p121
    %p128 = scmp.eq.s32.totalorder %s9, 1
    %p129 = por %p127, %p128
    %p130 = scmp.ne.s32.totalorder %s122, %s125
    %p131 = scmp.eq.s32.totalorder %s9, 0
    %p132 = por %p130, %p131
    %p133 = scmp.ne.s32.totalorder %s122, %s125
    %p134 = scmp.eq.s32.totalorder %s14, 1
    %p135 = por %p133, %p134
    %p136 = scmp.ne.s32.totalorder %s125, %s126
    %p137 = scmp.eq.s32.totalorder %s14, 0
    %p138 = por %p136, %p137
    %p139 = scmp.ne.s32.totalorder %s125, %s126
    %p140 = scmp.eq.s32.totalorder %s15, 1
    %p141 = por %p139, %p140
    %p143 = scmp.ne.s32.totalorder %s126, %s142
    %p144 = scmp.eq.s32.totalorder %s15, 0
    %p145 = por %p143, %p144
    %p146 = scmp.le.s32.totalorder 1, %s9
    %p147 = scmp.lt.s32.totalorder %s9, 3
    %p148 = pnand %p146, %p147
    %p149 = pneg %p148
    // Predicated region
    $region9: #{_forward_impl.4} parent=5 // pred_check
      _
    $region10: #{_forward_impl.4} parent=5 // pred_check_branch
      %151 = sbr.rel (%p148) target = $region12
    $region11: #{_forward_impl.4} parent=5 // pred_region
      %s152 = ssub.s32 %s9, 1
      // Predicated region
      $region13: #{_forward_impl.4} parent=11 // pred_check
        %p153 = pneg %p56
      $region14: #{_forward_impl.4} parent=11 // pred_check_branch
        %155 = sbr.rel (%p153) target = $region16
      $region15: #{_forward_impl.4} parent=11 // pred_region
        %s156 = smul.u32 2, %s20
        %p157 = scmp.lt.s32.totalorder %s21, 0
        %s158 = scalar_select %p157, %s21, 0
        %p159 = scmp.lt.s32.totalorder %s156, 1
        %s160 = scalar_select %p159, %s156, 1
        %s161 = smul.addr %s158, 2
        %s162 = sadd.s32 %s160, %s161
        %s163 = smul.addr %s162, 8
        %s164 = scalar_lea.vmem %s0, %s163
        %s165 = smul.u32 2, %s20
      $region16: #{_forward_impl.4} parent=11 // pred_fallthru
        _
    $region12: #{_forward_impl.4} parent=5 // pred_fallthru
      _
    %p166 = scmp.lt.s32.totalorder %s9, 2
    // Predicated region
    $region17: #{_forward_impl.4} parent=5 // pred_check
      %p167 = pneg %p166
    $region18: #{_forward_impl.4} parent=5 // pred_check_branch
      %169 = sbr.rel (%p167) target = $region20
    $region19: #{_forward_impl.4} parent=5 // pred_region
      // Predicated region
      $region21: #{_forward_impl.4} parent=19 // pred_check
        %p170 = pneg %p78
      $region22: #{_forward_impl.4} parent=19 // pred_check_branch
        %172 = sbr.rel (%p170) target = $region24
      $region23: #{_forward_impl.4} parent=19 // pred_region
        %p173 = scmp.lt.s32.totalorder %s16, 1
        %s174 = scalar_select %p173, %s16, 1
        %p175 = scmp.lt.s32.totalorder %s18, 0
        %s176 = scalar_select %p175, %s18, 0
        %s177 = smul.addr %s176, 12
        %s178 = smul.addr %s174, 12
        %s179 = sadd.s32 %s177, %s178
        %s180 = smul.addr %s179, 8
        %s181 = scalar_lea.vmem %s1, %s180
      $region24: #{_forward_impl.4} parent=19 // pred_fallthru
        _
      // Predicated region
      $region25: #{_forward_impl.4} parent=19 // pred_check
        %p182 = pneg %p104
      $region26: #{_forward_impl.4} parent=19 // pred_check_branch
        %184 = sbr.rel (%p182) target = $region28
      $region27: #{_forward_impl.4} parent=19 // pred_region
        %p185 = scmp.lt.s32.totalorder %s16, 1
        %s186 = scalar_select %p185, %s16, 1
        %s187 = smul.addr %s186, 3
        %s188 = scalar_lea.vmem %s2, %s187
      $region28: #{_forward_impl.4} parent=19 // pred_fallthru
        _
    $region20: #{_forward_impl.4} parent=5 // pred_fallthru
      _
    %p189 = scmp.le.s32.totalorder 1, %s9
    %p190 = scmp.lt.s32.totalorder %s9, 3
    %p191 = pnand %p189, %p190
    %p192 = pneg %p191
    // Predicated region
    $region29: #{_forward_impl.4} parent=5 // pred_check
      _
    $region30: #{_forward_impl.4} parent=5 // pred_check_branch
      %194 = sbr.rel (%p191) target = $region32
    $region31: #{_forward_impl.4} parent=5 // pred_region
      %s195 = ssub.s32 %s9, 1
      %s196 = smul.u32 2, %s20
      %p197 = scmp.lt.s32.totalorder %s21, 0
      %s198 = scalar_select %p197, %s21, 0
      %p199 = scmp.lt.s32.totalorder %s196, 1
      %s200 = scalar_select %p199, %s196, 1
      %s201 = smul.addr %s198, 2
      %s202 = sadd.s32 %s200, %s201
      %s203 = smul.addr %s202, 8
      %s204 = scalar_lea.vmem %s0, %s203
      %p205 = pneg %p56
      %p206 = pneg %p53
      %p207 = scmp.lt.s32.totalorder %s19, 1
      %s208 = scalar_select %p207, %s19, 1
      %p209 = scmp.lt.s32.totalorder %s21, 0
      %s210 = scalar_select %p209, %s21, 0
      %s211 = smul.addr %s210, 12
      %s212 = smul.addr %s208, 12
      %s213 = sadd.s32 %s211, %s212
      %s214 = smul.addr %s213, 8
      %s215 = scalar_lea.vmem %s1, %s214
      %p216 = pneg %p84
      %p217 = pneg %p81
      %p218 = scmp.lt.s32.totalorder %s19, 1
      %s219 = scalar_select %p218, %s19, 1
      %s220 = smul.addr %s219, 3
      %s221 = scalar_lea.vmem %s2, %s220
      %p222 = pneg %p110
      %p223 = pneg %p107
      %p224 = pneg %p138
      %p225 = pneg %p135
      %s226 = smul.u32 2, %s20
      %p227 = scmp.lt.s32.totalorder %s19, 1
      %s228 = scalar_select %p227, %s19, 1
      %p229 = scmp.lt.s32.totalorder %s226, 1
      %s230 = scalar_select %p229, %s226, 1
      %s231 = smul.addr %s230, 3
      %s232 = smul.addr %s228, 6
      %s233 = sadd.s32 %s231, %s232
      %s234 = smul.addr %s233, 8
      %s235 = scalar_lea.vmem %s3, %s234
      %s236 = smul.u32 2, %s20
      %p237 = scmp.lt.s32.totalorder %s21, 0
      %s238 = scalar_select %p237, %s21, 0
      %p239 = scmp.lt.s32.totalorder %s236, 1
      %s240 = scalar_select %p239, %s236, 1
      %s241 = smul.addr %s238, 2
      %s242 = sadd.s32 %s240, %s241
      %s243 = smul.addr %s242, 8
      %s244 = scalar_lea.vmem %s0, %s243
      %s245 = smul.u32 2, %s20
      %p246 = scmp.lt.s32.totalorder %s19, 1
      %s247 = scalar_select %p246, %s19, 1
      %p248 = scmp.lt.s32.totalorder %s21, 0
      %s249 = scalar_select %p248, %s21, 0
      %s250 = smul.addr %s249, 12
      %s251 = smul.addr %s247, 12
      %s252 = sadd.s32 %s250, %s251
      %s253 = smul.addr %s252, 8
      %s254 = scalar_lea.vmem %s1, %s253
      %p255 = scmp.lt.s32.totalorder %s19, 1
      %s256 = scalar_select %p255, %s19, 1
      %s257 = smul.addr %s256, 3
      %s258 = scalar_lea.vmem %s2, %s257
      %s259 = smul.u32 2, %s20
      %p260 = scmp.lt.s32.totalorder %s19, 1
      %s261 = scalar_select %p260, %s19, 1
      %p262 = scmp.lt.s32.totalorder %s259, 1
      %s263 = scalar_select %p262, %s259, 1
      %s264 = smul.addr %s263, 3
      %s265 = smul.addr %s261, 6
      %s266 = sadd.s32 %s264, %s265
      %s267 = smul.addr %s266, 8
      %s268 = scalar_lea.vmem %s3, %s267
      %s269 = smul.u32 2, %s20
      %v270 = vld [vmem:[%s244] sm:$0xff]
      %v271 = vld [vmem:[%s244 + $0x8] sm:$0xff]
      %v272 = vld [vmem:[%s254] sm:$0xff]
      %v273 = vld [vmem:[%s254 + $0x8] sm:$0xff]
      %v274 = vld [vmem:[%s254 + $0x10] sm:$0xff]
      %v275 = vld [vmem:[%s254 + $0x18] sm:$0xff]
      %v276 = vld [vmem:[%s254 + $0x20] sm:$0xff]
      %v277 = vld [vmem:[%s254 + $0x28] sm:$0xff]
      %v278 = vld [vmem:[%s254 + $0x30] sm:$0xff]
      %v279 = vld [vmem:[%s254 + $0x38] sm:$0xff]
      %v280 = vld [vmem:[%s254 + $0x40] sm:$0xff]
      %v281 = vld [vmem:[%s254 + $0x48] sm:$0xff]
      %v282 = vld [vmem:[%s254 + $0x50] sm:$0xff]
      %v283 = vld [vmem:[%s254 + $0x58] sm:$0xff]
      %vm284 = vcmask 261120
      %v286 = vsel %vm284, %v270, 0
      %v289 = vsel %vm284, %v271, 0
      %291 = vmatpush.msra.mxu0 0.0
      %292 = vmatpush.msra.mxu0 0.0
      %293 = vmatpush.msra.mxu0 0.0
      %294 = vmatpush.msra.mxu0 0.0
      %295 = vmatpush.msra.mxu0 0.0
      %296 = vmatpush.msra.mxu0 0.0
      %297 = vmatpush.msra.mxu0 0.0
      %298 = vmatpush.msra.mxu0 0.0
      %299 = vmatpush.msra.mxu0 0.0
      %300 = vmatpush.msra.mxu0 0.0
      %301 = vmatpush.msra.mxu0 0.0
      %302 = vmatpush.msra.mxu0 0.0
      %303 = vmatpush.msra.mxu0 %v281
      %304 = vmatpush.msra.mxu0 %v278
      %305 = vmatpush.msra.mxu0 %v275
      %306 = vmatpush.msra.mxu0 %v272
      %307 = vmatmul.f32.gmra.mxu0 %v286
      %v308 = vpop.f32.mrf.mxu0
      %v309 = vadd.f32 0.0, %v308
      %310 = vmatmul.f32.gmra.mxu0 %v289
      %v311 = vpop.f32.mrf.mxu0
      %v312 = vadd.f32 0.0, %v311
      %313 = vdwg.mxu0
      %314 = vmatpush.msra.mxu0 0.0
      %315 = vmatpush.msra.mxu0 0.0
      %316 = vmatpush.msra.mxu0 0.0
      %317 = vmatpush.msra.mxu0 0.0
      %318 = vmatpush.msra.mxu0 0.0
      %319 = vmatpush.msra.mxu0 0.0
      %320 = vmatpush.msra.mxu0 0.0
      %321 = vmatpush.msra.mxu0 0.0
      %322 = vmatpush.msra.mxu0 0.0
      %323 = vmatpush.msra.mxu0 0.0
      %324 = vmatpush.msra.mxu0 0.0
      %325 = vmatpush.msra.mxu0 0.0
      %326 = vmatpush.msra.mxu0 %v282
      %327 = vmatpush.msra.mxu0 %v279
      %328 = vmatpush.msra.mxu0 %v276
      %329 = vmatpush.msra.mxu0 %v273
      %330 = vmatmul.f32.gmra.mxu0 %v286
      %v331 = vpop.f32.mrf.mxu0
      %v332 = vadd.f32 0.0, %v331
      %333 = vmatmul.f32.gmra.mxu0 %v289
      %v334 = vpop.f32.mrf.mxu0
      %v335 = vadd.f32 0.0, %v334
      %336 = vdwg.mxu0
      %337 = vmatpush.msra.mxu0 0.0
      %338 = vmatpush.msra.mxu0 0.0
      %339 = vmatpush.msra.mxu0 0.0
      %340 = vmatpush.msra.mxu0 0.0
      %341 = vmatpush.msra.mxu0 0.0
      %342 = vmatpush.msra.mxu0 0.0
      %343 = vmatpush.msra.mxu0 0.0
      %344 = vmatpush.msra.mxu0 0.0
      %345 = vmatpush.msra.mxu0 0.0
      %346 = vmatpush.msra.mxu0 0.0
      %347 = vmatpush.msra.mxu0 0.0
      %348 = vmatpush.msra.mxu0 0.0
      %349 = vmatpush.msra.mxu0 %v283
      %350 = vmatpush.msra.mxu0 %v280
      %351 = vmatpush.msra.mxu0 %v277
      %352 = vmatpush.msra.mxu0 %v274
      %353 = vmatmul.f32.gmra.mxu0 %v286
      %v354 = vpop.f32.mrf.mxu0
      %v355 = vadd.f32 0.0, %v354
      %356 = vmatmul.f32.gmra.mxu0 %v289
      %v357 = vpop.f32.mrf.mxu0
      %v358 = vadd.f32 0.0, %v357
      %359 = vdwg.mxu0
      %p360 = scmp.eq.s32.totalorder %s21, 0
      // Predicated region
      $region33: #{_forward_impl.4} parent=31 // pred_check
        %p361 = pneg %p360
      $region34: #{_forward_impl.4} parent=31 // pred_check_branch
        %363 = sbr.rel (%p361) target = $region36
      $region35: #{_forward_impl.4} parent=31 // pred_region
        %v364 = vld [vmem:[%s258] sm:$0x7]
        %v366 = vperm.slane %v364, 0
        %v367 = vperm.slane %v364, 1
        %v368 = vperm.slane %v364, 2
        %v372 = vadd.f32 %v309, %v366
        %v373 = vadd.f32 %v332, %v367
        %v374 = vadd.f32 %v355, %v368
        %v375 = vadd.f32 %v312, %v366
        %v376 = vadd.f32 %v335, %v367
        %v377 = vadd.f32 %v358, %v368
        %378 = vst [vmem:[%s268] sm:$0xff] %v372
        %379 = vst [vmem:[%s268 + $0x8] sm:$0xff] %v373
        %380 = vst [vmem:[%s268 + $0x10] sm:$0xff] %v374
        %381 = vst [vmem:[%s268 + $0x18] sm:$0xff] %v375
        %382 = vst [vmem:[%s268 + $0x20] sm:$0xff] %v376
        %383 = vst [vmem:[%s268 + $0x28] sm:$0xff] %v377
      $region36: #{_forward_impl.4} parent=31 // pred_fallthru
        _
      %p384 = scmp.gt.s32.totalorder %s21, 0
      // Predicated region
      $region37: #{_forward_impl.4} parent=31 // pred_check
        %p385 = pneg %p384
      $region38: #{_forward_impl.4} parent=31 // pred_check_branch
        %387 = sbr.rel (%p385) target = $region40
      $region39: #{_forward_impl.4} parent=31 // pred_region
        %v388 = vld [vmem:[%s268] sm:$0xff]
        %v389 = vld [vmem:[%s268 + $0x8] sm:$0xff]
        %v390 = vld [vmem:[%s268 + $0x10] sm:$0xff]
        %v391 = vld [vmem:[%s268 + $0x18] sm:$0xff]
        %v392 = vld [vmem:[%s268 + $0x20] sm:$0xff]
        %v393 = vld [vmem:[%s268 + $0x28] sm:$0xff]
        %v394 = vadd.f32 %v388, %v309
        %v395 = vadd.f32 %v389, %v332
        %v396 = vadd.f32 %v390, %v355
        %v397 = vadd.f32 %v391, %v312
        %v398 = vadd.f32 %v392, %v335
        %v399 = vadd.f32 %v393, %v358
        %400 = vst [vmem:[%s268] sm:$0xff] %v394
        %401 = vst [vmem:[%s268 + $0x8] sm:$0xff] %v395
        %402 = vst [vmem:[%s268 + $0x10] sm:$0xff] %v396
        %403 = vst [vmem:[%s268 + $0x18] sm:$0xff] %v397
        %404 = vst [vmem:[%s268 + $0x20] sm:$0xff] %v398
        %405 = vst [vmem:[%s268 + $0x28] sm:$0xff] %v399
      $region40: #{_forward_impl.4} parent=31 // pred_fallthru
        _
      %s406 = smul.u32 2, %s20
      %p407 = scmp.lt.s32.totalorder %s19, 1
      %s408 = scalar_select %p407, %s19, 1
      %p409 = scmp.lt.s32.totalorder %s406, 1
      %s410 = scalar_select %p409, %s406, 1
      %s411 = smul.addr %s410, 3
      %s412 = smul.addr %s408, 6
      %s413 = sadd.s32 %s411, %s412
      %s414 = smul.addr %s413, 8
      %s415 = scalar_lea.vmem %s3, %s414
      // Predicated region
      $region41: #{_forward_impl.4} parent=31 // pred_check
        %p416 = pneg %p135
      $region42: #{_forward_impl.4} parent=31 // pred_check_branch
        %418 = sbr.rel (%p416) target = $region44
      $region43: #{_forward_impl.4} parent=31 // pred_region
        %s419 = smul.u32 2, %s20
      $region44: #{_forward_impl.4} parent=31 // pred_fallthru
        _
    $region32: #{_forward_impl.4} parent=5 // pred_fallthru
      _
    %p420 = scmp.le.s32.totalorder 2, %s9
    // Predicated region
    $region45: #{_forward_impl.4} parent=5 // pred_check
      %p421 = pneg %p420
    $region46: #{_forward_impl.4} parent=5 // pred_check_branch
      %423 = sbr.rel (%p421) target = $region48
    $region47: #{_forward_impl.4} parent=5 // pred_region
      %s424 = ssub.s32 %s9, 2
      // Predicated region
      $region49: #{_forward_impl.4} parent=47 // pred_check
        %p425 = pneg %p141
      $region50: #{_forward_impl.4} parent=47 // pred_check_branch
        %427 = sbr.rel (%p425) target = $region52
      $region51: #{_forward_impl.4} parent=47 // pred_region
        %s428 = smul.u32 2, %s23
        %p429 = scmp.lt.s32.totalorder %s22, 1
        %s430 = scalar_select %p429, %s22, 1
        %p431 = scmp.lt.s32.totalorder %s428, 1
        %s432 = scalar_select %p431, %s428, 1
        %s433 = smul.addr %s432, 3
        %s434 = smul.addr %s430, 6
        %s435 = sadd.s32 %s433, %s434
        %s436 = smul.addr %s435, 8
        %s437 = scalar_lea.vmem %s3, %s436
      $region52: #{_forward_impl.4} parent=47 // pred_fallthru
        _
    $region48: #{_forward_impl.4} parent=5 // pred_fallthru
      _
  $region6: #{_forward_impl.4} parent=0 // loop_footer
    %s13 = sadd.s32 1, %s9
  $region7: #{_forward_impl.4} parent=0 // loop_footer_branch
    %8 = sbr.rel target = $region3
  $region8: #{_forward_impl.4} parent=0 // loop_exit
    _

// kernel: _forward_impl.5
$region0: #{_forward_impl.5}
  #allocation0 [shape = 'u32[]', space=smem, size = 0x4, offset = 0x4, fixed_abs, tag = 'smem constant byte address 0x4 - core index']
  #allocation1 [shape = 'u32[72,128]{1,0:T(1,128)}', space=vmem, size = 0x9000, scoped, tag = 'internal scratch']
  #allocation2 [shape = 'f32[2,128]{1,0:T(2,128)}', space=vmem, size = 0x400, scoped, tag = 'scratch operand']
  %s0 = inlined_call_operand.vmem [shape: f32[2,8,2,384], index: 0, kind: input, shape index: {}]
  %s1 = inlined_call_operand.hbm [shape: f32[2,128,384], index: 1, kind: input, shape index: {}]
  %s2 = inlined_call_operand.vmem [shape: f32[2,1,128], index: 2, kind: input, shape index: {}]
  %s3 = inlined_call_operand.vmem [shape: f32[2,8,2,128], index: 3, kind: output, shape index: {0}]
  %s4 = inlined_call_operand.hbm [shape: f32[2,2,128], index: 4, kind: output, shape index: {1}]
  %5 = xla_tuple %s3, %s4
  %s6 = sld [smem:[#allocation0]]
  $region65: #{_forward_impl.5} parent=0
    _
  %s8 = ssub.s32 1, %s6
  %s9 = scalar_select 0, %s8, %s6
  $region1: #{_forward_impl.5} parent=0
    #allocation3 [shape = 'u8[393216]{0}', space=vmem, size = 0x60000, scoped, tag = 'input window, operand 1']
    #allocation4 [shape = 's32[2]{0}', space=sflag, size = 0x8, scoped, tag = 'scoped memory for _forward_impl.5']
    #allocation5 [shape = 's32[2]{0}', space=sflag, size = 0x8, scoped, tag = 'scoped memory for _forward_impl.5']
    #allocation6 [shape = 'u8[2048]{0}', space=vmem, size = 0x800, scoped, tag = 'output window, operand 1']
    %10 = vsyncpa [#allocation4], 0
    %s11 = scalar_lea.sflag [#allocation4], 1
    %12 = vsyncpa %s11, 0
    %13 = vsyncpa [#allocation5], 0
    %s14 = scalar_lea.sflag [#allocation5], 1
    %15 = vsyncpa %s14, 0
    loop: start=0, step=1, limit=4
    $region2: #{_forward_impl.5} parent=1 // loop_pre_header
      _
    $region3: #{_forward_impl.5} parent=1 // loop_header
      %s17 = sphi 0, %s21
      %p18 = scmp.ge.s32.totalorder %s17, 4
      %s24 = sphi 0, %s36
      %s25 = sphi 0, %s32
      %s26 = sphi 0, %s24
      %s27 = sphi 0, %s25
      %s28 = sphi 0, %s26
      %s29 = sphi 0, %s27
      %s49 = sphi 0, %s51
      %s52 = sphi 0, %s49
      %s53 = sphi 0, %s52
      %s69 = sphi 0, %s53
      %s75 = sphi 0, %s77
      %s78 = sphi 0, %s75
      %s79 = sphi 0, %s78
      %s95 = sphi 0, %s79
      %s101 = sphi 0, %s103
      %s104 = sphi 0, %s101
      %s105 = sphi 0, %s104
      %s121 = sphi 0, %s105
      %s137 = sphi 0, %s139
      %s140 = sphi 0, %s137
      %s141 = sphi 0, %s140
      %s157 = sphi 0, %s141
      %s163 = sphi 0, %s165
      %s166 = sphi 0, %s163
      %s167 = sphi 0, %s166
      %s183 = sphi 0, %s167
    $region4: #{_forward_impl.5} parent=1 // loop_header_branch
      %20 = sbr.rel (%p18) target = $region8
    $region5: #{_forward_impl.5} parent=1 // loop_body
      %s22 = ssub.s32 %s17, 1
      %s23 = ssub.s32 %s17, 2
      %s30 = sadd.s32 1, %s25
      %p31 = scmp.ge.s32.totalorder %s30, 1
      %s32 = scalar_select %p31, 0, %s30
      %s33 = sadd.s32 1, %s24
      %s34 = scalar_select %p31, %s33, %s24
      %p35 = scmp.ge.s32.totalorder %s34, 2
      %s36 = scalar_select %p35, 0, %s34
      %s37 = smul.u32 %s25, 2
      %s38 = ssub.s32 0, %s37
      %s39 = smul.u32 %s24, %s38
      %s40 = sadd.s32 %s25, %s39
      %s41 = smul.u32 %s32, 2
      %s42 = ssub.s32 0, %s41
      %s43 = smul.u32 %s36, %s42
      %s44 = sadd.s32 %s32, %s43
      %s45 = ssub.s32 %s24, %s36
      %s46 = ssub.s32 %s40, %s44
      %s47 = sor.u32 %s45, %s46
      %p48 = scmp.eq.s32.totalorder %s47, 0
      %s50 = sadd.s32 %s49, 1
      %s51 = scalar_select %p48, %s49, %s50
      %p54 = pneg %p48
      %p55 = scmp.eq.s32.totalorder %s17, 1
      %p56 = por %p54, %p55
      %p57 = scmp.ne.s32.totalorder %s49, %s52
      %p58 = scmp.eq.s32.totalorder %s17, 0
      %p59 = por %p57, %p58
      %p60 = scmp.ne.s32.totalorder %s49, %s52
      %p61 = scmp.eq.s32.totalorder %s22, 1
      %p62 = por %p60, %p61
      %p63 = scmp.ne.s32.totalorder %s52, %s53
      %p64 = scmp.eq.s32.totalorder %s22, 0
      %p65 = por %p63, %p64
      %p66 = scmp.ne.s32.totalorder %s52, %s53
      %p67 = scmp.eq.s32.totalorder %s23, 1
      %p68 = por %p66, %p67
      %p70 = scmp.ne.s32.totalorder %s53, %s69
      %p71 = scmp.eq.s32.totalorder %s23, 0
      %p72 = por %p70, %p71
      %s73 = ssub.s32 %s24, %s36
      %p74 = scmp.eq.s32.totalorder %s73, 0
      %s76 = sadd.s32 %s75, 1
      %s77 = scalar_select %p74, %s75, %s76
      %p80 = pneg %p74
      %p81 = scmp.eq.s32.totalorder %s17, 1
      %p82 = por %p80, %p81
      %p83 = scmp.ne.s32.totalorder %s75, %s78
      %p84 = scmp.eq.s32.totalorder %s17, 0
      %p85 = por %p83, %p84
      %p86 = scmp.ne.s32.totalorder %s75, %s78
      %p87 = scmp.eq.s32.totalorder %s22, 1
      %p88 = por %p86, %p87
      %p89 = scmp.ne.s32.totalorder %s78, %s79
      %p90 = scmp.eq.s32.totalorder %s22, 0
      %p91 = por %p89, %p90
      %p92 = scmp.ne.s32.totalorder %s78, %s79
      %p93 = scmp.eq.s32.totalorder %s23, 1
      %p94 = por %p92, %p93
      %p96 = scmp.ne.s32.totalorder %s79, %s95
      %p97 = scmp.eq.s32.totalorder %s23, 0
      %p98 = por %p96, %p97
      %s99 = ssub.s32 %s24, %s36
      %p100 = scmp.eq.s32.totalorder %s99, 0
      %s102 = sadd.s32 %s101, 1
      %s103 = scalar_select %p100, %s101, %s102
      %p106 = pneg %p100
      %p107 = scmp.eq.s32.totalorder %s17, 1
      %p108 = por %p106, %p107
      %p109 = scmp.ne.s32.totalorder %s101, %s104
      %p110 = scmp.eq.s32.totalorder %s17, 0
      %p111 = por %p109, %p110
      %p112 = scmp.ne.s32.totalorder %s101, %s104
      %p113 = scmp.eq.s32.totalorder %s22, 1
      %p114 = por %p112, %p113
      %p115 = scmp.ne.s32.totalorder %s104, %s105
      %p116 = scmp.eq.s32.totalorder %s22, 0
      %p117 = por %p115, %p116
      %p118 = scmp.ne.s32.totalorder %s104, %s105
      %p119 = scmp.eq.s32.totalorder %s23, 1
      %p120 = por %p118, %p119
      %p122 = scmp.ne.s32.totalorder %s105, %s121
      %p123 = scmp.eq.s32.totalorder %s23, 0
      %p124 = por %p122, %p123
      %s125 = smul.u32 %s25, 2
      %s126 = ssub.s32 0, %s125
      %s127 = smul.u32 %s24, %s126
      %s128 = sadd.s32 %s25, %s127
      %s129 = smul.u32 %s32, 2
      %s130 = ssub.s32 0, %s129
      %s131 = smul.u32 %s36, %s130
      %s132 = sadd.s32 %s32, %s131
      %s133 = ssub.s32 %s24, %s36
      %s134 = ssub.s32 %s128, %s132
      %s135 = sor.u32 %s133, %s134
      %p136 = scmp.eq.s32.totalorder %s135, 0
      %s138 = sadd.s32 %s137, 1
      %s139 = scalar_select %p136, %s137, %s138
      %p142 = pneg %p136
      %p143 = scmp.eq.s32.totalorder %s17, 1
      %p144 = por %p142, %p143
      %p145 = scmp.ne.s32.totalorder %s137, %s140
      %p146 = scmp.eq.s32.totalorder %s17, 0
      %p147 = por %p145, %p146
      %p148 = scmp.ne.s32.totalorder %s137, %s140
      %p149 = scmp.eq.s32.totalorder %s22, 1
      %p150 = por %p148, %p149
      %p151 = scmp.ne.s32.totalorder %s140, %s141
      %p152 = scmp.eq.s32.totalorder %s22, 0
      %p153 = por %p151, %p152
      %p154 = scmp.ne.s32.totalorder %s140, %s141
      %p155 = scmp.eq.s32.totalorder %s23, 1
      %p156 = por %p154, %p155
      %p158 = scmp.ne.s32.totalorder %s141, %s157
      %p159 = scmp.eq.s32.totalorder %s23, 0
      %p160 = por %p158, %p159
      %s161 = ssub.s32 %s24, %s36
      %p162 = scmp.eq.s32.totalorder %s161, 0
      %s164 = sadd.s32 %s163, 1
      %s165 = scalar_select %p162, %s163, %s164
      %p168 = pneg %p162
      %p169 = scmp.eq.s32.totalorder %s17, 1
      %p170 = por %p168, %p169
      %p171 = scmp.ne.s32.totalorder %s163, %s166
      %p172 = scmp.eq.s32.totalorder %s17, 0
      %p173 = por %p171, %p172
      %p174 = scmp.ne.s32.totalorder %s163, %s166
      %p175 = scmp.eq.s32.totalorder %s22, 1
      %p176 = por %p174, %p175
      %p177 = scmp.ne.s32.totalorder %s166, %s167
      %p178 = scmp.eq.s32.totalorder %s22, 0
      %p179 = por %p177, %p178
      %p180 = scmp.ne.s32.totalorder %s166, %s167
      %p181 = scmp.eq.s32.totalorder %s23, 1
      %p182 = por %p180, %p181
      %p184 = scmp.ne.s32.totalorder %s167, %s183
      %p185 = scmp.eq.s32.totalorder %s23, 0
      %p186 = por %p184, %p185
      %p187 = scmp.le.s32.totalorder 1, %s17
      %p188 = scmp.lt.s32.totalorder %s17, 3
      %p189 = pnand %p187, %p188
      %p190 = pneg %p189
      // Predicated region
      $region9: #{_forward_impl.5} parent=5 // pred_check
        _
      $region10: #{_forward_impl.5} parent=5 // pred_check_branch
        %192 = sbr.rel (%p189) target = $region12
      $region11: #{_forward_impl.5} parent=5 // pred_region
        %s193 = ssub.s32 %s17, 1
      $region12: #{_forward_impl.5} parent=5 // pred_fallthru
        _
      %p194 = scmp.lt.s32.totalorder %s17, 2
      // Predicated region
      $region13: #{_forward_impl.5} parent=5 // pred_check
        %p195 = pneg %p194
      $region14: #{_forward_impl.5} parent=5 // pred_check_branch
        %197 = sbr.rel (%p195) target = $region16
      $region15: #{_forward_impl.5} parent=5 // pred_region
        // Predicated region
        $region17: #{_forward_impl.5} parent=15 // pred_check
          %p198 = pneg %p59
        $region18: #{_forward_impl.5} parent=15 // pred_check_branch
          %200 = sbr.rel (%p198) target = $region20
        $region19: #{_forward_impl.5} parent=15 // pred_region
          %s201 = smul.u32 %s25, 2
          %s202 = ssub.s32 0, %s201
          %s203 = smul.u32 %s24, %s202
          %s204 = sadd.s32 %s25, %s203
          %s205 = smul.u32 8, %s204
          %p206 = scmp.lt.s32.totalorder %s24, 1
          %s207 = scalar_select %p206, %s24, 1
          %p208 = scmp.lt.s32.totalorder %s205, 7
          %s209 = scalar_select %p208, %s205, 7
          %s210 = smul.addr %s209, 3
          %s211 = smul.addr %s207, 24
          %s212 = sadd.s32 %s210, %s211
          %s213 = smul.addr %s212, 2
          %s214 = scalar_lea.vmem %s0, %s213
          %s215 = smul.u32 %s25, 2
          %s216 = ssub.s32 0, %s215
          %s217 = smul.u32 %s24, %s216
          %s218 = sadd.s32 %s25, %s217
          %s219 = smul.u32 8, %s218
        $region20: #{_forward_impl.5} parent=15 // pred_fallthru
          _
        // Predicated region
        $region21: #{_forward_impl.5} parent=15 // pred_check
          %p220 = pneg %p85
        $region22: #{_forward_impl.5} parent=15 // pred_check_branch
          %222 = sbr.rel (%p220) target = $region24
        $region23: #{_forward_impl.5} parent=15 // pred_region
          %s223 = sand.u32 %s75, 1
          %s224 = scalar_lea.sflag [#allocation4], %s223
          %s225 = sand.u32 %s75, 1
          %s226 = smul.addr %s225, 384
          %s227 = scalar_lea.vmem [#allocation3], %s226
          %229 = vsyncadd %s224, 0
          %s230 = smul.addr %s24, 48
          %s231 = smul.addr %s230, 8
          %s232 = scalar_lea.hbm %s1, %s231
          %s233 = sshll.u32 %s232, 4
          %s234 = int_to_ptr.hbm [resolvable:$true] %s233
          %s235 = sshll.u32 %s227, 4
          %s236 = int_to_ptr.vmem [resolvable:$true] %s235
          %241 = dma.hbm_to_vmem [thread:$0]  %s234, 6144, %s236, %s224, 384, 384, 24
        $region24: #{_forward_impl.5} parent=15 // pred_fallthru
          _
        // Predicated region
        $region25: #{_forward_impl.5} parent=15 // pred_check
          %p242 = pneg %p111
        $region26: #{_forward_impl.5} parent=15 // pred_check_branch
          %244 = sbr.rel (%p242) target = $region28
        $region27: #{_forward_impl.5} parent=15 // pred_region
          %p245 = scmp.lt.s32.totalorder %s24, 1
          %s246 = scalar_select %p245, %s24, 1
          %s247 = scalar_lea.vmem %s2, %s246
        $region28: #{_forward_impl.5} parent=15 // pred_fallthru
          _
      $region16: #{_forward_impl.5} parent=5 // pred_fallthru
        _
      %p248 = scmp.le.s32.totalorder 1, %s17
      %p249 = scmp.lt.s32.totalorder %s17, 3
      %p250 = pnand %p248, %p249
      %p251 = pneg %p250
      // Predicated region
      $region29: #{_forward_impl.5} parent=5 // pred_check
        _
      $region30: #{_forward_impl.5} parent=5 // pred_check_branch
        %253 = sbr.rel (%p250) target = $region32
      $region31: #{_forward_impl.5} parent=5 // pred_region
        %s254 = ssub.s32 %s17, 1
        %s255 = sand.u32 %s78, 1
        %s256 = scalar_lea.sflag [#allocation4], %s255
        %s257 = sand.u32 %s78, 1
        %s258 = smul.addr %s257, 384
        %s259 = scalar_lea.vmem [#allocation3], %s258
        // Predicated region
        $region33: #{_forward_impl.5} parent=31 // pred_check
          %p260 = pneg %p91
        $region34: #{_forward_impl.5} parent=31 // pred_check_branch
          %262 = sbr.rel (%p260) target = $region36
        $region35: #{_forward_impl.5} parent=31 // pred_region
          %264 = dma.done %s256, 6144
        $region36: #{_forward_impl.5} parent=31 // pred_fallthru
          _
        %s265 = smul.u32 %s27, 2
        %s266 = ssub.s32 0, %s265
        %s267 = smul.u32 %s26, %s266
        %s268 = sadd.s32 %s27, %s267
        %s269 = smul.u32 8, %s268
        %p270 = scmp.lt.s32.totalorder %s26, 1
        %s271 = scalar_select %p270, %s26, 1
        %p272 = scmp.lt.s32.totalorder %s269, 7
        %s273 = scalar_select %p272, %s269, 7
        %s274 = smul.addr %s273, 3
        %s275 = smul.addr %s271, 24
        %s276 = sadd.s32 %s274, %s275
        %s277 = smul.addr %s276, 2
        %s278 = scalar_lea.vmem %s0, %s277
        %p279 = pneg %p65
        %p280 = pneg %p62
        %s281 = sand.u32 %s78, 1
        %s282 = scalar_lea.sflag [#allocation4], %s281
        %s283 = sand.u32 %s78, 1
        %s284 = smul.addr %s283, 384
        %s285 = scalar_lea.vmem [#allocation3], %s284
        %p286 = pneg %p91
        %p287 = pneg %p88
        %p288 = scmp.lt.s32.totalorder %s26, 1
        %s289 = scalar_select %p288, %s26, 1
        %s290 = scalar_lea.vmem %s2, %s289
        %p291 = pneg %p117
        %p292 = pneg %p114
        %p293 = pneg %p153
        %p294 = pneg %p150
        %s295 = smul.u32 %s27, 2
        %s296 = ssub.s32 0, %s295
        %s297 = smul.u32 %s26, %s296
        %s298 = sadd.s32 %s27, %s297
        %s299 = smul.u32 8, %s298
        %p300 = scmp.lt.s32.totalorder %s26, 1
        %s301 = scalar_select %p300, %s26, 1
        %p302 = scmp.lt.s32.totalorder %s299, 7
        %s303 = scalar_select %p302, %s299, 7
        %s304 = smul.addr %s301, 8
        %s305 = sadd.s32 %s303, %s304
        %s306 = smul.addr %s305, 2
        %s307 = scalar_lea.vmem %s3, %s306
        %p308 = pneg %p179
        %p309 = pneg %p176
        %s310 = sand.u32 %s166, 1
        %s311 = scalar_lea.sflag [#allocation5], %s310
        %s312 = sand.u32 %s166, 1
        %s313 = smul.addr %s312, 2
        %s314 = scalar_lea.vmem [#allocation6], %s313
        %s315 = smul.u32 %s27, 2
        %s316 = ssub.s32 0, %s315
        %s317 = smul.u32 %s26, %s316
        %s318 = sadd.s32 %s27, %s317
        %s319 = smul.u32 8, %s318
        %p320 = scmp.lt.s32.totalorder %s26, 1
        %s321 = scalar_select %p320, %s26, 1
        %p322 = scmp.lt.s32.totalorder %s319, 7
        %s323 = scalar_select %p322, %s319, 7
        %s324 = smul.addr %s323, 3
        %s325 = smul.addr %s321, 24
        %s326 = sadd.s32 %s324, %s325
        %s327 = smul.addr %s326, 2
        %s328 = scalar_lea.vmem %s0, %s327
        %s329 = smul.u32 %s27, 2
        %s330 = ssub.s32 0, %s329
        %s331 = smul.u32 %s26, %s330
        %s332 = sadd.s32 %s27, %s331
        %s333 = smul.u32 8, %s332
        %p334 = scmp.lt.s32.totalorder %s26, 1
        %s335 = scalar_select %p334, %s26, 1
        %s336 = scalar_lea.vmem %s2, %s335
        %s337 = smul.u32 %s27, 2
        %s338 = ssub.s32 0, %s337
        %s339 = smul.u32 %s26, %s338
        %s340 = sadd.s32 %s27, %s339
        %s341 = smul.u32 8, %s340
        %p342 = scmp.lt.s32.totalorder %s26, 1
        %s343 = scalar_select %p342, %s26, 1
        %p344 = scmp.lt.s32.totalorder %s341, 7
        %s345 = scalar_select %p344, %s341, 7
        %s346 = smul.addr %s343, 8
        %s347 = sadd.s32 %s345, %s346
        %s348 = smul.addr %s347, 2
        %s349 = scalar_lea.vmem %s3, %s348
        %s350 = smul.u32 %s27, 2
        %s351 = ssub.s32 0, %s350
        %s352 = smul.u32 %s26, %s351
        %s353 = sadd.s32 %s27, %s352
        %s354 = smul.u32 8, %s353
        %p355 = scmp.eq.s32.totalorder %s27, 0
        // Predicated region
        $region37: #{_forward_impl.5} parent=31 // pred_check
          %p356 = pneg %p355
        $region38: #{_forward_impl.5} parent=31 // pred_check_branch
          %358 = sbr.rel (%p356) target = $region40
        $region39: #{_forward_impl.5} parent=31 // pred_region
          %359 = vst [vmem:[#allocation2] sm:$0x3] 0.0
        $region40: #{_forward_impl.5} parent=31 // pred_fallthru
          _
        %v360 = vld [vmem:[%s336] sm:$0x1]
        %v361 = vld [vmem:[#allocation2] sm:$0x3]
        %s362 = smul.u32 %s26, 7
        %s363 = smul.u32 %s362, 3
        %s364 = smul.addr %s363, 2
        %s365 = scalar_lea.vmem %s328, %s364
        %v366 = vld [vmem:[%s365] sm:$0x3f]
        %v367 = vld [vmem:[%s259] sm:$0xff]
        %v368 = vld [vmem:[%s259 + $0x8] sm:$0xff]
        %v369 = vld [vmem:[%s259 + $0x10] sm:$0xff]
        %v370 = vld [vmem:[%s259 + $0x18] sm:$0xff]
        %v371 = vld [vmem:[%s259 + $0x20] sm:$0xff]
        %v372 = vld [vmem:[%s259 + $0x28] sm:$0xff]
        %v373 = vld [vmem:[%s259 + $0x30] sm:$0xff]
        %v374 = vld [vmem:[%s259 + $0x38] sm:$0xff]
        %v375 = vld [vmem:[%s259 + $0x40] sm:$0xff]
        %v376 = vld [vmem:[%s259 + $0x48] sm:$0xff]
        %v377 = vld [vmem:[%s259 + $0x50] sm:$0xff]
        %v378 = vld [vmem:[%s259 + $0x58] sm:$0xff]
        %v379 = vld [vmem:[%s259 + $0x60] sm:$0xff]
        %v380 = vld [vmem:[%s259 + $0x68] sm:$0xff]
        %v381 = vld [vmem:[%s259 + $0x70] sm:$0xff]
        %v382 = vld [vmem:[%s259 + $0x78] sm:$0xff]
        %v383 = vld [vmem:[%s259 + $0x80] sm:$0xff]
        %v384 = vld [vmem:[%s259 + $0x88] sm:$0xff]
        %v385 = vld [vmem:[%s259 + $0x90] sm:$0xff]
        %v386 = vld [vmem:[%s259 + $0x98] sm:$0xff]
        %v387 = vld [vmem:[%s259 + $0xa0] sm:$0xff]
        %v388 = vld [vmem:[%s259 + $0xa8] sm:$0xff]
        %v389 = vld [vmem:[%s259 + $0xb0] sm:$0xff]
        %v390 = vld [vmem:[%s259 + $0xb8] sm:$0xff]
        %v391 = vld [vmem:[%s259 + $0xc0] sm:$0xff]
        %v392 = vld [vmem:[%s259 + $0xc8] sm:$0xff]
        %v393 = vld [vmem:[%s259 + $0xd0] sm:$0xff]
        %v394 = vld [vmem:[%s259 + $0xd8] sm:$0xff]
        %v395 = vld [vmem:[%s259 + $0xe0] sm:$0xff]
        %v396 = vld [vmem:[%s259 + $0xe8] sm:$0xff]
        %v397 = vld [vmem:[%s259 + $0xf0] sm:$0xff]
        %v398 = vld [vmem:[%s259 + $0xf8] sm:$0xff]
        %v399 = vld [vmem:[%s259 + $0x100] sm:$0xff]
        %v400 = vld [vmem:[%s259 + $0x108] sm:$0xff]
        %v401 = vld [vmem:[%s259 + $0x110] sm:$0xff]
        %v402 = vld [vmem:[%s259 + $0x118] sm:$0xff]
        %v403 = vld [vmem:[%s259 + $0x120] sm:$0xff]
        %v404 = vld [vmem:[%s259 + $0x128] sm:$0xff]
        %v405 = vld [vmem:[%s259 + $0x130] sm:$0xff]
        %v406 = vld [vmem:[%s259 + $0x138] sm:$0xff]
        %v407 = vld [vmem:[%s259 + $0x140] sm:$0xff]
        %v408 = vld [vmem:[%s259 + $0x148] sm:$0xff]
        %v409 = vld [vmem:[%s259 + $0x150] sm:$0xff]
        %v410 = vld [vmem:[%s259 + $0x158] sm:$0xff]
        %v411 = vld [vmem:[%s259 + $0x160] sm:$0xff]
        %v412 = vld [vmem:[%s259 + $0x168] sm:$0xff]
        %v413 = vld [vmem:[%s259 + $0x170] sm:$0xff]
        %v414 = vld [vmem:[%s259 + $0x178] sm:$0xff]
        %415 = vmatpush.msra.mxu0 %v412
        %416 = vmatpush.msra.mxu0 %v409
        %417 = vmatpush.msra.mxu0 %v406
        %418 = vmatpush.msra.mxu0 %v403
        %419 = vmatpush.msra.mxu0 %v400
        %420 = vmatpush.msra.mxu0 %v397
        %421 = vmatpush.msra.mxu0 %v394
        %422 = vmatpush.msra.mxu0 %v391
        %423 = vmatpush.msra.mxu0 %v388
        %424 = vmatpush.msra.mxu0 %v385
        %425 = vmatpush.msra.mxu0 %v382
        %426 = vmatpush.msra.mxu0 %v379
        %427 = vmatpush.msra.mxu0 %v376
        %428 = vmatpush.msra.mxu0 %v373
        %429 = vmatpush.msra.mxu0 %v370
        %430 = vmatpush.msra.mxu0 %v367
        %431 = vmatmul.f32.gmra.mxu0 %v361
        %v432 = vpop.f32.mrf.mxu0
        %v433 = vadd.f32 0.0, %v432
        %434 = vdwg.mxu0
        %435 = vmatpush.msra.mxu0 %v413
        %436 = vmatpush.msra.mxu0 %v410
        %437 = vmatpush.msra.mxu0 %v407
        %438 = vmatpush.msra.mxu0 %v404
        %439 = vmatpush.msra.mxu0 %v401
        %440 = vmatpush.msra.mxu0 %v398
        %441 = vmatpush.msra.mxu0 %v395
        %442 = vmatpush.msra.mxu0 %v392
        %443 = vmatpush.msra.mxu0 %v389
        %444 = vmatpush.msra.mxu0 %v386
        %445 = vmatpush.msra.mxu0 %v383
        %446 = vmatpush.msra.mxu0 %v380
        %447 = vmatpush.msra.mxu0 %v377
        %448 = vmatpush.msra.mxu0 %v374
        %449 = vmatpush.msra.mxu0 %v371
        %450 = vmatpush.msra.mxu0 %v368
        %451 = vmatmul.f32.gmra.mxu0 %v361
        %v452 = vpop.f32.mrf.mxu0
        %v453 = vadd.f32 0.0, %v452
        %454 = vdwg.mxu0
        %455 = vmatpush.msra.mxu0 %v414
        %456 = vmatpush.msra.mxu0 %v411
        %457 = vmatpush.msra.mxu0 %v408
        %458 = vmatpush.msra.mxu0 %v405
        %459 = vmatpush.msra.mxu0 %v402
        %460 = vmatpush.msra.mxu0 %v399
        %461 = vmatpush.msra.mxu0 %v396
        %462 = vmatpush.msra.mxu0 %v393
        %463 = vmatpush.msra.mxu0 %v390
        %464 = vmatpush.msra.mxu0 %v387
        %465 = vmatpush.msra.mxu0 %v384
        %466 = vmatpush.msra.mxu0 %v381
        %467 = vmatpush.msra.mxu0 %v378
        %468 = vmatpush.msra.mxu0 %v375
        %469 = vmatpush.msra.mxu0 %v372
        %470 = vmatpush.msra.mxu0 %v369
        %471 = vmatmul.f32.gmra.mxu0 %v361
        %v472 = vpop.f32.mrf.mxu0
        %v473 = vadd.f32 0.0, %v472
        %474 = vdwg.mxu0
        %v475 = vadd.f32 %v366, %v433
        %v476 = vxor.u32 %v475, 2147483648
        %v477 = vmul.f32 %v476, 1.442695
        %v478 = vpow.pop %v477
        %v479 = vadd.f32 %v478, 1.0
        %v480 = vrcp.pop %v479
        %v481 = vmul.f32 %v479, %v480
        %v482 = vsub.f32 1.0, %v481
        %v483 = vmul.f32 %v480, %v482
        %v484 = vadd.f32 %v480, %v483
        %vm485 = vweird.f32 %v479
        %vm486 = vweird.f32 %v480
        %vm487 = vmor %vm485, %vm486
        %v488 = vsel %vm487, %v480, %v484
        %v489 = vand.u32 2147483647, %v479
        %vm490 = vcmp.eq.f32.partialorder %v489, 8.507059e+37
        %v491 = vand.u32 %v479, 2147483648
        %v492 = vor.u32 1.1754944e-38, %v491
        %v493 = vsel %vm490, %v492, %v488
        %v494 = vmul.f32 1.0, %v493
        %v496 = vrot.slane %v366, 2
        %v498 = vadd.f32 %v496, %v453
        %v499 = vxor.u32 %v498, 2147483648
        %v500 = vmul.f32 %v499, 1.442695
        %v501 = vpow.pop %v500
        %v502 = vadd.f32 %v501, 1.0
        %v503 = vrcp.pop %v502
        %v504 = vmul.f32 %v502, %v503
        %v505 = vsub.f32 1.0, %v504
        %v506 = vmul.f32 %v503, %v505
        %v507 = vadd.f32 %v503, %v506
        %vm508 = vweird.f32 %v502
        %vm509 = vweird.f32 %v503
        %vm510 = vmor %vm508, %vm509
        %v511 = vsel %vm510, %v503, %v507
        %v512 = vand.u32 2147483647, %v502
        %vm513 = vcmp.eq.f32.partialorder %v512, 8.507059e+37
        %v514 = vand.u32 %v502, 2147483648
        %v515 = vor.u32 1.1754944e-38, %v514
        %v516 = vsel %vm513, %v515, %v511
        %v517 = vmul.f32 1.0, %v516
        %v519 = vperm.slane %v360, 0
        %v521 = vadd.f32 %v473, %v519
        %v522 = vmul.f32 %v494, %v521
        %v523 = vrot.slane %v366, 4
        %v525 = vadd.f32 %v523, %v522
        %v526 = vtanh.pop %v525
        %v527 = vsub.f32 %v361, %v526
        %v528 = vmul.f32 %v517, %v527
        %v529 = vadd.f32 %v526, %v528
        %s530 = smul.u32 %s362, 2
        %s531 = scalar_lea.vmem %s349, %s530
        %532 = vst [vmem:[%s531] sm:$0x3] %v529
        %s533 = smul.u32 %s26, 5
        %s534 = sadd.s32 %s533, 1
        %s535 = smul.u32 %s534, 3
        %s536 = smul.addr %s535, 2
        %s537 = scalar_lea.vmem %s328, %s536
        %v538 = vld [vmem:[%s537] sm:$0x3f]
        %v539 = vld [vmem:[%s259] sm:$0xff]
        %v540 = vld [vmem:[%s259 + $0x8] sm:$0xff]
        %v541 = vld [vmem:[%s259 + $0x10] sm:$0xff]
        %v542 = vld [vmem:[%s259 + $0x18] sm:$0xff]
        %v543 = vld [vmem:[%s259 + $0x20] sm:$0xff]
        %v544 = vld [vmem:[%s259 + $0x28] sm:$0xff]
        %v545 = vld [vmem:[%s259 + $0x30] sm:$0xff]
        %v546 = vld [vmem:[%s259 + $0x38] sm:$0xff]
        %v547 = vld [vmem:[%s259 + $0x40] sm:$0xff]
        %v548 = vld [vmem:[%s259 + $0x48] sm:$0xff]
        %v549 = vld [vmem:[%s259 + $0x50] sm:$0xff]
        %v550 = vld [vmem:[%s259 + $0x58] sm:$0xff]
        %v551 = vld [vmem:[%s259 + $0x60] sm:$0xff]
        %v552 = vld [vmem:[%s259 + $0x68] sm:$0xff]
        %v553 = vld [vmem:[%s259 + $0x70] sm:$0xff]
        %v554 = vld [vmem:[%s259 + $0x78] sm:$0xff]
        %v555 = vld [vmem:[%s259 + $0x80] sm:$0xff]
        %v556 = vld [vmem:[%s259 + $0x88] sm:$0xff]
        %v557 = vld [vmem:[%s259 + $0x90] sm:$0xff]
        %v558 = vld [vmem:[%s259 + $0x98] sm:$0xff]
        %v559 = vld [vmem:[%s259 + $0xa0] sm:$0xff]
        %v560 = vld [vmem:[%s259 + $0xa8] sm:$0xff]
        %v561 = vld [vmem:[%s259 + $0xb0] sm:$0xff]
        %v562 = vld [vmem:[%s259 + $0xb8] sm:$0xff]
        %v563 = vld [vmem:[%s259 + $0xc0] sm:$0xff]
        %v564 = vld [vmem:[%s259 + $0xc8] sm:$0xff]
        %v565 = vld [vmem:[%s259 + $0xd0] sm:$0xff]
        %v566 = vld [vmem:[%s259 + $0xd8] sm:$0xff]
        %v567 = vld [vmem:[%s259 + $0xe0] sm:$0xff]
        %v568 = vld [vmem:[%s259 + $0xe8] sm:$0xff]
        %v569 = vld [vmem:[%s259 + $0xf0] sm:$0xff]
        %v570 = vld [vmem:[%s259 + $0xf8] sm:$0xff]
        %v571 = vld [vmem:[%s259 + $0x100] sm:$0xff]
        %v572 = vld [vmem:[%s259 + $0x108] sm:$0xff]
        %v573 = vld [vmem:[%s259 + $0x110] sm:$0xff]
        %v574 = vld [vmem:[%s259 + $0x118] sm:$0xff]
        %v575 = vld [vmem:[%s259 + $0x120] sm:$0xff]
        %v576 = vld [vmem:[%s259 + $0x128] sm:$0xff]
        %v577 = vld [vmem:[%s259 + $0x130] sm:$0xff]
        %v578 = vld [vmem:[%s259 + $0x138] sm:$0xff]
        %v579 = vld [vmem:[%s259 + $0x140] sm:$0xff]
        %v580 = vld [vmem:[%s259 + $0x148] sm:$0xff]
        %v581 = vld [vmem:[%s259 + $0x150] sm:$0xff]
        %v582 = vld [vmem:[%s259 + $0x158] sm:$0xff]
        %v583 = vld [vmem:[%s259 + $0x160] sm:$0xff]
        %v584 = vld [vmem:[%s259 + $0x168] sm:$0xff]
        %v585 = vld [vmem:[%s259 + $0x170] sm:$0xff]
        %v586 = vld [vmem:[%s259 + $0x178] sm:$0xff]
        %587 = vmatpush.msra.mxu0 %v584
        %588 = vmatpush.msra.mxu0 %v581
        %589 = vmatpush.msra.mxu0 %v578
        %590 = vmatpush.msra.mxu0 %v575
        %591 = vmatpush.msra.mxu0 %v572
        %592 = vmatpush.msra.mxu0 %v569
        %593 = vmatpush.msra.mxu0 %v566
        %594 = vmatpush.msra.mxu0 %v563
        %595 = vmatpush.msra.mxu0 %v560
        %596 = vmatpush.msra.mxu0 %v557
        %597 = vmatpush.msra.mxu0 %v554
        %598 = vmatpush.msra.mxu0 %v551
        %599 = vmatpush.msra.mxu0 %v548
        %600 = vmatpush.msra.mxu0 %v545
        %601 = vmatpush.msra.mxu0 %v542
        %602 = vmatpush.msra.mxu0 %v539
        %603 = vmatmul.f32.gmra.mxu0 %v529
        %v604 = vpop.f32.mrf.mxu0
        %v605 = vadd.f32 0.0, %v604
        %606 = vdwg.mxu0
        %607 = vmatpush.msra.mxu0 %v585
        %608 = vmatpush.msra.mxu0 %v582
        %609 = vmatpush.msra.mxu0 %v579
        %610 = vmatpush.msra.mxu0 %v576
        %611 = vmatpush.msra.mxu0 %v573
        %612 = vmatpush.msra.mxu0 %v570
        %613 = vmatpush.msra.mxu0 %v567
        %614 = vmatpush.msra.mxu0 %v564
        %615 = vmatpush.msra.mxu0 %v561
        %616 = vmatpush.msra.mxu0 %v558
        %617 = vmatpush.msra.mxu0 %v555
        %618 = vmatpush.msra.mxu0 %v552
        %619 = vmatpush.msra.mxu0 %v549
        %620 = vmatpush.msra.mxu0 %v546
        %621 = vmatpush.msra.mxu0 %v543
        %622 = vmatpush.msra.mxu0 %v540
        %623 = vmatmul.f32.gmra.mxu0 %v529
        %v624 = vpop.f32.mrf.mxu0
        %v625 = vadd.f32 0.0, %v624
        %626 = vdwg.mxu0
        %627 = vmatpush.msra.mxu0 %v586
        %628 = vmatpush.msra.mxu0 %v583
        %629 = vmatpush.msra.mxu0 %v580
        %630 = vmatpush.msra.mxu0 %v577
        %631 = vmatpush.msra.mxu0 %v574
        %632 = vmatpush.msra.mxu0 %v571
        %633 = vmatpush.msra.mxu0 %v568
        %634 = vmatpush.msra.mxu0 %v565
        %635 = vmatpush.msra.mxu0 %v562
        %636 = vmatpush.msra.mxu0 %v559
        %637 = vmatpush.msra.mxu0 %v556
        %638 = vmatpush.msra.mxu0 %v553
        %639 = vmatpush.msra.mxu0 %v550
        %640 = vmatpush.msra.mxu0 %v547
        %641 = vmatpush.msra.mxu0 %v544
        %642 = vmatpush.msra.mxu0 %v541
        %643 = vmatmul.f32.gmra.mxu0 %v529
        %v644 = vpop.f32.mrf.mxu0
        %v645 = vadd.f32 0.0, %v644
        %646 = vdwg.mxu0
        %v647 = vadd.f32 %v538, %v605
        %v648 = vxor.u32 %v647, 2147483648
        %v649 = vmul.f32 %v648, 1.442695
        %v650 = vpow.pop %v649
        %v651 = vadd.f32 %v650, 1.0
        %v652 = vrcp.pop %v651
        %v653 = vmul.f32 %v651, %v652
        %v654 = vsub.f32 1.0, %v653
        %v655 = vmul.f32 %v652, %v654
        %v656 = vadd.f32 %v652, %v655
        %vm657 = vweird.f32 %v651
        %vm658 = vweird.f32 %v652
        %vm659 = vmor %vm657, %vm658
        %v660 = vsel %vm659, %v652, %v656
        %v661 = vand.u32 2147483647, %v651
        %vm662 = vcmp.eq.f32.partialorder %v661, 8.507059e+37
        %v663 = vand.u32 %v651, 2147483648
        %v664 = vor.u32 1.1754944e-38, %v663
        %v665 = vsel %vm662, %v664, %v660
        %v666 = vmul.f32 1.0, %v665
        %v668 = vrot.slane %v538, 2
        %v670 = vadd.f32 %v668, %v625
        %v671 = vxor.u32 %v670, 2147483648
        %v672 = vmul.f32 %v671, 1.442695
        %v673 = vpow.pop %v672
        %v674 = vadd.f32 %v673, 1.0
        %v675 = vrcp.pop %v674
        %v676 = vmul.f32 %v674, %v675
        %v677 = vsub.f32 1.0, %v676
        %v678 = vmul.f32 %v675, %v677
        %v679 = vadd.f32 %v675, %v678
        %vm680 = vweird.f32 %v674
        %vm681 = vweird.f32 %v675
        %vm682 = vmor %vm680, %vm681
        %v683 = vsel %vm682, %v675, %v679
        %v684 = vand.u32 2147483647, %v674
        %vm685 = vcmp.eq.f32.partialorder %v684, 8.507059e+37
        %v686 = vand.u32 %v674, 2147483648
        %v687 = vor.u32 1.1754944e-38, %v686
        %v688 = vsel %vm685, %v687, %v683
        %v689 = vmul.f32 1.0, %v688
        %v690 = vadd.f32 %v645, %v519
        %v691 = vmul.f32 %v666, %v690
        %v692 = vrot.slane %v538, 4
        %v694 = vadd.f32 %v692, %v691
        %v695 = vtanh.pop %v694
        %v696 = vsub.f32 %v529, %v695
        %v697 = vmul.f32 %v689, %v696
        %v698 = vadd.f32 %v695, %v697
        %s699 = smul.u32 %s534, 2
        %s700 = scalar_lea.vmem %s349, %s699
        %701 = vst [vmem:[%s700] sm:$0x3] %v698
        %s702 = smul.u32 %s26, 3
        %s703 = sadd.s32 %s702, 2
        %s704 = smul.u32 %s703, 3
        %s705 = smul.addr %s704, 2
        %s706 = scalar_lea.vmem %s328, %s705
        %v707 = vld [vmem:[%s706] sm:$0x3f]
        %v708 = vld [vmem:[%s259] sm:$0xff]
        %v709 = vld [vmem:[%s259 + $0x8] sm:$0xff]
        %v710 = vld [vmem:[%s259 + $0x10] sm:$0xff]
        %v711 = vld [vmem:[%s259 + $0x18] sm:$0xff]
        %v712 = vld [vmem:[%s259 + $0x20] sm:$0xff]
        %v713 = vld [vmem:[%s259 + $0x28] sm:$0xff]
        %v714 = vld [vmem:[%s259 + $0x30] sm:$0xff]
        %v715 = vld [vmem:[%s259 + $0x38] sm:$0xff]
        %v716 = vld [vmem:[%s259 + $0x40] sm:$0xff]
        %v717 = vld [vmem:[%s259 + $0x48] sm:$0xff]
        %v718 = vld [vmem:[%s259 + $0x50] sm:$0xff]
        %v719 = vld [vmem:[%s259 + $0x58] sm:$0xff]
        %v720 = vld [vmem:[%s259 + $0x60] sm:$0xff]
        %v721 = vld [vmem:[%s259 + $0x68] sm:$0xff]
        %v722 = vld [vmem:[%s259 + $0x70] sm:$0xff]
        %v723 = vld [vmem:[%s259 + $0x78] sm:$0xff]
        %v724 = vld [vmem:[%s259 + $0x80] sm:$0xff]
        %v725 = vld [vmem:[%s259 + $0x88] sm:$0xff]
        %v726 = vld [vmem:[%s259 + $0x90] sm:$0xff]
        %v727 = vld [vmem:[%s259 + $0x98] sm:$0xff]
        %v728 = vld [vmem:[%s259 + $0xa0] sm:$0xff]
        %v729 = vld [vmem:[%s259 + $0xa8] sm:$0xff]
        %v730 = vld [vmem:[%s259 + $0xb0] sm:$0xff]
        %v731 = vld [vmem:[%s259 + $0xb8] sm:$0xff]
        %v732 = vld [vmem:[%s259 + $0xc0] sm:$0xff]
        %v733 = vld [vmem:[%s259 + $0xc8] sm:$0xff]
        %v734 = vld [vmem:[%s259 + $0xd0] sm:$0xff]
        %v735 = vld [vmem:[%s259 + $0xd8] sm:$0xff]
        %v736 = vld [vmem:[%s259 + $0xe0] sm:$0xff]
        %v737 = vld [vmem:[%s259 + $0xe8] sm:$0xff]
        %v738 = vld [vmem:[%s259 + $0xf0] sm:$0xff]
        %v739 = vld [vmem:[%s259 + $0xf8] sm:$0xff]
        %v740 = vld [vmem:[%s259 + $0x100] sm:$0xff]
        %v741 = vld [vmem:[%s259 + $0x108] sm:$0xff]
        %v742 = vld [vmem:[%s259 + $0x110] sm:$0xff]
        %v743 = vld [vmem:[%s259 + $0x118] sm:$0xff]
        %v744 = vld [vmem:[%s259 + $0x120] sm:$0xff]
        %v745 = vld [vmem:[%s259 + $0x128] sm:$0xff]
        %v746 = vld [vmem:[%s259 + $0x130] sm:$0xff]
        %v747 = vld [vmem:[%s259 + $0x138] sm:$0xff]
        %v748 = vld [vmem:[%s259 + $0x140] sm:$0xff]
        %v749 = vld [vmem:[%s259 + $0x148] sm:$0xff]
        %v750 = vld [vmem:[%s259 + $0x150] sm:$0xff]
        %v751 = vld [vmem:[%s259 + $0x158] sm:$0xff]
        %v752 = vld [vmem:[%s259 + $0x160] sm:$0xff]
        %v753 = vld [vmem:[%s259 + $0x168] sm:$0xff]
        %v754 = vld [vmem:[%s259 + $0x170] sm:$0xff]
        %v755 = vld [vmem:[%s259 + $0x178] sm:$0xff]
        %756 = vmatpush.msra.mxu0 %v753
        %757 = vmatpush.msra.mxu0 %v750
        %758 = vmatpush.msra.mxu0 %v747
        %759 = vmatpush.msra.mxu0 %v744
        %760 = vmatpush.msra.mxu0 %v741
        %761 = vmatpush.msra.mxu0 %v738
        %762 = vmatpush.msra.mxu0 %v735
        %763 = vmatpush.msra.mxu0 %v732
        %764 = vmatpush.msra.mxu0 %v729
        %765 = vmatpush.msra.mxu0 %v726
        %766 = vmatpush.msra.mxu0 %v723
        %767 = vmatpush.msra.mxu0 %v720
        %768 = vmatpush.msra.mxu0 %v717
        %769 = vmatpush.msra.mxu0 %v714
        %770 = vmatpush.msra.mxu0 %v711
        %771 = vmatpush.msra.mxu0 %v708
        %772 = vmatmul.f32.gmra.mxu0 %v698
        %v773 = vpop.f32.mrf.mxu0
        %v774 = vadd.f32 0.0, %v773
        %775 = vdwg.mxu0
        %776 = vmatpush.msra.mxu0 %v754
        %777 = vmatpush.msra.mxu0 %v751
        %778 = vmatpush.msra.mxu0 %v748
        %779 = vmatpush.msra.mxu0 %v745
        %780 = vmatpush.msra.mxu0 %v742
        %781 = vmatpush.msra.mxu0 %v739
        %782 = vmatpush.msra.mxu0 %v736
        %783 = vmatpush.msra.mxu0 %v733
        %784 = vmatpush.msra.mxu0 %v730
        %785 = vmatpush.msra.mxu0 %v727
        %786 = vmatpush.msra.mxu0 %v724
        %787 = vmatpush.msra.mxu0 %v721
        %788 = vmatpush.msra.mxu0 %v718
        %789 = vmatpush.msra.mxu0 %v715
        %790 = vmatpush.msra.mxu0 %v712
        %791 = vmatpush.msra.mxu0 %v709
        %792 = vmatmul.f32.gmra.mxu0 %v698
        %v793 = vpop.f32.mrf.mxu0
        %v794 = vadd.f32 0.0, %v793
        %795 = vdwg.mxu0
        %796 = vmatpush.msra.mxu0 %v755
        %797 = vmatpush.msra.mxu0 %v752
        %798 = vmatpush.msra.mxu0 %v749
        %799 = vmatpush.msra.mxu0 %v746
        %800 = vmatpush.msra.mxu0 %v743
        %801 = vmatpush.msra.mxu0 %v740
        %802 = vmatpush.msra.mxu0 %v737
        %803 = vmatpush.msra.mxu0 %v734
        %804 = vmatpush.msra.mxu0 %v731
        %805 = vmatpush.msra.mxu0 %v728
        %806 = vmatpush.msra.mxu0 %v725
        %807 = vmatpush.msra.mxu0 %v722
        %808 = vmatpush.msra.mxu0 %v719
        %809 = vmatpush.msra.mxu0 %v716
        %810 = vmatpush.msra.mxu0 %v713
        %811 = vmatpush.msra.mxu0 %v710
        %812 = vmatmul.f32.gmra.mxu0 %v698
        %v813 = vpop.f32.mrf.mxu0
        %v814 = vadd.f32 0.0, %v813
        %815 = vdwg.mxu0
        %v816 = vadd.f32 %v707, %v774
        %v817 = vxor.u32 %v816, 2147483648
        %v818 = vmul.f32 %v817, 1.442695
        %v819 = vpow.pop %v818
        %v820 = vadd.f32 %v819, 1.0
        %v821 = vrcp.pop %v820
        %v822 = vmul.f32 %v820, %v821
        %v823 = vsub.f32 1.0, %v822
        %v824 = vmul.f32 %v821, %v823
        %v825 = vadd.f32 %v821, %v824
        %vm826 = vweird.f32 %v820
        %vm827 = vweird.f32 %v821
        %vm828 = vmor %vm826, %vm827
        %v829 = vsel %vm828, %v821, %v825
        %v830 = vand.u32 2147483647, %v820
        %vm831 = vcmp.eq.f32.partialorder %v830, 8.507059e+37
        %v832 = vand.u32 %v820, 2147483648
        %v833 = vor.u32 1.1754944e-38, %v832
        %v834 = vsel %vm831, %v833, %v829
        %v835 = vmul.f32 1.0, %v834
        %v837 = vrot.slane %v707, 2
        %v839 = vadd.f32 %v837, %v794
        %v840 = vxor.u32 %v839, 2147483648
        %v841 = vmul.f32 %v840, 1.442695
        %v842 = vpow.pop %v841
        %v843 = vadd.f32 %v842, 1.0
        %v844 = vrcp.pop %v843
        %v845 = vmul.f32 %v843, %v844
        %v846 = vsub.f32 1.0, %v845
        %v847 = vmul.f32 %v844, %v846
        %v848 = vadd.f32 %v844, %v847
        %vm849 = vweird.f32 %v843
        %vm850 = vweird.f32 %v844
        %vm851 = vmor %vm849, %vm850
        %v852 = vsel %vm851, %v844, %v848
        %v853 = vand.u32 2147483647, %v843
        %vm854 = vcmp.eq.f32.partialorder %v853, 8.507059e+37
        %v855 = vand.u32 %v843, 2147483648
        %v856 = vor.u32 1.1754944e-38, %v855
        %v857 = vsel %vm854, %v856, %v852
        %v858 = vmul.f32 1.0, %v857
        %v859 = vadd.f32 %v814, %v519
        %v860 = vmul.f32 %v835, %v859
        %v861 = vrot.slane %v707, 4
        %v863 = vadd.f32 %v861, %v860
        %v864 = vtanh.pop %v863
        %v865 = vsub.f32 %v698, %v864
        %v866 = vmul.f32 %v858, %v865
        %v867 = vadd.f32 %v864, %v866
        %s868 = smul.u32 %s703, 2
        %s869 = scalar_lea.vmem %s349, %s868
        %870 = vst [vmem:[%s869] sm:$0x3] %v867
        %s871 = sadd.s32 %s26, 3
        %s872 = smul.u32 %s871, 3
        %s873 = smul.addr %s872, 2
        %s874 = scalar_lea.vmem %s328, %s873
        %v875 = vld [vmem:[%s874] sm:$0x3f]
        %v876 = vld [vmem:[%s259] sm:$0xff]
        %v877 = vld [vmem:[%s259 + $0x8] sm:$0xff]
        %v878 = vld [vmem:[%s259 + $0x10] sm:$0xff]
        %v879 = vld [vmem:[%s259 + $0x18] sm:$0xff]
        %v880 = vld [vmem:[%s259 + $0x20] sm:$0xff]
        %v881 = vld [vmem:[%s259 + $0x28] sm:$0xff]
        %v882 = vld [vmem:[%s259 + $0x30] sm:$0xff]
        %v883 = vld [vmem:[%s259 + $0x38] sm:$0xff]
        %v884 = vld [vmem:[%s259 + $0x40] sm:$0xff]
        %v885 = vld [vmem:[%s259 + $0x48] sm:$0xff]
        %v886 = vld [vmem:[%s259 + $0x50] sm:$0xff]
        %v887 = vld [vmem:[%s259 + $0x58] sm:$0xff]
        %v888 = vld [vmem:[%s259 + $0x60] sm:$0xff]
        %v889 = vld [vmem:[%s259 + $0x68] sm:$0xff]
        %v890 = vld [vmem:[%s259 + $0x70] sm:$0xff]
        %v891 = vld [vmem:[%s259 + $0x78] sm:$0xff]
        %v892 = vld [vmem:[%s259 + $0x80] sm:$0xff]
        %v893 = vld [vmem:[%s259 + $0x88] sm:$0xff]
        %v894 = vld [vmem:[%s259 + $0x90] sm:$0xff]
        %v895 = vld [vmem:[%s259 + $0x98] sm:$0xff]
        %v896 = vld [vmem:[%s259 + $0xa0] sm:$0xff]
        %v897 = vld [vmem:[%s259 + $0xa8] sm:$0xff]
        %v898 = vld [vmem:[%s259 + $0xb0] sm:$0xff]
        %v899 = vld [vmem:[%s259 + $0xb8] sm:$0xff]
        %v900 = vld [vmem:[%s259 + $0xc0] sm:$0xff]
        %v901 = vld [vmem:[%s259 + $0xc8] sm:$0xff]
        %v902 = vld [vmem:[%s259 + $0xd0] sm:$0xff]
        %v903 = vld [vmem:[%s259 + $0xd8] sm:$0xff]
        %v904 = vld [vmem:[%s259 + $0xe0] sm:$0xff]
        %v905 = vld [vmem:[%s259 + $0xe8] sm:$0xff]
        %v906 = vld [vmem:[%s259 + $0xf0] sm:$0xff]
        %v907 = vld [vmem:[%s259 + $0xf8] sm:$0xff]
        %v908 = vld [vmem:[%s259 + $0x100] sm:$0xff]
        %v909 = vld [vmem:[%s259 + $0x108] sm:$0xff]
        %v910 = vld [vmem:[%s259 + $0x110] sm:$0xff]
        %v911 = vld [vmem:[%s259 + $0x118] sm:$0xff]
        %v912 = vld [vmem:[%s259 + $0x120] sm:$0xff]
        %v913 = vld [vmem:[%s259 + $0x128] sm:$0xff]
        %v914 = vld [vmem:[%s259 + $0x130] sm:$0xff]
        %v915 = vld [vmem:[%s259 + $0x138] sm:$0xff]
        %v916 = vld [vmem:[%s259 + $0x140] sm:$0xff]
        %v917 = vld [vmem:[%s259 + $0x148] sm:$0xff]
        %v918 = vld [vmem:[%s259 + $0x150] sm:$0xff]
        %v919 = vld [vmem:[%s259 + $0x158] sm:$0xff]
        %v920 = vld [vmem:[%s259 + $0x160] sm:$0xff]
        %v921 = vld [vmem:[%s259 + $0x168] sm:$0xff]
        %v922 = vld [vmem:[%s259 + $0x170] sm:$0xff]
        %v923 = vld [vmem:[%s259 + $0x178] sm:$0xff]
        %924 = vmatpush.msra.mxu0 %v921
        %925 = vmatpush.msra.mxu0 %v918
        %926 = vmatpush.msra.mxu0 %v915
        %927 = vmatpush.msra.mxu0 %v912
        %928 = vmatpush.msra.mxu0 %v909
        %929 = vmatpush.msra.mxu0 %v906
        %930 = vmatpush.msra.mxu0 %v903
        %931 = vmatpush.msra.mxu0 %v900
        %932 = vmatpush.msra.mxu0 %v897
        %933 = vmatpush.msra.mxu0 %v894
        %934 = vmatpush.msra.mxu0 %v891
        %935 = vmatpush.msra.mxu0 %v888
        %936 = vmatpush.msra.mxu0 %v885
        %937 = vmatpush.msra.mxu0 %v882
        %938 = vmatpush.msra.mxu0 %v879
        %939 = vmatpush.msra.mxu0 %v876
        %940 = vmatmul.f32.gmra.mxu0 %v867
        %v941 = vpop.f32.mrf.mxu0
        %v942 = vadd.f32 0.0, %v941
        %943 = vdwg.mxu0
        %944 = vmatpush.msra.mxu0 %v922
        %945 = vmatpush.msra.mxu0 %v919
        %946 = vmatpush.msra.mxu0 %v916
        %947 = vmatpush.msra.mxu0 %v913
        %948 = vmatpush.msra.mxu0 %v910
        %949 = vmatpush.msra.mxu0 %v907
        %950 = vmatpush.msra.mxu0 %v904
        %951 = vmatpush.msra.mxu0 %v901
        %952 = vmatpush.msra.mxu0 %v898
        %953 = vmatpush.msra.mxu0 %v895
        %954 = vmatpush.msra.mxu0 %v892
        %955 = vmatpush.msra.mxu0 %v889
        %956 = vmatpush.msra.mxu0 %v886
        %957 = vmatpush.msra.mxu0 %v883
        %958 = vmatpush.msra.mxu0 %v880
        %959 = vmatpush.msra.mxu0 %v877
        %960 = vmatmul.f32.gmra.mxu0 %v867
        %v961 = vpop.f32.mrf.mxu0
        %v962 = vadd.f32 0.0, %v961
        %963 = vdwg.mxu0
        %964 = vmatpush.msra.mxu0 %v923
        %965 = vmatpush.msra.mxu0 %v920
        %966 = vmatpush.msra.mxu0 %v917
        %967 = vmatpush.msra.mxu0 %v914
        %968 = vmatpush.msra.mxu0 %v911
        %969 = vmatpush.msra.mxu0 %v908
        %970 = vmatpush.msra.mxu0 %v905
        %971 = vmatpush.msra.mxu0 %v902
        %972 = vmatpush.msra.mxu0 %v899
        %973 = vmatpush.msra.mxu0 %v896
        %974 = vmatpush.msra.mxu0 %v893
        %975 = vmatpush.msra.mxu0 %v890
        %976 = vmatpush.msra.mxu0 %v887
        %977 = vmatpush.msra.mxu0 %v884
        %978 = vmatpush.msra.mxu0 %v881
        %979 = vmatpush.msra.mxu0 %v878
        %980 = vmatmul.f32.gmra.mxu0 %v867
        %v981 = vpop.f32.mrf.mxu0
        %v982 = vadd.f32 0.0, %v981
        %983 = vdwg.mxu0
        %v984 = vadd.f32 %v875, %v942
        %v985 = vxor.u32 %v984, 2147483648
        %v986 = vmul.f32 %v985, 1.442695
        %v987 = vpow.pop %v986
        %v988 = vadd.f32 %v987, 1.0
        %v989 = vrcp.pop %v988
        %v990 = vmul.f32 %v988, %v989
        %v991 = vsub.f32 1.0, %v990
        %v992 = vmul.f32 %v989, %v991
        %v993 = vadd.f32 %v989, %v992
        %vm994 = vweird.f32 %v988
        %vm995 = vweird.f32 %v989
        %vm996 = vmor %vm994, %vm995
        %v997 = vsel %vm996, %v989, %v993
        %v998 = vand.u32 2147483647, %v988
        %vm999 = vcmp.eq.f32.partialorder %v998, 8.507059e+37
        %v1000 = vand.u32 %v988, 2147483648
        %v1001 = vor.u32 1.1754944e-38, %v1000
        %v1002 = vsel %vm999, %v1001, %v997
        %v1003 = vmul.f32 1.0, %v1002
        %v1005 = vrot.slane %v875, 2
        %v1007 = vadd.f32 %v1005, %v962
        %v1008 = vxor.u32 %v1007, 2147483648
        %v1009 = vmul.f32 %v1008, 1.442695
        %v1010 = vpow.pop %v1009
        %v1011 = vadd.f32 %v1010, 1.0
        %v1012 = vrcp.pop %v1011
        %v1013 = vmul.f32 %v1011, %v1012
        %v1014 = vsub.f32 1.0, %v1013
        %v1015 = vmul.f32 %v1012, %v1014
        %v1016 = vadd.f32 %v1012, %v1015
        %vm1017 = vweird.f32 %v1011
        %vm1018 = vweird.f32 %v1012
        %vm1019 = vmor %vm1017, %vm1018
        %v1020 = vsel %vm1019, %v1012, %v1016
        %v1021 = vand.u32 2147483647, %v1011
        %vm1022 = vcmp.eq.f32.partialorder %v1021, 8.507059e+37
        %v1023 = vand.u32 %v1011, 2147483648
        %v1024 = vor.u32 1.1754944e-38, %v1023
        %v1025 = vsel %vm1022, %v1024, %v1020
        %v1026 = vmul.f32 1.0, %v1025
        %v1027 = vadd.f32 %v982, %v519
        %v1028 = vmul.f32 %v1003, %v1027
        %v1029 = vrot.slane %v875, 4
        %v1031 = vadd.f32 %v1029, %v1028
        %v1032 = vtanh.pop %v1031
        %v1033 = vsub.f32 %v867, %v1032
        %v1034 = vmul.f32 %v1026, %v1033
        %v1035 = vadd.f32 %v1032, %v1034
        %s1036 = smul.u32 %s871, 2
        %s1037 = scalar_lea.vmem %s349, %s1036
        %1038 = vst [vmem:[%s1037] sm:$0x3] %v1035
        %s1039 = ssub.s32 4, %s26
        %s1040 = smul.u32 %s1039, 3
        %s1041 = smul.addr %s1040, 2
        %s1042 = scalar_lea.vmem %s328, %s1041
        %v1043 = vld [vmem:[%s1042] sm:$0x3f]
        %v1044 = vld [vmem:[%s259] sm:$0xff]
        %v1045 = vld [vmem:[%s259 + $0x8] sm:$0xff]
        %v1046 = vld [vmem:[%s259 + $0x10] sm:$0xff]
        %v1047 = vld [vmem:[%s259 + $0x18] sm:$0xff]
        %v1048 = vld [vmem:[%s259 + $0x20] sm:$0xff]
        %v1049 = vld [vmem:[%s259 + $0x28] sm:$0xff]
        %v1050 = vld [vmem:[%s259 + $0x30] sm:$0xff]
        %v1051 = vld [vmem:[%s259 + $0x38] sm:$0xff]
        %v1052 = vld [vmem:[%s259 + $0x40] sm:$0xff]
        %v1053 = vld [vmem:[%s259 + $0x48] sm:$0xff]
        %v1054 = vld [vmem:[%s259 + $0x50] sm:$0xff]
        %v1055 = vld [vmem:[%s259 + $0x58] sm:$0xff]
        %v1056 = vld [vmem:[%s259 + $0x60] sm:$0xff]
        %v1057 = vld [vmem:[%s259 + $0x68] sm:$0xff]
        %v1058 = vld [vmem:[%s259 + $0x70] sm:$0xff]
        %v1059 = vld [vmem:[%s259 + $0x78] sm:$0xff]
        %v1060 = vld [vmem:[%s259 + $0x80] sm:$0xff]
        %v1061 = vld [vmem:[%s259 + $0x88] sm:$0xff]
        %v1062 = vld [vmem:[%s259 + $0x90] sm:$0xff]
        %v1063 = vld [vmem:[%s259 + $0x98] sm:$0xff]
        %v1064 = vld [vmem:[%s259 + $0xa0] sm:$0xff]
        %v1065 = vld [vmem:[%s259 + $0xa8] sm:$0xff]
        %v1066 = vld [vmem:[%s259 + $0xb0] sm:$0xff]
        %v1067 = vld [vmem:[%s259 + $0xb8] sm:$0xff]
        %v1068 = vld [vmem:[%s259 + $0xc0] sm:$0xff]
        %v1069 = vld [vmem:[%s259 + $0xc8] sm:$0xff]
        %v1070 = vld [vmem:[%s259 + $0xd0] sm:$0xff]
        %v1071 = vld [vmem:[%s259 + $0xd8] sm:$0xff]
        %v1072 = vld [vmem:[%s259 + $0xe0] sm:$0xff]
        %v1073 = vld [vmem:[%s259 + $0xe8] sm:$0xff]
        %v1074 = vld [vmem:[%s259 + $0xf0] sm:$0xff]
        %v1075 = vld [vmem:[%s259 + $0xf8] sm:$0xff]
        %v1076 = vld [vmem:[%s259 + $0x100] sm:$0xff]
        %v1077 = vld [vmem:[%s259 + $0x108] sm:$0xff]
        %v1078 = vld [vmem:[%s259 + $0x110] sm:$0xff]
        %v1079 = vld [vmem:[%s259 + $0x118] sm:$0xff]
        %v1080 = vld [vmem:[%s259 + $0x120] sm:$0xff]
        %v1081 = vld [vmem:[%s259 + $0x128] sm:$0xff]
        %v1082 = vld [vmem:[%s259 + $0x130] sm:$0xff]
        %v1083 = vld [vmem:[%s259 + $0x138] sm:$0xff]
        %v1084 = vld [vmem:[%s259 + $0x140] sm:$0xff]
        %v1085 = vld [vmem:[%s259 + $0x148] sm:$0xff]
        %v1086 = vld [vmem:[%s259 + $0x150] sm:$0xff]
        %v1087 = vld [vmem:[%s259 + $0x158] sm:$0xff]
        %v1088 = vld [vmem:[%s259 + $0x160] sm:$0xff]
        %v1089 = vld [vmem:[%s259 + $0x168] sm:$0xff]
        %v1090 = vld [vmem:[%s259 + $0x170] sm:$0xff]
        %v1091 = vld [vmem:[%s259 + $0x178] sm:$0xff]
        %1092 = vmatpush.msra.mxu0 %v1089
        %1093 = vmatpush.msra.mxu0 %v1086
        %1094 = vmatpush.msra.mxu0 %v1083
        %1095 = vmatpush.msra.mxu0 %v1080
        %1096 = vmatpush.msra.mxu0 %v1077
        %1097 = vmatpush.msra.mxu0 %v1074
        %1098 = vmatpush.msra.mxu0 %v1071
        %1099 = vmatpush.msra.mxu0 %v1068
        %1100 = vmatpush.msra.mxu0 %v1065
        %1101 = vmatpush.msra.mxu0 %v1062
        %1102 = vmatpush.msra.mxu0 %v1059
        %1103 = vmatpush.msra.mxu0 %v1056
        %1104 = vmatpush.msra.mxu0 %v1053
        %1105 = vmatpush.msra.mxu0 %v1050
        %1106 = vmatpush.msra.mxu0 %v1047
        %1107 = vmatpush.msra.mxu0 %v1044
        %1108 = vmatmul.f32.gmra.mxu0 %v1035
        %v1109 = vpop.f32.mrf.mxu0
        %v1110 = vadd.f32 0.0, %v1109
        %1111 = vdwg.mxu0
        %1112 = vmatpush.msra.mxu0 %v1090
        %1113 = vmatpush.msra.mxu0 %v1087
        %1114 = vmatpush.msra.mxu0 %v1084
        %1115 = vmatpush.msra.mxu0 %v1081
        %1116 = vmatpush.msra.mxu0 %v1078
        %1117 = vmatpush.msra.mxu0 %v1075
        %1118 = vmatpush.msra.mxu0 %v1072
        %1119 = vmatpush.msra.mxu0 %v1069
        %1120 = vmatpush.msra.mxu0 %v1066
        %1121 = vmatpush.msra.mxu0 %v1063
        %1122 = vmatpush.msra.mxu0 %v1060
        %1123 = vmatpush.msra.mxu0 %v1057
        %1124 = vmatpush.msra.mxu0 %v1054
        %1125 = vmatpush.msra.mxu0 %v1051
        %1126 = vmatpush.msra.mxu0 %v1048
        %1127 = vmatpush.msra.mxu0 %v1045
        %1128 = vmatmul.f32.gmra.mxu0 %v1035
        %v1129 = vpop.f32.mrf.mxu0
        %v1130 = vadd.f32 0.0, %v1129
        %1131 = vdwg.mxu0
        %1132 = vmatpush.msra.mxu0 %v1091
        %1133 = vmatpush.msra.mxu0 %v1088
        %1134 = vmatpush.msra.mxu0 %v1085
        %1135 = vmatpush.msra.mxu0 %v1082
        %1136 = vmatpush.msra.mxu0 %v1079
        %1137 = vmatpush.msra.mxu0 %v1076
        %1138 = vmatpush.msra.mxu0 %v1073
        %1139 = vmatpush.msra.mxu0 %v1070
        %1140 = vmatpush.msra.mxu0 %v1067
        %1141 = vmatpush.msra.mxu0 %v1064
        %1142 = vmatpush.msra.mxu0 %v1061
        %1143 = vmatpush.msra.mxu0 %v1058
        %1144 = vmatpush.msra.mxu0 %v1055
        %1145 = vmatpush.msra.mxu0 %v1052
        %1146 = vmatpush.msra.mxu0 %v1049
        %1147 = vmatpush.msra.mxu0 %v1046
        %1148 = vmatmul.f32.gmra.mxu0 %v1035
        %v1149 = vpop.f32.mrf.mxu0
        %v1150 = vadd.f32 0.0, %v1149
        %1151 = vdwg.mxu0
        %v1152 = vadd.f32 %v1043, %v1110
        %v1153 = vxor.u32 %v1152, 2147483648
        %v1154 = vmul.f32 %v1153, 1.442695
        %v1155 = vpow.pop %v1154
        %v1156 = vadd.f32 %v1155, 1.0
        %v1157 = vrcp.pop %v1156
        %v1158 = vmul.f32 %v1156, %v1157
        %v1159 = vsub.f32 1.0, %v1158
        %v1160 = vmul.f32 %v1157, %v1159
        %v1161 = vadd.f32 %v1157, %v1160
        %vm1162 = vweird.f32 %v1156
        %vm1163 = vweird.f32 %v1157
        %vm1164 = vmor %vm1162, %vm1163
        %v1165 = vsel %vm1164, %v1157, %v1161
        %v1166 = vand.u32 2147483647, %v1156
        %vm1167 = vcmp.eq.f32.partialorder %v1166, 8.507059e+37
        %v1168 = vand.u32 %v1156, 2147483648
        %v1169 = vor.u32 1.1754944e-38, %v1168
        %v1170 = vsel %vm1167, %v1169, %v1165
        %v1171 = vmul.f32 1.0, %v1170
        %v1173 = vrot.slane %v1043, 2
        %v1175 = vadd.f32 %v1173, %v1130
        %v1176 = vxor.u32 %v1175, 2147483648
        %v1177 = vmul.f32 %v1176, 1.442695
        %v1178 = vpow.pop %v1177
        %v1179 = vadd.f32 %v1178, 1.0
        %v1180 = vrcp.pop %v1179
        %v1181 = vmul.f32 %v1179, %v1180
        %v1182 = vsub.f32 1.0, %v1181
        %v1183 = vmul.f32 %v1180, %v1182
        %v1184 = vadd.f32 %v1180, %v1183
        %vm1185 = vweird.f32 %v1179
        %vm1186 = vweird.f32 %v1180
        %vm1187 = vmor %vm1185, %vm1186
        %v1188 = vsel %vm1187, %v1180, %v1184
        %v1189 = vand.u32 2147483647, %v1179
        %vm1190 = vcmp.eq.f32.partialorder %v1189, 8.507059e+37
        %v1191 = vand.u32 %v1179, 2147483648
        %v1192 = vor.u32 1.1754944e-38, %v1191
        %v1193 = vsel %vm1190, %v1192, %v1188
        %v1194 = vmul.f32 1.0, %v1193
        %v1195 = vadd.f32 %v1150, %v519
        %v1196 = vmul.f32 %v1171, %v1195
        %v1197 = vrot.slane %v1043, 4
        %v1199 = vadd.f32 %v1197, %v1196
        %v1200 = vtanh.pop %v1199
        %v1201 = vsub.f32 %v1035, %v1200
        %v1202 = vmul.f32 %v1194, %v1201
        %v1203 = vadd.f32 %v1200, %v1202
        %s1204 = smul.u32 %s1039, 2
        %s1205 = scalar_lea.vmem %s349, %s1204
        %1206 = vst [vmem:[%s1205] sm:$0x3] %v1203
        %s1207 = smul.u32 %s26, 4294967293
        %s1208 = sadd.s32 %s1207, 5
        %s1209 = smul.u32 %s1208, 3
        %s1210 = smul.addr %s1209, 2
        %s1211 = scalar_lea.vmem %s328, %s1210
        %v1212 = vld [vmem:[%s1211] sm:$0x3f]
        %v1213 = vld [vmem:[%s259] sm:$0xff]
        %v1214 = vld [vmem:[%s259 + $0x8] sm:$0xff]
        %v1215 = vld [vmem:[%s259 + $0x10] sm:$0xff]
        %v1216 = vld [vmem:[%s259 + $0x18] sm:$0xff]
        %v1217 = vld [vmem:[%s259 + $0x20] sm:$0xff]
        %v1218 = vld [vmem:[%s259 + $0x28] sm:$0xff]
        %v1219 = vld [vmem:[%s259 + $0x30] sm:$0xff]
        %v1220 = vld [vmem:[%s259 + $0x38] sm:$0xff]
        %v1221 = vld [vmem:[%s259 + $0x40] sm:$0xff]
        %v1222 = vld [vmem:[%s259 + $0x48] sm:$0xff]
        %v1223 = vld [vmem:[%s259 + $0x50] sm:$0xff]
        %v1224 = vld [vmem:[%s259 + $0x58] sm:$0xff]
        %v1225 = vld [vmem:[%s259 + $0x60] sm:$0xff]
        %v1226 = vld [vmem:[%s259 + $0x68] sm:$0xff]
        %v1227 = vld [vmem:[%s259 + $0x70] sm:$0xff]
        %v1228 = vld [vmem:[%s259 + $0x78] sm:$0xff]
        %v1229 = vld [vmem:[%s259 + $0x80] sm:$0xff]
        %v1230 = vld [vmem:[%s259 + $0x88] sm:$0xff]
        %v1231 = vld [vmem:[%s259 + $0x90] sm:$0xff]
        %v1232 = vld [vmem:[%s259 + $0x98] sm:$0xff]
        %v1233 = vld [vmem:[%s259 + $0xa0] sm:$0xff]
        %v1234 = vld [vmem:[%s259 + $0xa8] sm:$0xff]
        %v1235 = vld [vmem:[%s259 + $0xb0] sm:$0xff]
        %v1236 = vld [vmem:[%s259 + $0xb8] sm:$0xff]
        %v1237 = vld [vmem:[%s259 + $0xc0] sm:$0xff]
        %v1238 = vld [vmem:[%s259 + $0xc8] sm:$0xff]
        %v1239 = vld [vmem:[%s259 + $0xd0] sm:$0xff]
        %v1240 = vld [vmem:[%s259 + $0xd8] sm:$0xff]
        %v1241 = vld [vmem:[%s259 + $0xe0] sm:$0xff]
        %v1242 = vld [vmem:[%s259 + $0xe8] sm:$0xff]
        %v1243 = vld [vmem:[%s259 + $0xf0] sm:$0xff]
        %v1244 = vld [vmem:[%s259 + $0xf8] sm:$0xff]
        %v1245 = vld [vmem:[%s259 + $0x100] sm:$0xff]
        %v1246 = vld [vmem:[%s259 + $0x108] sm:$0xff]
        %v1247 = vld [vmem:[%s259 + $0x110] sm:$0xff]
        %v1248 = vld [vmem:[%s259 + $0x118] sm:$0xff]
        %v1249 = vld [vmem:[%s259 + $0x120] sm:$0xff]
        %v1250 = vld [vmem:[%s259 + $0x128] sm:$0xff]
        %v1251 = vld [vmem:[%s259 + $0x130] sm:$0xff]
        %v1252 = vld [vmem:[%s259 + $0x138] sm:$0xff]
        %v1253 = vld [vmem:[%s259 + $0x140] sm:$0xff]
        %v1254 = vld [vmem:[%s259 + $0x148] sm:$0xff]
        %v1255 = vld [vmem:[%s259 + $0x150] sm:$0xff]
        %v1256 = vld [vmem:[%s259 + $0x158] sm:$0xff]
        %v1257 = vld [vmem:[%s259 + $0x160] sm:$0xff]
        %v1258 = vld [vmem:[%s259 + $0x168] sm:$0xff]
        %v1259 = vld [vmem:[%s259 + $0x170] sm:$0xff]
        %v1260 = vld [vmem:[%s259 + $0x178] sm:$0xff]
        %1261 = vmatpush.msra.mxu0 %v1258
        %1262 = vmatpush.msra.mxu0 %v1255
        %1263 = vmatpush.msra.mxu0 %v1252
        %1264 = vmatpush.msra.mxu0 %v1249
        %1265 = vmatpush.msra.mxu0 %v1246
        %1266 = vmatpush.msra.mxu0 %v1243
        %1267 = vmatpush.msra.mxu0 %v1240
        %1268 = vmatpush.msra.mxu0 %v1237
        %1269 = vmatpush.msra.mxu0 %v1234
        %1270 = vmatpush.msra.mxu0 %v1231
        %1271 = vmatpush.msra.mxu0 %v1228
        %1272 = vmatpush.msra.mxu0 %v1225
        %1273 = vmatpush.msra.mxu0 %v1222
        %1274 = vmatpush.msra.mxu0 %v1219
        %1275 = vmatpush.msra.mxu0 %v1216
        %1276 = vmatpush.msra.mxu0 %v1213
        %1277 = vmatmul.f32.gmra.mxu0 %v1203
        %v1278 = vpop.f32.mrf.mxu0
        %v1279 = vadd.f32 0.0, %v1278
        %1280 = vdwg.mxu0
        %1281 = vmatpush.msra.mxu0 %v1259
        %1282 = vmatpush.msra.mxu0 %v1256
        %1283 = vmatpush.msra.mxu0 %v1253
        %1284 = vmatpush.msra.mxu0 %v1250
        %1285 = vmatpush.msra.mxu0 %v1247
        %1286 = vmatpush.msra.mxu0 %v1244
        %1287 = vmatpush.msra.mxu0 %v1241
        %1288 = vmatpush.msra.mxu0 %v1238
        %1289 = vmatpush.msra.mxu0 %v1235
        %1290 = vmatpush.msra.mxu0 %v1232
        %1291 = vmatpush.msra.mxu0 %v1229
        %1292 = vmatpush.msra.mxu0 %v1226
        %1293 = vmatpush.msra.mxu0 %v1223
        %1294 = vmatpush.msra.mxu0 %v1220
        %1295 = vmatpush.msra.mxu0 %v1217
        %1296 = vmatpush.msra.mxu0 %v1214
        %1297 = vmatmul.f32.gmra.mxu0 %v1203
        %v1298 = vpop.f32.mrf.mxu0
        %v1299 = vadd.f32 0.0, %v1298
        %1300 = vdwg.mxu0
        %1301 = vmatpush.msra.mxu0 %v1260
        %1302 = vmatpush.msra.mxu0 %v1257
        %1303 = vmatpush.msra.mxu0 %v1254
        %1304 = vmatpush.msra.mxu0 %v1251
        %1305 = vmatpush.msra.mxu0 %v1248
        %1306 = vmatpush.msra.mxu0 %v1245
        %1307 = vmatpush.msra.mxu0 %v1242
        %1308 = vmatpush.msra.mxu0 %v1239
        %1309 = vmatpush.msra.mxu0 %v1236
        %1310 = vmatpush.msra.mxu0 %v1233
        %1311 = vmatpush.msra.mxu0 %v1230
        %1312 = vmatpush.msra.mxu0 %v1227
        %1313 = vmatpush.msra.mxu0 %v1224
        %1314 = vmatpush.msra.mxu0 %v1221
        %1315 = vmatpush.msra.mxu0 %v1218
        %1316 = vmatpush.msra.mxu0 %v1215
        %1317 = vmatmul.f32.gmra.mxu0 %v1203
        %v1318 = vpop.f32.mrf.mxu0
        %v1319 = vadd.f32 0.0, %v1318
        %1320 = vdwg.mxu0
        %v1321 = vadd.f32 %v1212, %v1279
        %v1322 = vxor.u32 %v1321, 2147483648
        %v1323 = vmul.f32 %v1322, 1.442695
        %v1324 = vpow.pop %v1323
        %v1325 = vadd.f32 %v1324, 1.0
        %v1326 = vrcp.pop %v1325
        %v1327 = vmul.f32 %v1325, %v1326
        %v1328 = vsub.f32 1.0, %v1327
        %v1329 = vmul.f32 %v1326, %v1328
        %v1330 = vadd.f32 %v1326, %v1329
        %vm1331 = vweird.f32 %v1325
        %vm1332 = vweird.f32 %v1326
        %vm1333 = vmor %vm1331, %vm1332
        %v1334 = vsel %vm1333, %v1326, %v1330
        %v1335 = vand.u32 2147483647, %v1325
        %vm1336 = vcmp.eq.f32.partialorder %v1335, 8.507059e+37
        %v1337 = vand.u32 %v1325, 2147483648
        %v1338 = vor.u32 1.1754944e-38, %v1337
        %v1339 = vsel %vm1336, %v1338, %v1334
        %v1340 = vmul.f32 1.0, %v1339
        %v1342 = vrot.slane %v1212, 2
        %v1344 = vadd.f32 %v1342, %v1299
        %v1345 = vxor.u32 %v1344, 2147483648
        %v1346 = vmul.f32 %v1345, 1.442695
        %v1347 = vpow.pop %v1346
        %v1348 = vadd.f32 %v1347, 1.0
        %v1349 = vrcp.pop %v1348
        %v1350 = vmul.f32 %v1348, %v1349
        %v1351 = vsub.f32 1.0, %v1350
        %v1352 = vmul.f32 %v1349, %v1351
        %v1353 = vadd.f32 %v1349, %v1352
        %vm1354 = vweird.f32 %v1348
        %vm1355 = vweird.f32 %v1349
        %vm1356 = vmor %vm1354, %vm1355
        %v1357 = vsel %vm1356, %v1349, %v1353
        %v1358 = vand.u32 2147483647, %v1348
        %vm1359 = vcmp.eq.f32.partialorder %v1358, 8.507059e+37
        %v1360 = vand.u32 %v1348, 2147483648
        %v1361 = vor.u32 1.1754944e-38, %v1360
        %v1362 = vsel %vm1359, %v1361, %v1357
        %v1363 = vmul.f32 1.0, %v1362
        %v1364 = vadd.f32 %v1319, %v519
        %v1365 = vmul.f32 %v1340, %v1364
        %v1366 = vrot.slane %v1212, 4
        %v1368 = vadd.f32 %v1366, %v1365
        %v1369 = vtanh.pop %v1368
        %v1370 = vsub.f32 %v1203, %v1369
        %v1371 = vmul.f32 %v1363, %v1370
        %v1372 = vadd.f32 %v1369, %v1371
        %s1373 = smul.u32 %s1208, 2
        %s1374 = scalar_lea.vmem %s349, %s1373
        %1375 = vst [vmem:[%s1374] sm:$0x3] %v1372
        %s1376 = smul.u32 %s26, 4294967291
        %s1377 = sadd.s32 %s1376, 6
        %s1378 = smul.u32 %s1377, 3
        %s1379 = smul.addr %s1378, 2
        %s1380 = scalar_lea.vmem %s328, %s1379
        %v1381 = vld [vmem:[%s1380] sm:$0x3f]
        %v1382 = vld [vmem:[%s259] sm:$0xff]
        %v1383 = vld [vmem:[%s259 + $0x8] sm:$0xff]
        %v1384 = vld [vmem:[%s259 + $0x10] sm:$0xff]
        %v1385 = vld [vmem:[%s259 + $0x18] sm:$0xff]
        %v1386 = vld [vmem:[%s259 + $0x20] sm:$0xff]
        %v1387 = vld [vmem:[%s259 + $0x28] sm:$0xff]
        %v1388 = vld [vmem:[%s259 + $0x30] sm:$0xff]
        %v1389 = vld [vmem:[%s259 + $0x38] sm:$0xff]
        %v1390 = vld [vmem:[%s259 + $0x40] sm:$0xff]
        %v1391 = vld [vmem:[%s259 + $0x48] sm:$0xff]
        %v1392 = vld [vmem:[%s259 + $0x50] sm:$0xff]
        %v1393 = vld [vmem:[%s259 + $0x58] sm:$0xff]
        %v1394 = vld [vmem:[%s259 + $0x60] sm:$0xff]
        %v1395 = vld [vmem:[%s259 + $0x68] sm:$0xff]
        %v1396 = vld [vmem:[%s259 + $0x70] sm:$0xff]
        %v1397 = vld [vmem:[%s259 + $0x78] sm:$0xff]
        %v1398 = vld [vmem:[%s259 + $0x80] sm:$0xff]
        %v1399 = vld [vmem:[%s259 + $0x88] sm:$0xff]
        %v1400 = vld [vmem:[%s259 + $0x90] sm:$0xff]
        %v1401 = vld [vmem:[%s259 + $0x98] sm:$0xff]
        %v1402 = vld [vmem:[%s259 + $0xa0] sm:$0xff]
        %v1403 = vld [vmem:[%s259 + $0xa8] sm:$0xff]
        %v1404 = vld [vmem:[%s259 + $0xb0] sm:$0xff]
        %v1405 = vld [vmem:[%s259 + $0xb8] sm:$0xff]
        %v1406 = vld [vmem:[%s259 + $0xc0] sm:$0xff]
        %v1407 = vld [vmem:[%s259 + $0xc8] sm:$0xff]
        %v1408 = vld [vmem:[%s259 + $0xd0] sm:$0xff]
        %v1409 = vld [vmem:[%s259 + $0xd8] sm:$0xff]
        %v1410 = vld [vmem:[%s259 + $0xe0] sm:$0xff]
        %v1411 = vld [vmem:[%s259 + $0xe8] sm:$0xff]
        %v1412 = vld [vmem:[%s259 + $0xf0] sm:$0xff]
        %v1413 = vld [vmem:[%s259 + $0xf8] sm:$0xff]
        %v1414 = vld [vmem:[%s259 + $0x100] sm:$0xff]
        %v1415 = vld [vmem:[%s259 + $0x108] sm:$0xff]
        %v1416 = vld [vmem:[%s259 + $0x110] sm:$0xff]
        %v1417 = vld [vmem:[%s259 + $0x118] sm:$0xff]
        %v1418 = vld [vmem:[%s259 + $0x120] sm:$0xff]
        %v1419 = vld [vmem:[%s259 + $0x128] sm:$0xff]
        %v1420 = vld [vmem:[%s259 + $0x130] sm:$0xff]
        %v1421 = vld [vmem:[%s259 + $0x138] sm:$0xff]
        %v1422 = vld [vmem:[%s259 + $0x140] sm:$0xff]
        %v1423 = vld [vmem:[%s259 + $0x148] sm:$0xff]
        %v1424 = vld [vmem:[%s259 + $0x150] sm:$0xff]
        %v1425 = vld [vmem:[%s259 + $0x158] sm:$0xff]
        %v1426 = vld [vmem:[%s259 + $0x160] sm:$0xff]
        %v1427 = vld [vmem:[%s259 + $0x168] sm:$0xff]
        %v1428 = vld [vmem:[%s259 + $0x170] sm:$0xff]
        %v1429 = vld [vmem:[%s259 + $0x178] sm:$0xff]
        %1430 = vmatpush.msra.mxu0 %v1427
        %1431 = vmatpush.msra.mxu0 %v1424
        %1432 = vmatpush.msra.mxu0 %v1421
        %1433 = vmatpush.msra.mxu0 %v1418
        %1434 = vmatpush.msra.mxu0 %v1415
        %1435 = vmatpush.msra.mxu0 %v1412
        %1436 = vmatpush.msra.mxu0 %v1409
        %1437 = vmatpush.msra.mxu0 %v1406
        %1438 = vmatpush.msra.mxu0 %v1403
        %1439 = vmatpush.msra.mxu0 %v1400
        %1440 = vmatpush.msra.mxu0 %v1397
        %1441 = vmatpush.msra.mxu0 %v1394
        %1442 = vmatpush.msra.mxu0 %v1391
        %1443 = vmatpush.msra.mxu0 %v1388
        %1444 = vmatpush.msra.mxu0 %v1385
        %1445 = vmatpush.msra.mxu0 %v1382
        %1446 = vmatmul.f32.gmra.mxu0 %v1372
        %v1447 = vpop.f32.mrf.mxu0
        %v1448 = vadd.f32 0.0, %v1447
        %1449 = vdwg.mxu0
        %1450 = vmatpush.msra.mxu0 %v1428
        %1451 = vmatpush.msra.mxu0 %v1425
        %1452 = vmatpush.msra.mxu0 %v1422
        %1453 = vmatpush.msra.mxu0 %v1419
        %1454 = vmatpush.msra.mxu0 %v1416
        %1455 = vmatpush.msra.mxu0 %v1413
        %1456 = vmatpush.msra.mxu0 %v1410
        %1457 = vmatpush.msra.mxu0 %v1407
        %1458 = vmatpush.msra.mxu0 %v1404
        %1459 = vmatpush.msra.mxu0 %v1401
        %1460 = vmatpush.msra.mxu0 %v1398
        %1461 = vmatpush.msra.mxu0 %v1395
        %1462 = vmatpush.msra.mxu0 %v1392
        %1463 = vmatpush.msra.mxu0 %v1389
        %1464 = vmatpush.msra.mxu0 %v1386
        %1465 = vmatpush.msra.mxu0 %v1383
        %1466 = vmatmul.f32.gmra.mxu0 %v1372
        %v1467 = vpop.f32.mrf.mxu0
        %v1468 = vadd.f32 0.0, %v1467
        %1469 = vdwg.mxu0
        %1470 = vmatpush.msra.mxu0 %v1429
        %1471 = vmatpush.msra.mxu0 %v1426
        %1472 = vmatpush.msra.mxu0 %v1423
        %1473 = vmatpush.msra.mxu0 %v1420
        %1474 = vmatpush.msra.mxu0 %v1417
        %1475 = vmatpush.msra.mxu0 %v1414
        %1476 = vmatpush.msra.mxu0 %v1411
        %1477 = vmatpush.msra.mxu0 %v1408
        %1478 = vmatpush.msra.mxu0 %v1405
        %1479 = vmatpush.msra.mxu0 %v1402
        %1480 = vmatpush.msra.mxu0 %v1399
        %1481 = vmatpush.msra.mxu0 %v1396
        %1482 = vmatpush.msra.mxu0 %v1393
        %1483 = vmatpush.msra.mxu0 %v1390
        %1484 = vmatpush.msra.mxu0 %v1387
        %1485 = vmatpush.msra.mxu0 %v1384
        %1486 = vmatmul.f32.gmra.mxu0 %v1372
        %v1487 = vpop.f32.mrf.mxu0
        %v1488 = vadd.f32 0.0, %v1487
        %1489 = vdwg.mxu0
        %v1490 = vadd.f32 %v1381, %v1448
        %v1491 = vxor.u32 %v1490, 2147483648
        %v1492 = vmul.f32 %v1491, 1.442695
        %v1493 = vpow.pop %v1492
        %v1494 = vadd.f32 %v1493, 1.0
        %v1495 = vrcp.pop %v1494
        %v1496 = vmul.f32 %v1494, %v1495
        %v1497 = vsub.f32 1.0, %v1496
        %v1498 = vmul.f32 %v1495, %v1497
        %v1499 = vadd.f32 %v1495, %v1498
        %vm1500 = vweird.f32 %v1494
        %vm1501 = vweird.f32 %v1495
        %vm1502 = vmor %vm1500, %vm1501
        %v1503 = vsel %vm1502, %v1495, %v1499
        %v1504 = vand.u32 2147483647, %v1494
        %vm1505 = vcmp.eq.f32.partialorder %v1504, 8.507059e+37
        %v1506 = vand.u32 %v1494, 2147483648
        %v1507 = vor.u32 1.1754944e-38, %v1506
        %v1508 = vsel %vm1505, %v1507, %v1503
        %v1509 = vmul.f32 1.0, %v1508
        %v1511 = vrot.slane %v1381, 2
        %v1513 = vadd.f32 %v1511, %v1468
        %v1514 = vxor.u32 %v1513, 2147483648
        %v1515 = vmul.f32 %v1514, 1.442695
        %v1516 = vpow.pop %v1515
        %v1517 = vadd.f32 %v1516, 1.0
        %v1518 = vrcp.pop %v1517
        %v1519 = vmul.f32 %v1517, %v1518
        %v1520 = vsub.f32 1.0, %v1519
        %v1521 = vmul.f32 %v1518, %v1520
        %v1522 = vadd.f32 %v1518, %v1521
        %vm1523 = vweird.f32 %v1517
        %vm1524 = vweird.f32 %v1518
        %vm1525 = vmor %vm1523, %vm1524
        %v1526 = vsel %vm1525, %v1518, %v1522
        %v1527 = vand.u32 2147483647, %v1517
        %vm1528 = vcmp.eq.f32.partialorder %v1527, 8.507059e+37
        %v1529 = vand.u32 %v1517, 2147483648
        %v1530 = vor.u32 1.1754944e-38, %v1529
        %v1531 = vsel %vm1528, %v1530, %v1526
        %v1532 = vmul.f32 1.0, %v1531
        %v1533 = vadd.f32 %v1488, %v519
        %v1534 = vmul.f32 %v1509, %v1533
        %v1535 = vrot.slane %v1381, 4
        %v1537 = vadd.f32 %v1535, %v1534
        %v1538 = vtanh.pop %v1537
        %v1539 = vsub.f32 %v1372, %v1538
        %v1540 = vmul.f32 %v1532, %v1539
        %v1541 = vadd.f32 %v1538, %v1540
        %s1542 = smul.u32 %s1377, 2
        %s1543 = scalar_lea.vmem %s349, %s1542
        %1544 = vst [vmem:[%s1543] sm:$0x3] %v1541
        %s1545 = smul.u32 %s26, 4294967289
        %s1546 = sadd.s32 %s1545, 7
        %s1547 = smul.u32 %s1546, 3
        %s1548 = smul.addr %s1547, 2
        %s1549 = scalar_lea.vmem %s328, %s1548
        %v1550 = vld [vmem:[%s1549] sm:$0x3f]
        %v1551 = vld [vmem:[%s259] sm:$0xff]
        %v1552 = vld [vmem:[%s259 + $0x8] sm:$0xff]
        %v1553 = vld [vmem:[%s259 + $0x10] sm:$0xff]
        %v1554 = vld [vmem:[%s259 + $0x18] sm:$0xff]
        %v1555 = vld [vmem:[%s259 + $0x20] sm:$0xff]
        %v1556 = vld [vmem:[%s259 + $0x28] sm:$0xff]
        %v1557 = vld [vmem:[%s259 + $0x30] sm:$0xff]
        %v1558 = vld [vmem:[%s259 + $0x38] sm:$0xff]
        %v1559 = vld [vmem:[%s259 + $0x40] sm:$0xff]
        %v1560 = vld [vmem:[%s259 + $0x48] sm:$0xff]
        %v1561 = vld [vmem:[%s259 + $0x50] sm:$0xff]
        %v1562 = vld [vmem:[%s259 + $0x58] sm:$0xff]
        %v1563 = vld [vmem:[%s259 + $0x60] sm:$0xff]
        %v1564 = vld [vmem:[%s259 + $0x68] sm:$0xff]
        %v1565 = vld [vmem:[%s259 + $0x70] sm:$0xff]
        %v1566 = vld [vmem:[%s259 + $0x78] sm:$0xff]
        %v1567 = vld [vmem:[%s259 + $0x80] sm:$0xff]
        %v1568 = vld [vmem:[%s259 + $0x88] sm:$0xff]
        %v1569 = vld [vmem:[%s259 + $0x90] sm:$0xff]
        %v1570 = vld [vmem:[%s259 + $0x98] sm:$0xff]
        %v1571 = vld [vmem:[%s259 + $0xa0] sm:$0xff]
        %v1572 = vld [vmem:[%s259 + $0xa8] sm:$0xff]
        %v1573 = vld [vmem:[%s259 + $0xb0] sm:$0xff]
        %v1574 = vld [vmem:[%s259 + $0xb8] sm:$0xff]
        %v1575 = vld [vmem:[%s259 + $0xc0] sm:$0xff]
        %v1576 = vld [vmem:[%s259 + $0xc8] sm:$0xff]
        %v1577 = vld [vmem:[%s259 + $0xd0] sm:$0xff]
        %v1578 = vld [vmem:[%s259 + $0xd8] sm:$0xff]
        %v1579 = vld [vmem:[%s259 + $0xe0] sm:$0xff]
        %v1580 = vld [vmem:[%s259 + $0xe8] sm:$0xff]
        %v1581 = vld [vmem:[%s259 + $0xf0] sm:$0xff]
        %v1582 = vld [vmem:[%s259 + $0xf8] sm:$0xff]
        %v1583 = vld [vmem:[%s259 + $0x100] sm:$0xff]
        %v1584 = vld [vmem:[%s259 + $0x108] sm:$0xff]
        %v1585 = vld [vmem:[%s259 + $0x110] sm:$0xff]
        %v1586 = vld [vmem:[%s259 + $0x118] sm:$0xff]
        %v1587 = vld [vmem:[%s259 + $0x120] sm:$0xff]
        %v1588 = vld [vmem:[%s259 + $0x128] sm:$0xff]
        %v1589 = vld [vmem:[%s259 + $0x130] sm:$0xff]
        %v1590 = vld [vmem:[%s259 + $0x138] sm:$0xff]
        %v1591 = vld [vmem:[%s259 + $0x140] sm:$0xff]
        %v1592 = vld [vmem:[%s259 + $0x148] sm:$0xff]
        %v1593 = vld [vmem:[%s259 + $0x150] sm:$0xff]
        %v1594 = vld [vmem:[%s259 + $0x158] sm:$0xff]
        %v1595 = vld [vmem:[%s259 + $0x160] sm:$0xff]
        %v1596 = vld [vmem:[%s259 + $0x168] sm:$0xff]
        %v1597 = vld [vmem:[%s259 + $0x170] sm:$0xff]
        %v1598 = vld [vmem:[%s259 + $0x178] sm:$0xff]
        %1599 = vmatpush.msra.mxu0 %v1596
        %1600 = vmatpush.msra.mxu0 %v1593
        %1601 = vmatpush.msra.mxu0 %v1590
        %1602 = vmatpush.msra.mxu0 %v1587
        %1603 = vmatpush.msra.mxu0 %v1584
        %1604 = vmatpush.msra.mxu0 %v1581
        %1605 = vmatpush.msra.mxu0 %v1578
        %1606 = vmatpush.msra.mxu0 %v1575
        %1607 = vmatpush.msra.mxu0 %v1572
        %1608 = vmatpush.msra.mxu0 %v1569
        %1609 = vmatpush.msra.mxu0 %v1566
        %1610 = vmatpush.msra.mxu0 %v1563
        %1611 = vmatpush.msra.mxu0 %v1560
        %1612 = vmatpush.msra.mxu0 %v1557
        %1613 = vmatpush.msra.mxu0 %v1554
        %1614 = vmatpush.msra.mxu0 %v1551
        %1615 = vmatmul.f32.gmra.mxu0 %v1541
        %v1616 = vpop.f32.mrf.mxu0
        %v1617 = vadd.f32 0.0, %v1616
        %1618 = vdwg.mxu0
        %1619 = vmatpush.msra.mxu0 %v1597
        %1620 = vmatpush.msra.mxu0 %v1594
        %1621 = vmatpush.msra.mxu0 %v1591
        %1622 = vmatpush.msra.mxu0 %v1588
        %1623 = vmatpush.msra.mxu0 %v1585
        %1624 = vmatpush.msra.mxu0 %v1582
        %1625 = vmatpush.msra.mxu0 %v1579
        %1626 = vmatpush.msra.mxu0 %v1576
        %1627 = vmatpush.msra.mxu0 %v1573
        %1628 = vmatpush.msra.mxu0 %v1570
        %1629 = vmatpush.msra.mxu0 %v1567
        %1630 = vmatpush.msra.mxu0 %v1564
        %1631 = vmatpush.msra.mxu0 %v1561
        %1632 = vmatpush.msra.mxu0 %v1558
        %1633 = vmatpush.msra.mxu0 %v1555
        %1634 = vmatpush.msra.mxu0 %v1552
        %1635 = vmatmul.f32.gmra.mxu0 %v1541
        %v1636 = vpop.f32.mrf.mxu0
        %v1637 = vadd.f32 0.0, %v1636
        %1638 = vdwg.mxu0
        %1639 = vmatpush.msra.mxu0 %v1598
        %1640 = vmatpush.msra.mxu0 %v1595
        %1641 = vmatpush.msra.mxu0 %v1592
        %1642 = vmatpush.msra.mxu0 %v1589
        %1643 = vmatpush.msra.mxu0 %v1586
        %1644 = vmatpush.msra.mxu0 %v1583
        %1645 = vmatpush.msra.mxu0 %v1580
        %1646 = vmatpush.msra.mxu0 %v1577
        %1647 = vmatpush.msra.mxu0 %v1574
        %1648 = vmatpush.msra.mxu0 %v1571
        %1649 = vmatpush.msra.mxu0 %v1568
        %1650 = vmatpush.msra.mxu0 %v1565
        %1651 = vmatpush.msra.mxu0 %v1562
        %1652 = vmatpush.msra.mxu0 %v1559
        %1653 = vmatpush.msra.mxu0 %v1556
        %1654 = vmatpush.msra.mxu0 %v1553
        %1655 = vmatmul.f32.gmra.mxu0 %v1541
        %v1656 = vpop.f32.mrf.mxu0
        %v1657 = vadd.f32 0.0, %v1656
        %1658 = vdwg.mxu0
        %v1659 = vadd.f32 %v1550, %v1617
        %v1660 = vxor.u32 %v1659, 2147483648
        %v1661 = vmul.f32 %v1660, 1.442695
        %v1662 = vpow.pop %v1661
        %v1663 = vadd.f32 %v1662, 1.0
        %v1664 = vrcp.pop %v1663
        %v1665 = vmul.f32 %v1663, %v1664
        %v1666 = vsub.f32 1.0, %v1665
        %v1667 = vmul.f32 %v1664, %v1666
        %v1668 = vadd.f32 %v1664, %v1667
        %vm1669 = vweird.f32 %v1663
        %vm1670 = vweird.f32 %v1664
        %vm1671 = vmor %vm1669, %vm1670
        %v1672 = vsel %vm1671, %v1664, %v1668
        %v1673 = vand.u32 2147483647, %v1663
        %vm1674 = vcmp.eq.f32.partialorder %v1673, 8.507059e+37
        %v1675 = vand.u32 %v1663, 2147483648
        %v1676 = vor.u32 1.1754944e-38, %v1675
        %v1677 = vsel %vm1674, %v1676, %v1672
        %v1678 = vmul.f32 1.0, %v1677
        %v1680 = vrot.slane %v1550, 2
        %v1682 = vadd.f32 %v1680, %v1637
        %v1683 = vxor.u32 %v1682, 2147483648
        %v1684 = vmul.f32 %v1683, 1.442695
        %v1685 = vpow.pop %v1684
        %v1686 = vadd.f32 %v1685, 1.0
        %v1687 = vrcp.pop %v1686
        %v1688 = vmul.f32 %v1686, %v1687
        %v1689 = vsub.f32 1.0, %v1688
        %v1690 = vmul.f32 %v1687, %v1689
        %v1691 = vadd.f32 %v1687, %v1690
        %vm1692 = vweird.f32 %v1686
        %vm1693 = vweird.f32 %v1687
        %vm1694 = vmor %vm1692, %vm1693
        %v1695 = vsel %vm1694, %v1687, %v1691
        %v1696 = vand.u32 2147483647, %v1686
        %vm1697 = vcmp.eq.f32.partialorder %v1696, 8.507059e+37
        %v1698 = vand.u32 %v1686, 2147483648
        %v1699 = vor.u32 1.1754944e-38, %v1698
        %v1700 = vsel %vm1697, %v1699, %v1695
        %v1701 = vmul.f32 1.0, %v1700
        %v1702 = vadd.f32 %v1657, %v519
        %v1703 = vmul.f32 %v1678, %v1702
        %v1704 = vrot.slane %v1550, 4
        %v1706 = vadd.f32 %v1704, %v1703
        %v1707 = vtanh.pop %v1706
        %v1708 = vsub.f32 %v1541, %v1707
        %v1709 = vmul.f32 %v1701, %v1708
        %v1710 = vadd.f32 %v1707, %v1709
        %s1711 = smul.u32 %s1546, 2
        %s1712 = scalar_lea.vmem %s349, %s1711
        %1713 = vst [vmem:[%s1712] sm:$0x3] %v1710
        %1714 = vst [vmem:[#allocation2] sm:$0x3] %v1710
        // Predicated region
        $region41: #{_forward_impl.5} parent=31 // pred_check
          %p1715 = pneg %p355
        $region42: #{_forward_impl.5} parent=31 // pred_check_branch
          %1717 = sbr.rel (%p1715) target = $region44
        $region43: #{_forward_impl.5} parent=31 // pred_region
          %1718 = vst [vmem:[%s314] sm:$0x3] %v1710
        $region44: #{_forward_impl.5} parent=31 // pred_fallthru
          _
        %s1719 = smul.u32 %s27, 2
        %s1720 = ssub.s32 0, %s1719
        %s1721 = smul.u32 %s26, %s1720
        %s1722 = sadd.s32 %s27, %s1721
        %s1723 = smul.u32 8, %s1722
        %p1724 = scmp.lt.s32.totalorder %s26, 1
        %s1725 = scalar_select %p1724, %s26, 1
        %p1726 = scmp.lt.s32.totalorder %s1723, 7
        %s1727 = scalar_select %p1726, %s1723, 7
        %s1728 = smul.addr %s1725, 8
        %s1729 = sadd.s32 %s1727, %s1728
        %s1730 = smul.addr %s1729, 2
        %s1731 = scalar_lea.vmem %s3, %s1730
        %s1732 = sand.u32 %s166, 1
        %s1733 = scalar_lea.sflag [#allocation5], %s1732
        %s1734 = sand.u32 %s166, 1
        %s1735 = smul.addr %s1734, 2
        %s1736 = scalar_lea.vmem [#allocation6], %s1735
        // Predicated region
        $region45: #{_forward_impl.5} parent=31 // pred_check
          %p1737 = pneg %p150
        $region46: #{_forward_impl.5} parent=31 // pred_check_branch
          %1739 = sbr.rel (%p1737) target = $region48
        $region47: #{_forward_impl.5} parent=31 // pred_region
          %s1740 = smul.u32 %s27, 2
          %s1741 = ssub.s32 0, %s1740
          %s1742 = smul.u32 %s26, %s1741
          %s1743 = sadd.s32 %s27, %s1742
          %s1744 = smul.u32 8, %s1743
        $region48: #{_forward_impl.5} parent=31 // pred_fallthru
          _
        // Predicated region
        $region49: #{_forward_impl.5} parent=31 // pred_check
          %p1745 = pneg %p176
        $region50: #{_forward_impl.5} parent=31 // pred_check_branch
          %1747 = sbr.rel (%p1745) target = $region52
        $region51: #{_forward_impl.5} parent=31 // pred_region
          %1749 = vsyncadd %s1733, 0
          %s1750 = smul.addr %s26, 2
          %s1751 = scalar_lea.hbm %s4, %s1750
          %s1753 = sshll.u32 %s1736, 4
          %s1754 = int_to_ptr.vmem [resolvable:$true] %s1753
          %s1755 = sshll.u32 %s1751, 4
          %s1756 = int_to_ptr.hbm [resolvable:$true] %s1755
          %1758 = dma.vmem_to_hbm [thread:$0]  %s1754, 32, %s1756, %s1733
        $region52: #{_forward_impl.5} parent=31 // pred_fallthru
          _
      $region32: #{_forward_impl.5} parent=5 // pred_fallthru
        _
      %p1759 = scmp.le.s32.totalorder 2, %s17
      // Predicated region
      $region53: #{_forward_impl.5} parent=5 // pred_check
        %p1760 = pneg %p1759
      $region54: #{_forward_impl.5} parent=5 // pred_check_branch
        %1762 = sbr.rel (%p1760) target = $region56
      $region55: #{_forward_impl.5} parent=5 // pred_region
        %s1763 = ssub.s32 %s17, 2
        // Predicated region
        $region57: #{_forward_impl.5} parent=55 // pred_check
          %p1764 = pneg %p156
        $region58: #{_forward_impl.5} parent=55 // pred_check_branch
          %1766 = sbr.rel (%p1764) target = $region60
        $region59: #{_forward_impl.5} parent=55 // pred_region
          %s1767 = smul.u32 %s29, 2
          %s1768 = ssub.s32 0, %s1767
          %s1769 = smul.u32 %s28, %s1768
          %s1770 = sadd.s32 %s29, %s1769
          %s1771 = smul.u32 8, %s1770
          %p1772 = scmp.lt.s32.totalorder %s28, 1
          %s1773 = scalar_select %p1772, %s28, 1
          %p1774 = scmp.lt.s32.totalorder %s1771, 7
          %s1775 = scalar_select %p1774, %s1771, 7
          %s1776 = smul.addr %s1773, 8
          %s1777 = sadd.s32 %s1775, %s1776
          %s1778 = smul.addr %s1777, 2
          %s1779 = scalar_lea.vmem %s3, %s1778
        $region60: #{_forward_impl.5} parent=55 // pred_fallthru
          _
        // Predicated region
        $region61: #{_forward_impl.5} parent=55 // pred_check
          %p1780 = pneg %p182
        $region62: #{_forward_impl.5} parent=55 // pred_check_branch
          %1782 = sbr.rel (%p1780) target = $region64
        $region63: #{_forward_impl.5} parent=55 // pred_region
          %s1783 = sand.u32 %s167, 1
          %s1784 = scalar_lea.sflag [#allocation5], %s1783
          %s1785 = sand.u32 %s167, 1
          %s1786 = smul.addr %s1785, 2
          %s1787 = scalar_lea.vmem [#allocation6], %s1786
          %1789 = dma.done %s1784, 32
        $region64: #{_forward_impl.5} parent=55 // pred_fallthru
          _
      $region56: #{_forward_impl.5} parent=5 // pred_fallthru
        _
    $region6: #{_forward_impl.5} parent=1 // loop_footer
      %s21 = sadd.s32 1, %s17
    $region7: #{_forward_impl.5} parent=1 // loop_footer_branch
      %16 = sbr.rel target = $region3
    $region8: #{_forward_impl.5} parent=1 // loop_exit
      _
    %1790 = vsyncpa [#allocation4], 1
    %s1791 = scalar_lea.sflag [#allocation4], 1
    %1792 = vsyncpa %s1791, 1
    %1793 = vsyncpa [#allocation5], 1
    %s1794 = scalar_lea.sflag [#allocation5], 1
    %1795 = vsyncpa %s1794, 1

// kernel: _forward_impl.7
$region0: #{_forward_impl.7}
  #allocation0 [shape = 'u32[]', space=smem, size = 0x4, offset = 0x4, fixed_abs, tag = 'smem constant byte address 0x4 - core index']
  #allocation1 [shape = 'u32[72,128]{1,0:T(1,128)}', space=vmem, size = 0x9000, scoped, tag = 'internal scratch']
  #allocation2 [shape = 'f32[2,128]{1,0:T(2,128)}', space=vmem, size = 0x400, scoped, tag = 'scratch operand']
  %s0 = inlined_call_operand.vmem [shape: f32[2,8,2,384], index: 0, kind: input, shape index: {}]
  %s1 = inlined_call_operand.hbm [shape: f32[2,128,384], index: 1, kind: input, shape index: {}]
  %s2 = inlined_call_operand.vmem [shape: f32[2,1,128], index: 2, kind: input, shape index: {}]
  %s3 = inlined_call_operand.hbm [shape: f32[2,8,2,128], index: 3, kind: output, shape index: {0}]
  %s4 = inlined_call_operand.vmem [shape: f32[2,2,128], index: 4, kind: output, shape index: {1}]
  %5 = xla_tuple %s3, %s4
  %s6 = sld [smem:[#allocation0]]
  $region65: #{_forward_impl.7} parent=0
    _
  %s8 = ssub.s32 1, %s6
  %s9 = scalar_select 0, %s8, %s6
  $region1: #{_forward_impl.7} parent=0
    #allocation3 [shape = 'u8[393216]{0}', space=vmem, size = 0x60000, scoped, tag = 'input window, operand 1']
    #allocation4 [shape = 's32[2]{0}', space=sflag, size = 0x8, scoped, tag = 'scoped memory for _forward_impl.7']
    #allocation5 [shape = 's32[2]{0}', space=sflag, size = 0x8, scoped, tag = 'scoped memory for _forward_impl.7']
    #allocation6 [shape = 'u8[16384]{0}', space=vmem, size = 0x4000, scoped, tag = 'output window, operand 0']
    %10 = vsyncpa [#allocation4], 0
    %s11 = scalar_lea.sflag [#allocation4], 1
    %12 = vsyncpa %s11, 0
    %13 = vsyncpa [#allocation5], 0
    %s14 = scalar_lea.sflag [#allocation5], 1
    %15 = vsyncpa %s14, 0
    loop: start=0, step=1, limit=4
    $region2: #{_forward_impl.7} parent=1 // loop_pre_header
      _
    $region3: #{_forward_impl.7} parent=1 // loop_header
      %s17 = sphi 0, %s21
      %p18 = scmp.ge.s32.totalorder %s17, 4
      %s24 = sphi 0, %s36
      %s25 = sphi 0, %s32
      %s26 = sphi 0, %s24
      %s27 = sphi 0, %s25
      %s28 = sphi 0, %s26
      %s29 = sphi 0, %s27
      %s49 = sphi 0, %s51
      %s52 = sphi 0, %s49
      %s53 = sphi 0, %s52
      %s69 = sphi 0, %s53
      %s75 = sphi 0, %s77
      %s78 = sphi 0, %s75
      %s79 = sphi 0, %s78
      %s95 = sphi 0, %s79
      %s101 = sphi 0, %s103
      %s104 = sphi 0, %s101
      %s105 = sphi 0, %s104
      %s121 = sphi 0, %s105
      %s137 = sphi 0, %s139
      %s140 = sphi 0, %s137
      %s141 = sphi 0, %s140
      %s157 = sphi 0, %s141
      %s163 = sphi 0, %s165
      %s166 = sphi 0, %s163
      %s167 = sphi 0, %s166
      %s183 = sphi 0, %s167
    $region4: #{_forward_impl.7} parent=1 // loop_header_branch
      %20 = sbr.rel (%p18) target = $region8
    $region5: #{_forward_impl.7} parent=1 // loop_body
      %s22 = ssub.s32 %s17, 1
      %s23 = ssub.s32 %s17, 2
      %s30 = sadd.s32 1, %s25
      %p31 = scmp.ge.s32.totalorder %s30, 1
      %s32 = scalar_select %p31, 0, %s30
      %s33 = sadd.s32 1, %s24
      %s34 = scalar_select %p31, %s33, %s24
      %p35 = scmp.ge.s32.totalorder %s34, 2
      %s36 = scalar_select %p35, 0, %s34
      %s37 = smul.u32 %s25, 2
      %s38 = ssub.s32 0, %s37
      %s39 = smul.u32 %s24, %s38
      %s40 = sadd.s32 %s25, %s39
      %s41 = smul.u32 %s32, 2
      %s42 = ssub.s32 0, %s41
      %s43 = smul.u32 %s36, %s42
      %s44 = sadd.s32 %s32, %s43
      %s45 = ssub.s32 %s24, %s36
      %s46 = ssub.s32 %s40, %s44
      %s47 = sor.u32 %s45, %s46
      %p48 = scmp.eq.s32.totalorder %s47, 0
      %s50 = sadd.s32 %s49, 1
      %s51 = scalar_select %p48, %s49, %s50
      %p54 = pneg %p48
      %p55 = scmp.eq.s32.totalorder %s17, 1
      %p56 = por %p54, %p55
      %p57 = scmp.ne.s32.totalorder %s49, %s52
      %p58 = scmp.eq.s32.totalorder %s17, 0
      %p59 = por %p57, %p58
      %p60 = scmp.ne.s32.totalorder %s49, %s52
      %p61 = scmp.eq.s32.totalorder %s22, 1
      %p62 = por %p60, %p61
      %p63 = scmp.ne.s32.totalorder %s52, %s53
      %p64 = scmp.eq.s32.totalorder %s22, 0
      %p65 = por %p63, %p64
      %p66 = scmp.ne.s32.totalorder %s52, %s53
      %p67 = scmp.eq.s32.totalorder %s23, 1
      %p68 = por %p66, %p67
      %p70 = scmp.ne.s32.totalorder %s53, %s69
      %p71 = scmp.eq.s32.totalorder %s23, 0
      %p72 = por %p70, %p71
      %s73 = ssub.s32 %s24, %s36
      %p74 = scmp.eq.s32.totalorder %s73, 0
      %s76 = sadd.s32 %s75, 1
      %s77 = scalar_select %p74, %s75, %s76
      %p80 = pneg %p74
      %p81 = scmp.eq.s32.totalorder %s17, 1
      %p82 = por %p80, %p81
      %p83 = scmp.ne.s32.totalorder %s75, %s78
      %p84 = scmp.eq.s32.totalorder %s17, 0
      %p85 = por %p83, %p84
      %p86 = scmp.ne.s32.totalorder %s75, %s78
      %p87 = scmp.eq.s32.totalorder %s22, 1
      %p88 = por %p86, %p87
      %p89 = scmp.ne.s32.totalorder %s78, %s79
      %p90 = scmp.eq.s32.totalorder %s22, 0
      %p91 = por %p89, %p90
      %p92 = scmp.ne.s32.totalorder %s78, %s79
      %p93 = scmp.eq.s32.totalorder %s23, 1
      %p94 = por %p92, %p93
      %p96 = scmp.ne.s32.totalorder %s79, %s95
      %p97 = scmp.eq.s32.totalorder %s23, 0
      %p98 = por %p96, %p97
      %s99 = ssub.s32 %s24, %s36
      %p100 = scmp.eq.s32.totalorder %s99, 0
      %s102 = sadd.s32 %s101, 1
      %s103 = scalar_select %p100, %s101, %s102
      %p106 = pneg %p100
      %p107 = scmp.eq.s32.totalorder %s17, 1
      %p108 = por %p106, %p107
      %p109 = scmp.ne.s32.totalorder %s101, %s104
      %p110 = scmp.eq.s32.totalorder %s17, 0
      %p111 = por %p109, %p110
      %p112 = scmp.ne.s32.totalorder %s101, %s104
      %p113 = scmp.eq.s32.totalorder %s22, 1
      %p114 = por %p112, %p113
      %p115 = scmp.ne.s32.totalorder %s104, %s105
      %p116 = scmp.eq.s32.totalorder %s22, 0
      %p117 = por %p115, %p116
      %p118 = scmp.ne.s32.totalorder %s104, %s105
      %p119 = scmp.eq.s32.totalorder %s23, 1
      %p120 = por %p118, %p119
      %p122 = scmp.ne.s32.totalorder %s105, %s121
      %p123 = scmp.eq.s32.totalorder %s23, 0
      %p124 = por %p122, %p123
      %s125 = smul.u32 %s25, 2
      %s126 = ssub.s32 0, %s125
      %s127 = smul.u32 %s24, %s126
      %s128 = sadd.s32 %s25, %s127
      %s129 = smul.u32 %s32, 2
      %s130 = ssub.s32 0, %s129
      %s131 = smul.u32 %s36, %s130
      %s132 = sadd.s32 %s32, %s131
      %s133 = ssub.s32 %s24, %s36
      %s134 = ssub.s32 %s128, %s132
      %s135 = sor.u32 %s133, %s134
      %p136 = scmp.eq.s32.totalorder %s135, 0
      %s138 = sadd.s32 %s137, 1
      %s139 = scalar_select %p136, %s137, %s138
      %p142 = pneg %p136
      %p143 = scmp.eq.s32.totalorder %s17, 1
      %p144 = por %p142, %p143
      %p145 = scmp.ne.s32.totalorder %s137, %s140
      %p146 = scmp.eq.s32.totalorder %s17, 0
      %p147 = por %p145, %p146
      %p148 = scmp.ne.s32.totalorder %s137, %s140
      %p149 = scmp.eq.s32.totalorder %s22, 1
      %p150 = por %p148, %p149
      %p151 = scmp.ne.s32.totalorder %s140, %s141
      %p152 = scmp.eq.s32.totalorder %s22, 0
      %p153 = por %p151, %p152
      %p154 = scmp.ne.s32.totalorder %s140, %s141
      %p155 = scmp.eq.s32.totalorder %s23, 1
      %p156 = por %p154, %p155
      %p158 = scmp.ne.s32.totalorder %s141, %s157
      %p159 = scmp.eq.s32.totalorder %s23, 0
      %p160 = por %p158, %p159
      %s161 = ssub.s32 %s24, %s36
      %p162 = scmp.eq.s32.totalorder %s161, 0
      %s164 = sadd.s32 %s163, 1
      %s165 = scalar_select %p162, %s163, %s164
      %p168 = pneg %p162
      %p169 = scmp.eq.s32.totalorder %s17, 1
      %p170 = por %p168, %p169
      %p171 = scmp.ne.s32.totalorder %s163, %s166
      %p172 = scmp.eq.s32.totalorder %s17, 0
      %p173 = por %p171, %p172
      %p174 = scmp.ne.s32.totalorder %s163, %s166
      %p175 = scmp.eq.s32.totalorder %s22, 1
      %p176 = por %p174, %p175
      %p177 = scmp.ne.s32.totalorder %s166, %s167
      %p178 = scmp.eq.s32.totalorder %s22, 0
      %p179 = por %p177, %p178
      %p180 = scmp.ne.s32.totalorder %s166, %s167
      %p181 = scmp.eq.s32.totalorder %s23, 1
      %p182 = por %p180, %p181
      %p184 = scmp.ne.s32.totalorder %s167, %s183
      %p185 = scmp.eq.s32.totalorder %s23, 0
      %p186 = por %p184, %p185
      %p187 = scmp.le.s32.totalorder 1, %s17
      %p188 = scmp.lt.s32.totalorder %s17, 3
      %p189 = pnand %p187, %p188
      %p190 = pneg %p189
      // Predicated region
      $region9: #{_forward_impl.7} parent=5 // pred_check
        _
      $region10: #{_forward_impl.7} parent=5 // pred_check_branch
        %192 = sbr.rel (%p189) target = $region12
      $region11: #{_forward_impl.7} parent=5 // pred_region
        %s193 = ssub.s32 %s17, 1
      $region12: #{_forward_impl.7} parent=5 // pred_fallthru
        _
      %p194 = scmp.lt.s32.totalorder %s17, 2
      // Predicated region
      $region13: #{_forward_impl.7} parent=5 // pred_check
        %p195 = pneg %p194
      $region14: #{_forward_impl.7} parent=5 // pred_check_branch
        %197 = sbr.rel (%p195) target = $region16
      $region15: #{_forward_impl.7} parent=5 // pred_region
        // Predicated region
        $region17: #{_forward_impl.7} parent=15 // pred_check
          %p198 = pneg %p59
        $region18: #{_forward_impl.7} parent=15 // pred_check_branch
          %200 = sbr.rel (%p198) target = $region20
        $region19: #{_forward_impl.7} parent=15 // pred_region
          %s201 = smul.u32 %s25, 2
          %s202 = ssub.s32 0, %s201
          %s203 = smul.u32 %s24, %s202
          %s204 = sadd.s32 %s25, %s203
          %s205 = smul.u32 8, %s204
          %p206 = scmp.lt.s32.totalorder %s24, 1
          %s207 = scalar_select %p206, %s24, 1
          %p208 = scmp.lt.s32.totalorder %s205, 7
          %s209 = scalar_select %p208, %s205, 7
          %s210 = smul.addr %s209, 3
          %s211 = smul.addr %s207, 24
          %s212 = sadd.s32 %s210, %s211
          %s213 = smul.addr %s212, 2
          %s214 = scalar_lea.vmem %s0, %s213
          %s215 = smul.u32 %s25, 2
          %s216 = ssub.s32 0, %s215
          %s217 = smul.u32 %s24, %s216
          %s218 = sadd.s32 %s25, %s217
          %s219 = smul.u32 8, %s218
        $region20: #{_forward_impl.7} parent=15 // pred_fallthru
          _
        // Predicated region
        $region21: #{_forward_impl.7} parent=15 // pred_check
          %p220 = pneg %p85
        $region22: #{_forward_impl.7} parent=15 // pred_check_branch
          %222 = sbr.rel (%p220) target = $region24
        $region23: #{_forward_impl.7} parent=15 // pred_region
          %s223 = sand.u32 %s75, 1
          %s224 = scalar_lea.sflag [#allocation4], %s223
          %s225 = sand.u32 %s75, 1
          %s226 = smul.addr %s225, 384
          %s227 = scalar_lea.vmem [#allocation3], %s226
          %229 = vsyncadd %s224, 0
          %s230 = smul.addr %s24, 48
          %s231 = smul.addr %s230, 8
          %s232 = scalar_lea.hbm %s1, %s231
          %s233 = sshll.u32 %s232, 4
          %s234 = int_to_ptr.hbm [resolvable:$true] %s233
          %s235 = sshll.u32 %s227, 4
          %s236 = int_to_ptr.vmem [resolvable:$true] %s235
          %241 = dma.hbm_to_vmem [thread:$0]  %s234, 6144, %s236, %s224, 384, 384, 24
        $region24: #{_forward_impl.7} parent=15 // pred_fallthru
          _
        // Predicated region
        $region25: #{_forward_impl.7} parent=15 // pred_check
          %p242 = pneg %p111
        $region26: #{_forward_impl.7} parent=15 // pred_check_branch
          %244 = sbr.rel (%p242) target = $region28
        $region27: #{_forward_impl.7} parent=15 // pred_region
          %p245 = scmp.lt.s32.totalorder %s24, 1
          %s246 = scalar_select %p245, %s24, 1
          %s247 = scalar_lea.vmem %s2, %s246
        $region28: #{_forward_impl.7} parent=15 // pred_fallthru
          _
      $region16: #{_forward_impl.7} parent=5 // pred_fallthru
        _
      %p248 = scmp.le.s32.totalorder 1, %s17
      %p249 = scmp.lt.s32.totalorder %s17, 3
      %p250 = pnand %p248, %p249
      %p251 = pneg %p250
      // Predicated region
      $region29: #{_forward_impl.7} parent=5 // pred_check
        _
      $region30: #{_forward_impl.7} parent=5 // pred_check_branch
        %253 = sbr.rel (%p250) target = $region32
      $region31: #{_forward_impl.7} parent=5 // pred_region
        %s254 = ssub.s32 %s17, 1
        %s255 = sand.u32 %s78, 1
        %s256 = scalar_lea.sflag [#allocation4], %s255
        %s257 = sand.u32 %s78, 1
        %s258 = smul.addr %s257, 384
        %s259 = scalar_lea.vmem [#allocation3], %s258
        // Predicated region
        $region33: #{_forward_impl.7} parent=31 // pred_check
          %p260 = pneg %p91
        $region34: #{_forward_impl.7} parent=31 // pred_check_branch
          %262 = sbr.rel (%p260) target = $region36
        $region35: #{_forward_impl.7} parent=31 // pred_region
          %264 = dma.done %s256, 6144
        $region36: #{_forward_impl.7} parent=31 // pred_fallthru
          _
        %s265 = smul.u32 %s27, 2
        %s266 = ssub.s32 0, %s265
        %s267 = smul.u32 %s26, %s266
        %s268 = sadd.s32 %s27, %s267
        %s269 = smul.u32 8, %s268
        %p270 = scmp.lt.s32.totalorder %s26, 1
        %s271 = scalar_select %p270, %s26, 1
        %p272 = scmp.lt.s32.totalorder %s269, 7
        %s273 = scalar_select %p272, %s269, 7
        %s274 = smul.addr %s273, 3
        %s275 = smul.addr %s271, 24
        %s276 = sadd.s32 %s274, %s275
        %s277 = smul.addr %s276, 2
        %s278 = scalar_lea.vmem %s0, %s277
        %p279 = pneg %p65
        %p280 = pneg %p62
        %s281 = sand.u32 %s78, 1
        %s282 = scalar_lea.sflag [#allocation4], %s281
        %s283 = sand.u32 %s78, 1
        %s284 = smul.addr %s283, 384
        %s285 = scalar_lea.vmem [#allocation3], %s284
        %p286 = pneg %p91
        %p287 = pneg %p88
        %p288 = scmp.lt.s32.totalorder %s26, 1
        %s289 = scalar_select %p288, %s26, 1
        %s290 = scalar_lea.vmem %s2, %s289
        %p291 = pneg %p117
        %p292 = pneg %p114
        %p293 = pneg %p153
        %p294 = pneg %p150
        %s295 = sand.u32 %s140, 1
        %s296 = scalar_lea.sflag [#allocation5], %s295
        %s297 = sand.u32 %s140, 1
        %s298 = smul.addr %s297, 16
        %s299 = scalar_lea.vmem [#allocation6], %s298
        %p300 = pneg %p179
        %p301 = pneg %p176
        %p302 = scmp.lt.s32.totalorder %s26, 1
        %s303 = scalar_select %p302, %s26, 1
        %s304 = smul.addr %s303, 2
        %s305 = scalar_lea.vmem %s4, %s304
        %s306 = smul.u32 %s27, 2
        %s307 = ssub.s32 0, %s306
        %s308 = smul.u32 %s26, %s307
        %s309 = sadd.s32 %s27, %s308
        %s310 = smul.u32 8, %s309
        %p311 = scmp.lt.s32.totalorder %s26, 1
        %s312 = scalar_select %p311, %s26, 1
        %p313 = scmp.lt.s32.totalorder %s310, 7
        %s314 = scalar_select %p313, %s310, 7
        %s315 = smul.addr %s314, 3
        %s316 = smul.addr %s312, 24
        %s317 = sadd.s32 %s315, %s316
        %s318 = smul.addr %s317, 2
        %s319 = scalar_lea.vmem %s0, %s318
        %s320 = smul.u32 %s27, 2
        %s321 = ssub.s32 0, %s320
        %s322 = smul.u32 %s26, %s321
        %s323 = sadd.s32 %s27, %s322
        %s324 = smul.u32 8, %s323
        %p325 = scmp.lt.s32.totalorder %s26, 1
        %s326 = scalar_select %p325, %s26, 1
        %s327 = scalar_lea.vmem %s2, %s326
        %s328 = smul.u32 %s27, 2
        %s329 = ssub.s32 0, %s328
        %s330 = smul.u32 %s26, %s329
        %s331 = sadd.s32 %s27, %s330
        %s332 = smul.u32 8, %s331
        %p333 = scmp.lt.s32.totalorder %s26, 1
        %s334 = scalar_select %p333, %s26, 1
        %s335 = smul.addr %s334, 2
        %s336 = scalar_lea.vmem %s4, %s335
        %p337 = scmp.eq.s32.totalorder %s27, 0
        // Predicated region
        $region37: #{_forward_impl.7} parent=31 // pred_check
          %p338 = pneg %p337
        $region38: #{_forward_impl.7} parent=31 // pred_check_branch
          %340 = sbr.rel (%p338) target = $region40
        $region39: #{_forward_impl.7} parent=31 // pred_region
          %341 = vst [vmem:[#allocation2] sm:$0x3] 0.0
        $region40: #{_forward_impl.7} parent=31 // pred_fallthru
          _
        %v342 = vld [vmem:[%s327] sm:$0x1]
        %v343 = vld [vmem:[#allocation2] sm:$0x3]
        %s344 = smul.u32 %s26, 7
        %s345 = smul.u32 %s344, 3
        %s346 = smul.addr %s345, 2
        %s347 = scalar_lea.vmem %s319, %s346
        %v348 = vld [vmem:[%s347] sm:$0x3f]
        %v349 = vld [vmem:[%s259] sm:$0xff]
        %v350 = vld [vmem:[%s259 + $0x8] sm:$0xff]
        %v351 = vld [vmem:[%s259 + $0x10] sm:$0xff]
        %v352 = vld [vmem:[%s259 + $0x18] sm:$0xff]
        %v353 = vld [vmem:[%s259 + $0x20] sm:$0xff]
        %v354 = vld [vmem:[%s259 + $0x28] sm:$0xff]
        %v355 = vld [vmem:[%s259 + $0x30] sm:$0xff]
        %v356 = vld [vmem:[%s259 + $0x38] sm:$0xff]
        %v357 = vld [vmem:[%s259 + $0x40] sm:$0xff]
        %v358 = vld [vmem:[%s259 + $0x48] sm:$0xff]
        %v359 = vld [vmem:[%s259 + $0x50] sm:$0xff]
        %v360 = vld [vmem:[%s259 + $0x58] sm:$0xff]
        %v361 = vld [vmem:[%s259 + $0x60] sm:$0xff]
        %v362 = vld [vmem:[%s259 + $0x68] sm:$0xff]
        %v363 = vld [vmem:[%s259 + $0x70] sm:$0xff]
        %v364 = vld [vmem:[%s259 + $0x78] sm:$0xff]
        %v365 = vld [vmem:[%s259 + $0x80] sm:$0xff]
        %v366 = vld [vmem:[%s259 + $0x88] sm:$0xff]
        %v367 = vld [vmem:[%s259 + $0x90] sm:$0xff]
        %v368 = vld [vmem:[%s259 + $0x98] sm:$0xff]
        %v369 = vld [vmem:[%s259 + $0xa0] sm:$0xff]
        %v370 = vld [vmem:[%s259 + $0xa8] sm:$0xff]
        %v371 = vld [vmem:[%s259 + $0xb0] sm:$0xff]
        %v372 = vld [vmem:[%s259 + $0xb8] sm:$0xff]
        %v373 = vld [vmem:[%s259 + $0xc0] sm:$0xff]
        %v374 = vld [vmem:[%s259 + $0xc8] sm:$0xff]
        %v375 = vld [vmem:[%s259 + $0xd0] sm:$0xff]
        %v376 = vld [vmem:[%s259 + $0xd8] sm:$0xff]
        %v377 = vld [vmem:[%s259 + $0xe0] sm:$0xff]
        %v378 = vld [vmem:[%s259 + $0xe8] sm:$0xff]
        %v379 = vld [vmem:[%s259 + $0xf0] sm:$0xff]
        %v380 = vld [vmem:[%s259 + $0xf8] sm:$0xff]
        %v381 = vld [vmem:[%s259 + $0x100] sm:$0xff]
        %v382 = vld [vmem:[%s259 + $0x108] sm:$0xff]
        %v383 = vld [vmem:[%s259 + $0x110] sm:$0xff]
        %v384 = vld [vmem:[%s259 + $0x118] sm:$0xff]
        %v385 = vld [vmem:[%s259 + $0x120] sm:$0xff]
        %v386 = vld [vmem:[%s259 + $0x128] sm:$0xff]
        %v387 = vld [vmem:[%s259 + $0x130] sm:$0xff]
        %v388 = vld [vmem:[%s259 + $0x138] sm:$0xff]
        %v389 = vld [vmem:[%s259 + $0x140] sm:$0xff]
        %v390 = vld [vmem:[%s259 + $0x148] sm:$0xff]
        %v391 = vld [vmem:[%s259 + $0x150] sm:$0xff]
        %v392 = vld [vmem:[%s259 + $0x158] sm:$0xff]
        %v393 = vld [vmem:[%s259 + $0x160] sm:$0xff]
        %v394 = vld [vmem:[%s259 + $0x168] sm:$0xff]
        %v395 = vld [vmem:[%s259 + $0x170] sm:$0xff]
        %v396 = vld [vmem:[%s259 + $0x178] sm:$0xff]
        %397 = vmatpush.msra.mxu0 %v394
        %398 = vmatpush.msra.mxu0 %v391
        %399 = vmatpush.msra.mxu0 %v388
        %400 = vmatpush.msra.mxu0 %v385
        %401 = vmatpush.msra.mxu0 %v382
        %402 = vmatpush.msra.mxu0 %v379
        %403 = vmatpush.msra.mxu0 %v376
        %404 = vmatpush.msra.mxu0 %v373
        %405 = vmatpush.msra.mxu0 %v370
        %406 = vmatpush.msra.mxu0 %v367
        %407 = vmatpush.msra.mxu0 %v364
        %408 = vmatpush.msra.mxu0 %v361
        %409 = vmatpush.msra.mxu0 %v358
        %410 = vmatpush.msra.mxu0 %v355
        %411 = vmatpush.msra.mxu0 %v352
        %412 = vmatpush.msra.mxu0 %v349
        %413 = vmatmul.f32.gmra.mxu0 %v343
        %v414 = vpop.f32.mrf.mxu0
        %v415 = vadd.f32 0.0, %v414
        %416 = vdwg.mxu0
        %417 = vmatpush.msra.mxu0 %v395
        %418 = vmatpush.msra.mxu0 %v392
        %419 = vmatpush.msra.mxu0 %v389
        %420 = vmatpush.msra.mxu0 %v386
        %421 = vmatpush.msra.mxu0 %v383
        %422 = vmatpush.msra.mxu0 %v380
        %423 = vmatpush.msra.mxu0 %v377
        %424 = vmatpush.msra.mxu0 %v374
        %425 = vmatpush.msra.mxu0 %v371
        %426 = vmatpush.msra.mxu0 %v368
        %427 = vmatpush.msra.mxu0 %v365
        %428 = vmatpush.msra.mxu0 %v362
        %429 = vmatpush.msra.mxu0 %v359
        %430 = vmatpush.msra.mxu0 %v356
        %431 = vmatpush.msra.mxu0 %v353
        %432 = vmatpush.msra.mxu0 %v350
        %433 = vmatmul.f32.gmra.mxu0 %v343
        %v434 = vpop.f32.mrf.mxu0
        %v435 = vadd.f32 0.0, %v434
        %436 = vdwg.mxu0
        %437 = vmatpush.msra.mxu0 %v396
        %438 = vmatpush.msra.mxu0 %v393
        %439 = vmatpush.msra.mxu0 %v390
        %440 = vmatpush.msra.mxu0 %v387
        %441 = vmatpush.msra.mxu0 %v384
        %442 = vmatpush.msra.mxu0 %v381
        %443 = vmatpush.msra.mxu0 %v378
        %444 = vmatpush.msra.mxu0 %v375
        %445 = vmatpush.msra.mxu0 %v372
        %446 = vmatpush.msra.mxu0 %v369
        %447 = vmatpush.msra.mxu0 %v366
        %448 = vmatpush.msra.mxu0 %v363
        %449 = vmatpush.msra.mxu0 %v360
        %450 = vmatpush.msra.mxu0 %v357
        %451 = vmatpush.msra.mxu0 %v354
        %452 = vmatpush.msra.mxu0 %v351
        %453 = vmatmul.f32.gmra.mxu0 %v343
        %v454 = vpop.f32.mrf.mxu0
        %v455 = vadd.f32 0.0, %v454
        %456 = vdwg.mxu0
        %v457 = vadd.f32 %v348, %v415
        %v458 = vxor.u32 %v457, 2147483648
        %v459 = vmul.f32 %v458, 1.442695
        %v460 = vpow.pop %v459
        %v461 = vadd.f32 %v460, 1.0
        %v462 = vrcp.pop %v461
        %v463 = vmul.f32 %v461, %v462
        %v464 = vsub.f32 1.0, %v463
        %v465 = vmul.f32 %v462, %v464
        %v466 = vadd.f32 %v462, %v465
        %vm467 = vweird.f32 %v461
        %vm468 = vweird.f32 %v462
        %vm469 = vmor %vm467, %vm468
        %v470 = vsel %vm469, %v462, %v466
        %v471 = vand.u32 2147483647, %v461
        %vm472 = vcmp.eq.f32.partialorder %v471, 8.507059e+37
        %v473 = vand.u32 %v461, 2147483648
        %v474 = vor.u32 1.1754944e-38, %v473
        %v475 = vsel %vm472, %v474, %v470
        %v476 = vmul.f32 1.0, %v475
        %v478 = vrot.slane %v348, 2
        %v480 = vadd.f32 %v478, %v435
        %v481 = vxor.u32 %v480, 2147483648
        %v482 = vmul.f32 %v481, 1.442695
        %v483 = vpow.pop %v482
        %v484 = vadd.f32 %v483, 1.0
        %v485 = vrcp.pop %v484
        %v486 = vmul.f32 %v484, %v485
        %v487 = vsub.f32 1.0, %v486
        %v488 = vmul.f32 %v485, %v487
        %v489 = vadd.f32 %v485, %v488
        %vm490 = vweird.f32 %v484
        %vm491 = vweird.f32 %v485
        %vm492 = vmor %vm490, %vm491
        %v493 = vsel %vm492, %v485, %v489
        %v494 = vand.u32 2147483647, %v484
        %vm495 = vcmp.eq.f32.partialorder %v494, 8.507059e+37
        %v496 = vand.u32 %v484, 2147483648
        %v497 = vor.u32 1.1754944e-38, %v496
        %v498 = vsel %vm495, %v497, %v493
        %v499 = vmul.f32 1.0, %v498
        %v501 = vperm.slane %v342, 0
        %v503 = vadd.f32 %v455, %v501
        %v504 = vmul.f32 %v476, %v503
        %v505 = vrot.slane %v348, 4
        %v507 = vadd.f32 %v505, %v504
        %v508 = vtanh.pop %v507
        %v509 = vsub.f32 %v343, %v508
        %v510 = vmul.f32 %v499, %v509
        %v511 = vadd.f32 %v508, %v510
        %s512 = smul.u32 %s344, 2
        %s513 = scalar_lea.vmem %s299, %s512 [#allocation6]
        %514 = vst [vmem:[%s513] sm:$0x3] %v511
        %s515 = smul.u32 %s26, 5
        %s516 = sadd.s32 %s515, 1
        %s517 = smul.u32 %s516, 3
        %s518 = smul.addr %s517, 2
        %s519 = scalar_lea.vmem %s319, %s518
        %v520 = vld [vmem:[%s519] sm:$0x3f]
        %v521 = vld [vmem:[%s259] sm:$0xff]
        %v522 = vld [vmem:[%s259 + $0x8] sm:$0xff]
        %v523 = vld [vmem:[%s259 + $0x10] sm:$0xff]
        %v524 = vld [vmem:[%s259 + $0x18] sm:$0xff]
        %v525 = vld [vmem:[%s259 + $0x20] sm:$0xff]
        %v526 = vld [vmem:[%s259 + $0x28] sm:$0xff]
        %v527 = vld [vmem:[%s259 + $0x30] sm:$0xff]
        %v528 = vld [vmem:[%s259 + $0x38] sm:$0xff]
        %v529 = vld [vmem:[%s259 + $0x40] sm:$0xff]
        %v530 = vld [vmem:[%s259 + $0x48] sm:$0xff]
        %v531 = vld [vmem:[%s259 + $0x50] sm:$0xff]
        %v532 = vld [vmem:[%s259 + $0x58] sm:$0xff]
        %v533 = vld [vmem:[%s259 + $0x60] sm:$0xff]
        %v534 = vld [vmem:[%s259 + $0x68] sm:$0xff]
        %v535 = vld [vmem:[%s259 + $0x70] sm:$0xff]
        %v536 = vld [vmem:[%s259 + $0x78] sm:$0xff]
        %v537 = vld [vmem:[%s259 + $0x80] sm:$0xff]
        %v538 = vld [vmem:[%s259 + $0x88] sm:$0xff]
        %v539 = vld [vmem:[%s259 + $0x90] sm:$0xff]
        %v540 = vld [vmem:[%s259 + $0x98] sm:$0xff]
        %v541 = vld [vmem:[%s259 + $0xa0] sm:$0xff]
        %v542 = vld [vmem:[%s259 + $0xa8] sm:$0xff]
        %v543 = vld [vmem:[%s259 + $0xb0] sm:$0xff]
        %v544 = vld [vmem:[%s259 + $0xb8] sm:$0xff]
        %v545 = vld [vmem:[%s259 + $0xc0] sm:$0xff]
        %v546 = vld [vmem:[%s259 + $0xc8] sm:$0xff]
        %v547 = vld [vmem:[%s259 + $0xd0] sm:$0xff]
        %v548 = vld [vmem:[%s259 + $0xd8] sm:$0xff]
        %v549 = vld [vmem:[%s259 + $0xe0] sm:$0xff]
        %v550 = vld [vmem:[%s259 + $0xe8] sm:$0xff]
        %v551 = vld [vmem:[%s259 + $0xf0] sm:$0xff]
        %v552 = vld [vmem:[%s259 + $0xf8] sm:$0xff]
        %v553 = vld [vmem:[%s259 + $0x100] sm:$0xff]
        %v554 = vld [vmem:[%s259 + $0x108] sm:$0xff]
        %v555 = vld [vmem:[%s259 + $0x110] sm:$0xff]
        %v556 = vld [vmem:[%s259 + $0x118] sm:$0xff]
        %v557 = vld [vmem:[%s259 + $0x120] sm:$0xff]
        %v558 = vld [vmem:[%s259 + $0x128] sm:$0xff]
        %v559 = vld [vmem:[%s259 + $0x130] sm:$0xff]
        %v560 = vld [vmem:[%s259 + $0x138] sm:$0xff]
        %v561 = vld [vmem:[%s259 + $0x140] sm:$0xff]
        %v562 = vld [vmem:[%s259 + $0x148] sm:$0xff]
        %v563 = vld [vmem:[%s259 + $0x150] sm:$0xff]
        %v564 = vld [vmem:[%s259 + $0x158] sm:$0xff]
        %v565 = vld [vmem:[%s259 + $0x160] sm:$0xff]
        %v566 = vld [vmem:[%s259 + $0x168] sm:$0xff]
        %v567 = vld [vmem:[%s259 + $0x170] sm:$0xff]
        %v568 = vld [vmem:[%s259 + $0x178] sm:$0xff]
        %569 = vmatpush.msra.mxu0 %v566
        %570 = vmatpush.msra.mxu0 %v563
        %571 = vmatpush.msra.mxu0 %v560
        %572 = vmatpush.msra.mxu0 %v557
        %573 = vmatpush.msra.mxu0 %v554
        %574 = vmatpush.msra.mxu0 %v551
        %575 = vmatpush.msra.mxu0 %v548
        %576 = vmatpush.msra.mxu0 %v545
        %577 = vmatpush.msra.mxu0 %v542
        %578 = vmatpush.msra.mxu0 %v539
        %579 = vmatpush.msra.mxu0 %v536
        %580 = vmatpush.msra.mxu0 %v533
        %581 = vmatpush.msra.mxu0 %v530
        %582 = vmatpush.msra.mxu0 %v527
        %583 = vmatpush.msra.mxu0 %v524
        %584 = vmatpush.msra.mxu0 %v521
        %585 = vmatmul.f32.gmra.mxu0 %v511
        %v586 = vpop.f32.mrf.mxu0
        %v587 = vadd.f32 0.0, %v586
        %588 = vdwg.mxu0
        %589 = vmatpush.msra.mxu0 %v567
        %590 = vmatpush.msra.mxu0 %v564
        %591 = vmatpush.msra.mxu0 %v561
        %592 = vmatpush.msra.mxu0 %v558
        %593 = vmatpush.msra.mxu0 %v555
        %594 = vmatpush.msra.mxu0 %v552
        %595 = vmatpush.msra.mxu0 %v549
        %596 = vmatpush.msra.mxu0 %v546
        %597 = vmatpush.msra.mxu0 %v543
        %598 = vmatpush.msra.mxu0 %v540
        %599 = vmatpush.msra.mxu0 %v537
        %600 = vmatpush.msra.mxu0 %v534
        %601 = vmatpush.msra.mxu0 %v531
        %602 = vmatpush.msra.mxu0 %v528
        %603 = vmatpush.msra.mxu0 %v525
        %604 = vmatpush.msra.mxu0 %v522
        %605 = vmatmul.f32.gmra.mxu0 %v511
        %v606 = vpop.f32.mrf.mxu0
        %v607 = vadd.f32 0.0, %v606
        %608 = vdwg.mxu0
        %609 = vmatpush.msra.mxu0 %v568
        %610 = vmatpush.msra.mxu0 %v565
        %611 = vmatpush.msra.mxu0 %v562
        %612 = vmatpush.msra.mxu0 %v559
        %613 = vmatpush.msra.mxu0 %v556
        %614 = vmatpush.msra.mxu0 %v553
        %615 = vmatpush.msra.mxu0 %v550
        %616 = vmatpush.msra.mxu0 %v547
        %617 = vmatpush.msra.mxu0 %v544
        %618 = vmatpush.msra.mxu0 %v541
        %619 = vmatpush.msra.mxu0 %v538
        %620 = vmatpush.msra.mxu0 %v535
        %621 = vmatpush.msra.mxu0 %v532
        %622 = vmatpush.msra.mxu0 %v529
        %623 = vmatpush.msra.mxu0 %v526
        %624 = vmatpush.msra.mxu0 %v523
        %625 = vmatmul.f32.gmra.mxu0 %v511
        %v626 = vpop.f32.mrf.mxu0
        %v627 = vadd.f32 0.0, %v626
        %628 = vdwg.mxu0
        %v629 = vadd.f32 %v520, %v587
        %v630 = vxor.u32 %v629, 2147483648
        %v631 = vmul.f32 %v630, 1.442695
        %v632 = vpow.pop %v631
        %v633 = vadd.f32 %v632, 1.0
        %v634 = vrcp.pop %v633
        %v635 = vmul.f32 %v633, %v634
        %v636 = vsub.f32 1.0, %v635
        %v637 = vmul.f32 %v634, %v636
        %v638 = vadd.f32 %v634, %v637
        %vm639 = vweird.f32 %v633
        %vm640 = vweird.f32 %v634
        %vm641 = vmor %vm639, %vm640
        %v642 = vsel %vm641, %v634, %v638
        %v643 = vand.u32 2147483647, %v633
        %vm644 = vcmp.eq.f32.partialorder %v643, 8.507059e+37
        %v645 = vand.u32 %v633, 2147483648
        %v646 = vor.u32 1.1754944e-38, %v645
        %v647 = vsel %vm644, %v646, %v642
        %v648 = vmul.f32 1.0, %v647
        %v650 = vrot.slane %v520, 2
        %v652 = vadd.f32 %v650, %v607
        %v653 = vxor.u32 %v652, 2147483648
        %v654 = vmul.f32 %v653, 1.442695
        %v655 = vpow.pop %v654
        %v656 = vadd.f32 %v655, 1.0
        %v657 = vrcp.pop %v656
        %v658 = vmul.f32 %v656, %v657
        %v659 = vsub.f32 1.0, %v658
        %v660 = vmul.f32 %v657, %v659
        %v661 = vadd.f32 %v657, %v660
        %vm662 = vweird.f32 %v656
        %vm663 = vweird.f32 %v657
        %vm664 = vmor %vm662, %vm663
        %v665 = vsel %vm664, %v657, %v661
        %v666 = vand.u32 2147483647, %v656
        %vm667 = vcmp.eq.f32.partialorder %v666, 8.507059e+37
        %v668 = vand.u32 %v656, 2147483648
        %v669 = vor.u32 1.1754944e-38, %v668
        %v670 = vsel %vm667, %v669, %v665
        %v671 = vmul.f32 1.0, %v670
        %v672 = vadd.f32 %v627, %v501
        %v673 = vmul.f32 %v648, %v672
        %v674 = vrot.slane %v520, 4
        %v676 = vadd.f32 %v674, %v673
        %v677 = vtanh.pop %v676
        %v678 = vsub.f32 %v511, %v677
        %v679 = vmul.f32 %v671, %v678
        %v680 = vadd.f32 %v677, %v679
        %s681 = smul.u32 %s516, 2
        %s682 = scalar_lea.vmem %s299, %s681 [#allocation6]
        %683 = vst [vmem:[%s682] sm:$0x3] %v680
        %s684 = smul.u32 %s26, 3
        %s685 = sadd.s32 %s684, 2
        %s686 = smul.u32 %s685, 3
        %s687 = smul.addr %s686, 2
        %s688 = scalar_lea.vmem %s319, %s687
        %v689 = vld [vmem:[%s688] sm:$0x3f]
        %v690 = vld [vmem:[%s259] sm:$0xff]
        %v691 = vld [vmem:[%s259 + $0x8] sm:$0xff]
        %v692 = vld [vmem:[%s259 + $0x10] sm:$0xff]
        %v693 = vld [vmem:[%s259 + $0x18] sm:$0xff]
        %v694 = vld [vmem:[%s259 + $0x20] sm:$0xff]
        %v695 = vld [vmem:[%s259 + $0x28] sm:$0xff]
        %v696 = vld [vmem:[%s259 + $0x30] sm:$0xff]
        %v697 = vld [vmem:[%s259 + $0x38] sm:$0xff]
        %v698 = vld [vmem:[%s259 + $0x40] sm:$0xff]
        %v699 = vld [vmem:[%s259 + $0x48] sm:$0xff]
        %v700 = vld [vmem:[%s259 + $0x50] sm:$0xff]
        %v701 = vld [vmem:[%s259 + $0x58] sm:$0xff]
        %v702 = vld [vmem:[%s259 + $0x60] sm:$0xff]
        %v703 = vld [vmem:[%s259 + $0x68] sm:$0xff]
        %v704 = vld [vmem:[%s259 + $0x70] sm:$0xff]
        %v705 = vld [vmem:[%s259 + $0x78] sm:$0xff]
        %v706 = vld [vmem:[%s259 + $0x80] sm:$0xff]
        %v707 = vld [vmem:[%s259 + $0x88] sm:$0xff]
        %v708 = vld [vmem:[%s259 + $0x90] sm:$0xff]
        %v709 = vld [vmem:[%s259 + $0x98] sm:$0xff]
        %v710 = vld [vmem:[%s259 + $0xa0] sm:$0xff]
        %v711 = vld [vmem:[%s259 + $0xa8] sm:$0xff]
        %v712 = vld [vmem:[%s259 + $0xb0] sm:$0xff]
        %v713 = vld [vmem:[%s259 + $0xb8] sm:$0xff]
        %v714 = vld [vmem:[%s259 + $0xc0] sm:$0xff]
        %v715 = vld [vmem:[%s259 + $0xc8] sm:$0xff]
        %v716 = vld [vmem:[%s259 + $0xd0] sm:$0xff]
        %v717 = vld [vmem:[%s259 + $0xd8] sm:$0xff]
        %v718 = vld [vmem:[%s259 + $0xe0] sm:$0xff]
        %v719 = vld [vmem:[%s259 + $0xe8] sm:$0xff]
        %v720 = vld [vmem:[%s259 + $0xf0] sm:$0xff]
        %v721 = vld [vmem:[%s259 + $0xf8] sm:$0xff]
        %v722 = vld [vmem:[%s259 + $0x100] sm:$0xff]
        %v723 = vld [vmem:[%s259 + $0x108] sm:$0xff]
        %v724 = vld [vmem:[%s259 + $0x110] sm:$0xff]
        %v725 = vld [vmem:[%s259 + $0x118] sm:$0xff]
        %v726 = vld [vmem:[%s259 + $0x120] sm:$0xff]
        %v727 = vld [vmem:[%s259 + $0x128] sm:$0xff]
        %v728 = vld [vmem:[%s259 + $0x130] sm:$0xff]
        %v729 = vld [vmem:[%s259 + $0x138] sm:$0xff]
        %v730 = vld [vmem:[%s259 + $0x140] sm:$0xff]
        %v731 = vld [vmem:[%s259 + $0x148] sm:$0xff]
        %v732 = vld [vmem:[%s259 + $0x150] sm:$0xff]
        %v733 = vld [vmem:[%s259 + $0x158] sm:$0xff]
        %v734 = vld [vmem:[%s259 + $0x160] sm:$0xff]
        %v735 = vld [vmem:[%s259 + $0x168] sm:$0xff]
        %v736 = vld [vmem:[%s259 + $0x170] sm:$0xff]
        %v737 = vld [vmem:[%s259 + $0x178] sm:$0xff]
        %738 = vmatpush.msra.mxu0 %v735
        %739 = vmatpush.msra.mxu0 %v732
        %740 = vmatpush.msra.mxu0 %v729
        %741 = vmatpush.msra.mxu0 %v726
        %742 = vmatpush.msra.mxu0 %v723
        %743 = vmatpush.msra.mxu0 %v720
        %744 = vmatpush.msra.mxu0 %v717
        %745 = vmatpush.msra.mxu0 %v714
        %746 = vmatpush.msra.mxu0 %v711
        %747 = vmatpush.msra.mxu0 %v708
        %748 = vmatpush.msra.mxu0 %v705
        %749 = vmatpush.msra.mxu0 %v702
        %750 = vmatpush.msra.mxu0 %v699
        %751 = vmatpush.msra.mxu0 %v696
        %752 = vmatpush.msra.mxu0 %v693
        %753 = vmatpush.msra.mxu0 %v690
        %754 = vmatmul.f32.gmra.mxu0 %v680
        %v755 = vpop.f32.mrf.mxu0
        %v756 = vadd.f32 0.0, %v755
        %757 = vdwg.mxu0
        %758 = vmatpush.msra.mxu0 %v736
        %759 = vmatpush.msra.mxu0 %v733
        %760 = vmatpush.msra.mxu0 %v730
        %761 = vmatpush.msra.mxu0 %v727
        %762 = vmatpush.msra.mxu0 %v724
        %763 = vmatpush.msra.mxu0 %v721
        %764 = vmatpush.msra.mxu0 %v718
        %765 = vmatpush.msra.mxu0 %v715
        %766 = vmatpush.msra.mxu0 %v712
        %767 = vmatpush.msra.mxu0 %v709
        %768 = vmatpush.msra.mxu0 %v706
        %769 = vmatpush.msra.mxu0 %v703
        %770 = vmatpush.msra.mxu0 %v700
        %771 = vmatpush.msra.mxu0 %v697
        %772 = vmatpush.msra.mxu0 %v694
        %773 = vmatpush.msra.mxu0 %v691
        %774 = vmatmul.f32.gmra.mxu0 %v680
        %v775 = vpop.f32.mrf.mxu0
        %v776 = vadd.f32 0.0, %v775
        %777 = vdwg.mxu0
        %778 = vmatpush.msra.mxu0 %v737
        %779 = vmatpush.msra.mxu0 %v734
        %780 = vmatpush.msra.mxu0 %v731
        %781 = vmatpush.msra.mxu0 %v728
        %782 = vmatpush.msra.mxu0 %v725
        %783 = vmatpush.msra.mxu0 %v722
        %784 = vmatpush.msra.mxu0 %v719
        %785 = vmatpush.msra.mxu0 %v716
        %786 = vmatpush.msra.mxu0 %v713
        %787 = vmatpush.msra.mxu0 %v710
        %788 = vmatpush.msra.mxu0 %v707
        %789 = vmatpush.msra.mxu0 %v704
        %790 = vmatpush.msra.mxu0 %v701
        %791 = vmatpush.msra.mxu0 %v698
        %792 = vmatpush.msra.mxu0 %v695
        %793 = vmatpush.msra.mxu0 %v692
        %794 = vmatmul.f32.gmra.mxu0 %v680
        %v795 = vpop.f32.mrf.mxu0
        %v796 = vadd.f32 0.0, %v795
        %797 = vdwg.mxu0
        %v798 = vadd.f32 %v689, %v756
        %v799 = vxor.u32 %v798, 2147483648
        %v800 = vmul.f32 %v799, 1.442695
        %v801 = vpow.pop %v800
        %v802 = vadd.f32 %v801, 1.0
        %v803 = vrcp.pop %v802
        %v804 = vmul.f32 %v802, %v803
        %v805 = vsub.f32 1.0, %v804
        %v806 = vmul.f32 %v803, %v805
        %v807 = vadd.f32 %v803, %v806
        %vm808 = vweird.f32 %v802
        %vm809 = vweird.f32 %v803
        %vm810 = vmor %vm808, %vm809
        %v811 = vsel %vm810, %v803, %v807
        %v812 = vand.u32 2147483647, %v802
        %vm813 = vcmp.eq.f32.partialorder %v812, 8.507059e+37
        %v814 = vand.u32 %v802, 2147483648
        %v815 = vor.u32 1.1754944e-38, %v814
        %v816 = vsel %vm813, %v815, %v811
        %v817 = vmul.f32 1.0, %v816
        %v819 = vrot.slane %v689, 2
        %v821 = vadd.f32 %v819, %v776
        %v822 = vxor.u32 %v821, 2147483648
        %v823 = vmul.f32 %v822, 1.442695
        %v824 = vpow.pop %v823
        %v825 = vadd.f32 %v824, 1.0
        %v826 = vrcp.pop %v825
        %v827 = vmul.f32 %v825, %v826
        %v828 = vsub.f32 1.0, %v827
        %v829 = vmul.f32 %v826, %v828
        %v830 = vadd.f32 %v826, %v829
        %vm831 = vweird.f32 %v825
        %vm832 = vweird.f32 %v826
        %vm833 = vmor %vm831, %vm832
        %v834 = vsel %vm833, %v826, %v830
        %v835 = vand.u32 2147483647, %v825
        %vm836 = vcmp.eq.f32.partialorder %v835, 8.507059e+37
        %v837 = vand.u32 %v825, 2147483648
        %v838 = vor.u32 1.1754944e-38, %v837
        %v839 = vsel %vm836, %v838, %v834
        %v840 = vmul.f32 1.0, %v839
        %v841 = vadd.f32 %v796, %v501
        %v842 = vmul.f32 %v817, %v841
        %v843 = vrot.slane %v689, 4
        %v845 = vadd.f32 %v843, %v842
        %v846 = vtanh.pop %v845
        %v847 = vsub.f32 %v680, %v846
        %v848 = vmul.f32 %v840, %v847
        %v849 = vadd.f32 %v846, %v848
        %s850 = smul.u32 %s685, 2
        %s851 = scalar_lea.vmem %s299, %s850 [#allocation6]
        %852 = vst [vmem:[%s851] sm:$0x3] %v849
        %s853 = sadd.s32 %s26, 3
        %s854 = smul.u32 %s853, 3
        %s855 = smul.addr %s854, 2
        %s856 = scalar_lea.vmem %s319, %s855
        %v857 = vld [vmem:[%s856] sm:$0x3f]
        %v858 = vld [vmem:[%s259] sm:$0xff]
        %v859 = vld [vmem:[%s259 + $0x8] sm:$0xff]
        %v860 = vld [vmem:[%s259 + $0x10] sm:$0xff]
        %v861 = vld [vmem:[%s259 + $0x18] sm:$0xff]
        %v862 = vld [vmem:[%s259 + $0x20] sm:$0xff]
        %v863 = vld [vmem:[%s259 + $0x28] sm:$0xff]
        %v864 = vld [vmem:[%s259 + $0x30] sm:$0xff]
        %v865 = vld [vmem:[%s259 + $0x38] sm:$0xff]
        %v866 = vld [vmem:[%s259 + $0x40] sm:$0xff]
        %v867 = vld [vmem:[%s259 + $0x48] sm:$0xff]
        %v868 = vld [vmem:[%s259 + $0x50] sm:$0xff]
        %v869 = vld [vmem:[%s259 + $0x58] sm:$0xff]
        %v870 = vld [vmem:[%s259 + $0x60] sm:$0xff]
        %v871 = vld [vmem:[%s259 + $0x68] sm:$0xff]
        %v872 = vld [vmem:[%s259 + $0x70] sm:$0xff]
        %v873 = vld [vmem:[%s259 + $0x78] sm:$0xff]
        %v874 = vld [vmem:[%s259 + $0x80] sm:$0xff]
        %v875 = vld [vmem:[%s259 + $0x88] sm:$0xff]
        %v876 = vld [vmem:[%s259 + $0x90] sm:$0xff]
        %v877 = vld [vmem:[%s259 + $0x98] sm:$0xff]
        %v878 = vld [vmem:[%s259 + $0xa0] sm:$0xff]
        %v879 = vld [vmem:[%s259 + $0xa8] sm:$0xff]
        %v880 = vld [vmem:[%s259 + $0xb0] sm:$0xff]
        %v881 = vld [vmem:[%s259 + $0xb8] sm:$0xff]
        %v882 = vld [vmem:[%s259 + $0xc0] sm:$0xff]
        %v883 = vld [vmem:[%s259 + $0xc8] sm:$0xff]
        %v884 = vld [vmem:[%s259 + $0xd0] sm:$0xff]
        %v885 = vld [vmem:[%s259 + $0xd8] sm:$0xff]
        %v886 = vld [vmem:[%s259 + $0xe0] sm:$0xff]
        %v887 = vld [vmem:[%s259 + $0xe8] sm:$0xff]
        %v888 = vld [vmem:[%s259 + $0xf0] sm:$0xff]
        %v889 = vld [vmem:[%s259 + $0xf8] sm:$0xff]
        %v890 = vld [vmem:[%s259 + $0x100] sm:$0xff]
        %v891 = vld [vmem:[%s259 + $0x108] sm:$0xff]
        %v892 = vld [vmem:[%s259 + $0x110] sm:$0xff]
        %v893 = vld [vmem:[%s259 + $0x118] sm:$0xff]
        %v894 = vld [vmem:[%s259 + $0x120] sm:$0xff]
        %v895 = vld [vmem:[%s259 + $0x128] sm:$0xff]
        %v896 = vld [vmem:[%s259 + $0x130] sm:$0xff]
        %v897 = vld [vmem:[%s259 + $0x138] sm:$0xff]
        %v898 = vld [vmem:[%s259 + $0x140] sm:$0xff]
        %v899 = vld [vmem:[%s259 + $0x148] sm:$0xff]
        %v900 = vld [vmem:[%s259 + $0x150] sm:$0xff]
        %v901 = vld [vmem:[%s259 + $0x158] sm:$0xff]
        %v902 = vld [vmem:[%s259 + $0x160] sm:$0xff]
        %v903 = vld [vmem:[%s259 + $0x168] sm:$0xff]
        %v904 = vld [vmem:[%s259 + $0x170] sm:$0xff]
        %v905 = vld [vmem:[%s259 + $0x178] sm:$0xff]
        %906 = vmatpush.msra.mxu0 %v903
        %907 = vmatpush.msra.mxu0 %v900
        %908 = vmatpush.msra.mxu0 %v897
        %909 = vmatpush.msra.mxu0 %v894
        %910 = vmatpush.msra.mxu0 %v891
        %911 = vmatpush.msra.mxu0 %v888
        %912 = vmatpush.msra.mxu0 %v885
        %913 = vmatpush.msra.mxu0 %v882
        %914 = vmatpush.msra.mxu0 %v879
        %915 = vmatpush.msra.mxu0 %v876
        %916 = vmatpush.msra.mxu0 %v873
        %917 = vmatpush.msra.mxu0 %v870
        %918 = vmatpush.msra.mxu0 %v867
        %919 = vmatpush.msra.mxu0 %v864
        %920 = vmatpush.msra.mxu0 %v861
        %921 = vmatpush.msra.mxu0 %v858
        %922 = vmatmul.f32.gmra.mxu0 %v849
        %v923 = vpop.f32.mrf.mxu0
        %v924 = vadd.f32 0.0, %v923
        %925 = vdwg.mxu0
        %926 = vmatpush.msra.mxu0 %v904
        %927 = vmatpush.msra.mxu0 %v901
        %928 = vmatpush.msra.mxu0 %v898
        %929 = vmatpush.msra.mxu0 %v895
        %930 = vmatpush.msra.mxu0 %v892
        %931 = vmatpush.msra.mxu0 %v889
        %932 = vmatpush.msra.mxu0 %v886
        %933 = vmatpush.msra.mxu0 %v883
        %934 = vmatpush.msra.mxu0 %v880
        %935 = vmatpush.msra.mxu0 %v877
        %936 = vmatpush.msra.mxu0 %v874
        %937 = vmatpush.msra.mxu0 %v871
        %938 = vmatpush.msra.mxu0 %v868
        %939 = vmatpush.msra.mxu0 %v865
        %940 = vmatpush.msra.mxu0 %v862
        %941 = vmatpush.msra.mxu0 %v859
        %942 = vmatmul.f32.gmra.mxu0 %v849
        %v943 = vpop.f32.mrf.mxu0
        %v944 = vadd.f32 0.0, %v943
        %945 = vdwg.mxu0
        %946 = vmatpush.msra.mxu0 %v905
        %947 = vmatpush.msra.mxu0 %v902
        %948 = vmatpush.msra.mxu0 %v899
        %949 = vmatpush.msra.mxu0 %v896
        %950 = vmatpush.msra.mxu0 %v893
        %951 = vmatpush.msra.mxu0 %v890
        %952 = vmatpush.msra.mxu0 %v887
        %953 = vmatpush.msra.mxu0 %v884
        %954 = vmatpush.msra.mxu0 %v881
        %955 = vmatpush.msra.mxu0 %v878
        %956 = vmatpush.msra.mxu0 %v875
        %957 = vmatpush.msra.mxu0 %v872
        %958 = vmatpush.msra.mxu0 %v869
        %959 = vmatpush.msra.mxu0 %v866
        %960 = vmatpush.msra.mxu0 %v863
        %961 = vmatpush.msra.mxu0 %v860
        %962 = vmatmul.f32.gmra.mxu0 %v849
        %v963 = vpop.f32.mrf.mxu0
        %v964 = vadd.f32 0.0, %v963
        %965 = vdwg.mxu0
        %v966 = vadd.f32 %v857, %v924
        %v967 = vxor.u32 %v966, 2147483648
        %v968 = vmul.f32 %v967, 1.442695
        %v969 = vpow.pop %v968
        %v970 = vadd.f32 %v969, 1.0
        %v971 = vrcp.pop %v970
        %v972 = vmul.f32 %v970, %v971
        %v973 = vsub.f32 1.0, %v972
        %v974 = vmul.f32 %v971, %v973
        %v975 = vadd.f32 %v971, %v974
        %vm976 = vweird.f32 %v970
        %vm977 = vweird.f32 %v971
        %vm978 = vmor %vm976, %vm977
        %v979 = vsel %vm978, %v971, %v975
        %v980 = vand.u32 2147483647, %v970
        %vm981 = vcmp.eq.f32.partialorder %v980, 8.507059e+37
        %v982 = vand.u32 %v970, 2147483648
        %v983 = vor.u32 1.1754944e-38, %v982
        %v984 = vsel %vm981, %v983, %v979
        %v985 = vmul.f32 1.0, %v984
        %v987 = vrot.slane %v857, 2
        %v989 = vadd.f32 %v987, %v944
        %v990 = vxor.u32 %v989, 2147483648
        %v991 = vmul.f32 %v990, 1.442695
        %v992 = vpow.pop %v991
        %v993 = vadd.f32 %v992, 1.0
        %v994 = vrcp.pop %v993
        %v995 = vmul.f32 %v993, %v994
        %v996 = vsub.f32 1.0, %v995
        %v997 = vmul.f32 %v994, %v996
        %v998 = vadd.f32 %v994, %v997
        %vm999 = vweird.f32 %v993
        %vm1000 = vweird.f32 %v994
        %vm1001 = vmor %vm999, %vm1000
        %v1002 = vsel %vm1001, %v994, %v998
        %v1003 = vand.u32 2147483647, %v993
        %vm1004 = vcmp.eq.f32.partialorder %v1003, 8.507059e+37
        %v1005 = vand.u32 %v993, 2147483648
        %v1006 = vor.u32 1.1754944e-38, %v1005
        %v1007 = vsel %vm1004, %v1006, %v1002
        %v1008 = vmul.f32 1.0, %v1007
        %v1009 = vadd.f32 %v964, %v501
        %v1010 = vmul.f32 %v985, %v1009
        %v1011 = vrot.slane %v857, 4
        %v1013 = vadd.f32 %v1011, %v1010
        %v1014 = vtanh.pop %v1013
        %v1015 = vsub.f32 %v849, %v1014
        %v1016 = vmul.f32 %v1008, %v1015
        %v1017 = vadd.f32 %v1014, %v1016
        %s1018 = smul.u32 %s853, 2
        %s1019 = scalar_lea.vmem %s299, %s1018 [#allocation6]
        %1020 = vst [vmem:[%s1019] sm:$0x3] %v1017
        %s1021 = ssub.s32 4, %s26
        %s1022 = smul.u32 %s1021, 3
        %s1023 = smul.addr %s1022, 2
        %s1024 = scalar_lea.vmem %s319, %s1023
        %v1025 = vld [vmem:[%s1024] sm:$0x3f]
        %v1026 = vld [vmem:[%s259] sm:$0xff]
        %v1027 = vld [vmem:[%s259 + $0x8] sm:$0xff]
        %v1028 = vld [vmem:[%s259 + $0x10] sm:$0xff]
        %v1029 = vld [vmem:[%s259 + $0x18] sm:$0xff]
        %v1030 = vld [vmem:[%s259 + $0x20] sm:$0xff]
        %v1031 = vld [vmem:[%s259 + $0x28] sm:$0xff]
        %v1032 = vld [vmem:[%s259 + $0x30] sm:$0xff]
        %v1033 = vld [vmem:[%s259 + $0x38] sm:$0xff]
        %v1034 = vld [vmem:[%s259 + $0x40] sm:$0xff]
        %v1035 = vld [vmem:[%s259 + $0x48] sm:$0xff]
        %v1036 = vld [vmem:[%s259 + $0x50] sm:$0xff]
        %v1037 = vld [vmem:[%s259 + $0x58] sm:$0xff]
        %v1038 = vld [vmem:[%s259 + $0x60] sm:$0xff]
        %v1039 = vld [vmem:[%s259 + $0x68] sm:$0xff]
        %v1040 = vld [vmem:[%s259 + $0x70] sm:$0xff]
        %v1041 = vld [vmem:[%s259 + $0x78] sm:$0xff]
        %v1042 = vld [vmem:[%s259 + $0x80] sm:$0xff]
        %v1043 = vld [vmem:[%s259 + $0x88] sm:$0xff]
        %v1044 = vld [vmem:[%s259 + $0x90] sm:$0xff]
        %v1045 = vld [vmem:[%s259 + $0x98] sm:$0xff]
        %v1046 = vld [vmem:[%s259 + $0xa0] sm:$0xff]
        %v1047 = vld [vmem:[%s259 + $0xa8] sm:$0xff]
        %v1048 = vld [vmem:[%s259 + $0xb0] sm:$0xff]
        %v1049 = vld [vmem:[%s259 + $0xb8] sm:$0xff]
        %v1050 = vld [vmem:[%s259 + $0xc0] sm:$0xff]
        %v1051 = vld [vmem:[%s259 + $0xc8] sm:$0xff]
        %v1052 = vld [vmem:[%s259 + $0xd0] sm:$0xff]
        %v1053 = vld [vmem:[%s259 + $0xd8] sm:$0xff]
        %v1054 = vld [vmem:[%s259 + $0xe0] sm:$0xff]
        %v1055 = vld [vmem:[%s259 + $0xe8] sm:$0xff]
        %v1056 = vld [vmem:[%s259 + $0xf0] sm:$0xff]
        %v1057 = vld [vmem:[%s259 + $0xf8] sm:$0xff]
        %v1058 = vld [vmem:[%s259 + $0x100] sm:$0xff]
        %v1059 = vld [vmem:[%s259 + $0x108] sm:$0xff]
        %v1060 = vld [vmem:[%s259 + $0x110] sm:$0xff]
        %v1061 = vld [vmem:[%s259 + $0x118] sm:$0xff]
        %v1062 = vld [vmem:[%s259 + $0x120] sm:$0xff]
        %v1063 = vld [vmem:[%s259 + $0x128] sm:$0xff]
        %v1064 = vld [vmem:[%s259 + $0x130] sm:$0xff]
        %v1065 = vld [vmem:[%s259 + $0x138] sm:$0xff]
        %v1066 = vld [vmem:[%s259 + $0x140] sm:$0xff]
        %v1067 = vld [vmem:[%s259 + $0x148] sm:$0xff]
        %v1068 = vld [vmem:[%s259 + $0x150] sm:$0xff]
        %v1069 = vld [vmem:[%s259 + $0x158] sm:$0xff]
        %v1070 = vld [vmem:[%s259 + $0x160] sm:$0xff]
        %v1071 = vld [vmem:[%s259 + $0x168] sm:$0xff]
        %v1072 = vld [vmem:[%s259 + $0x170] sm:$0xff]
        %v1073 = vld [vmem:[%s259 + $0x178] sm:$0xff]
        %1074 = vmatpush.msra.mxu0 %v1071
        %1075 = vmatpush.msra.mxu0 %v1068
        %1076 = vmatpush.msra.mxu0 %v1065
        %1077 = vmatpush.msra.mxu0 %v1062
        %1078 = vmatpush.msra.mxu0 %v1059
        %1079 = vmatpush.msra.mxu0 %v1056
        %1080 = vmatpush.msra.mxu0 %v1053
        %1081 = vmatpush.msra.mxu0 %v1050
        %1082 = vmatpush.msra.mxu0 %v1047
        %1083 = vmatpush.msra.mxu0 %v1044
        %1084 = vmatpush.msra.mxu0 %v1041
        %1085 = vmatpush.msra.mxu0 %v1038
        %1086 = vmatpush.msra.mxu0 %v1035
        %1087 = vmatpush.msra.mxu0 %v1032
        %1088 = vmatpush.msra.mxu0 %v1029
        %1089 = vmatpush.msra.mxu0 %v1026
        %1090 = vmatmul.f32.gmra.mxu0 %v1017
        %v1091 = vpop.f32.mrf.mxu0
        %v1092 = vadd.f32 0.0, %v1091
        %1093 = vdwg.mxu0
        %1094 = vmatpush.msra.mxu0 %v1072
        %1095 = vmatpush.msra.mxu0 %v1069
        %1096 = vmatpush.msra.mxu0 %v1066
        %1097 = vmatpush.msra.mxu0 %v1063
        %1098 = vmatpush.msra.mxu0 %v1060
        %1099 = vmatpush.msra.mxu0 %v1057
        %1100 = vmatpush.msra.mxu0 %v1054
        %1101 = vmatpush.msra.mxu0 %v1051
        %1102 = vmatpush.msra.mxu0 %v1048
        %1103 = vmatpush.msra.mxu0 %v1045
        %1104 = vmatpush.msra.mxu0 %v1042
        %1105 = vmatpush.msra.mxu0 %v1039
        %1106 = vmatpush.msra.mxu0 %v1036
        %1107 = vmatpush.msra.mxu0 %v1033
        %1108 = vmatpush.msra.mxu0 %v1030
        %1109 = vmatpush.msra.mxu0 %v1027
        %1110 = vmatmul.f32.gmra.mxu0 %v1017
        %v1111 = vpop.f32.mrf.mxu0
        %v1112 = vadd.f32 0.0, %v1111
        %1113 = vdwg.mxu0
        %1114 = vmatpush.msra.mxu0 %v1073
        %1115 = vmatpush.msra.mxu0 %v1070
        %1116 = vmatpush.msra.mxu0 %v1067
        %1117 = vmatpush.msra.mxu0 %v1064
        %1118 = vmatpush.msra.mxu0 %v1061
        %1119 = vmatpush.msra.mxu0 %v1058
        %1120 = vmatpush.msra.mxu0 %v1055
        %1121 = vmatpush.msra.mxu0 %v1052
        %1122 = vmatpush.msra.mxu0 %v1049
        %1123 = vmatpush.msra.mxu0 %v1046
        %1124 = vmatpush.msra.mxu0 %v1043
        %1125 = vmatpush.msra.mxu0 %v1040
        %1126 = vmatpush.msra.mxu0 %v1037
        %1127 = vmatpush.msra.mxu0 %v1034
        %1128 = vmatpush.msra.mxu0 %v1031
        %1129 = vmatpush.msra.mxu0 %v1028
        %1130 = vmatmul.f32.gmra.mxu0 %v1017
        %v1131 = vpop.f32.mrf.mxu0
        %v1132 = vadd.f32 0.0, %v1131
        %1133 = vdwg.mxu0
        %v1134 = vadd.f32 %v1025, %v1092
        %v1135 = vxor.u32 %v1134, 2147483648
        %v1136 = vmul.f32 %v1135, 1.442695
        %v1137 = vpow.pop %v1136
        %v1138 = vadd.f32 %v1137, 1.0
        %v1139 = vrcp.pop %v1138
        %v1140 = vmul.f32 %v1138, %v1139
        %v1141 = vsub.f32 1.0, %v1140
        %v1142 = vmul.f32 %v1139, %v1141
        %v1143 = vadd.f32 %v1139, %v1142
        %vm1144 = vweird.f32 %v1138
        %vm1145 = vweird.f32 %v1139
        %vm1146 = vmor %vm1144, %vm1145
        %v1147 = vsel %vm1146, %v1139, %v1143
        %v1148 = vand.u32 2147483647, %v1138
        %vm1149 = vcmp.eq.f32.partialorder %v1148, 8.507059e+37
        %v1150 = vand.u32 %v1138, 2147483648
        %v1151 = vor.u32 1.1754944e-38, %v1150
        %v1152 = vsel %vm1149, %v1151, %v1147
        %v1153 = vmul.f32 1.0, %v1152
        %v1155 = vrot.slane %v1025, 2
        %v1157 = vadd.f32 %v1155, %v1112
        %v1158 = vxor.u32 %v1157, 2147483648
        %v1159 = vmul.f32 %v1158, 1.442695
        %v1160 = vpow.pop %v1159
        %v1161 = vadd.f32 %v1160, 1.0
        %v1162 = vrcp.pop %v1161
        %v1163 = vmul.f32 %v1161, %v1162
        %v1164 = vsub.f32 1.0, %v1163
        %v1165 = vmul.f32 %v1162, %v1164
        %v1166 = vadd.f32 %v1162, %v1165
        %vm1167 = vweird.f32 %v1161
        %vm1168 = vweird.f32 %v1162
        %vm1169 = vmor %vm1167, %vm1168
        %v1170 = vsel %vm1169, %v1162, %v1166
        %v1171 = vand.u32 2147483647, %v1161
        %vm1172 = vcmp.eq.f32.partialorder %v1171, 8.507059e+37
        %v1173 = vand.u32 %v1161, 2147483648
        %v1174 = vor.u32 1.1754944e-38, %v1173
        %v1175 = vsel %vm1172, %v1174, %v1170
        %v1176 = vmul.f32 1.0, %v1175
        %v1177 = vadd.f32 %v1132, %v501
        %v1178 = vmul.f32 %v1153, %v1177
        %v1179 = vrot.slane %v1025, 4
        %v1181 = vadd.f32 %v1179, %v1178
        %v1182 = vtanh.pop %v1181
        %v1183 = vsub.f32 %v1017, %v1182
        %v1184 = vmul.f32 %v1176, %v1183
        %v1185 = vadd.f32 %v1182, %v1184
        %s1186 = smul.u32 %s1021, 2
        %s1187 = scalar_lea.vmem %s299, %s1186 [#allocation6]
        %1188 = vst [vmem:[%s1187] sm:$0x3] %v1185
        %s1189 = smul.u32 %s26, 4294967293
        %s1190 = sadd.s32 %s1189, 5
        %s1191 = smul.u32 %s1190, 3
        %s1192 = smul.addr %s1191, 2
        %s1193 = scalar_lea.vmem %s319, %s1192
        %v1194 = vld [vmem:[%s1193] sm:$0x3f]
        %v1195 = vld [vmem:[%s259] sm:$0xff]
        %v1196 = vld [vmem:[%s259 + $0x8] sm:$0xff]
        %v1197 = vld [vmem:[%s259 + $0x10] sm:$0xff]
        %v1198 = vld [vmem:[%s259 + $0x18] sm:$0xff]
        %v1199 = vld [vmem:[%s259 + $0x20] sm:$0xff]
        %v1200 = vld [vmem:[%s259 + $0x28] sm:$0xff]
        %v1201 = vld [vmem:[%s259 + $0x30] sm:$0xff]
        %v1202 = vld [vmem:[%s259 + $0x38] sm:$0xff]
        %v1203 = vld [vmem:[%s259 + $0x40] sm:$0xff]
        %v1204 = vld [vmem:[%s259 + $0x48] sm:$0xff]
        %v1205 = vld [vmem:[%s259 + $0x50] sm:$0xff]
        %v1206 = vld [vmem:[%s259 + $0x58] sm:$0xff]
        %v1207 = vld [vmem:[%s259 + $0x60] sm:$0xff]
        %v1208 = vld [vmem:[%s259 + $0x68] sm:$0xff]
        %v1209 = vld [vmem:[%s259 + $0x70] sm:$0xff]
        %v1210 = vld [vmem:[%s259 + $0x78] sm:$0xff]
        %v1211 = vld [vmem:[%s259 + $0x80] sm:$0xff]
        %v1212 = vld [vmem:[%s259 + $0x88] sm:$0xff]
        %v1213 = vld [vmem:[%s259 + $0x90] sm:$0xff]
        %v1214 = vld [vmem:[%s259 + $0x98] sm:$0xff]
        %v1215 = vld [vmem:[%s259 + $0xa0] sm:$0xff]
        %v1216 = vld [vmem:[%s259 + $0xa8] sm:$0xff]
        %v1217 = vld [vmem:[%s259 + $0xb0] sm:$0xff]
        %v1218 = vld [vmem:[%s259 + $0xb8] sm:$0xff]
        %v1219 = vld [vmem:[%s259 + $0xc0] sm:$0xff]
        %v1220 = vld [vmem:[%s259 + $0xc8] sm:$0xff]
        %v1221 = vld [vmem:[%s259 + $0xd0] sm:$0xff]
        %v1222 = vld [vmem:[%s259 + $0xd8] sm:$0xff]
        %v1223 = vld [vmem:[%s259 + $0xe0] sm:$0xff]
        %v1224 = vld [vmem:[%s259 + $0xe8] sm:$0xff]
        %v1225 = vld [vmem:[%s259 + $0xf0] sm:$0xff]
        %v1226 = vld [vmem:[%s259 + $0xf8] sm:$0xff]
        %v1227 = vld [vmem:[%s259 + $0x100] sm:$0xff]
        %v1228 = vld [vmem:[%s259 + $0x108] sm:$0xff]
        %v1229 = vld [vmem:[%s259 + $0x110] sm:$0xff]
        %v1230 = vld [vmem:[%s259 + $0x118] sm:$0xff]
        %v1231 = vld [vmem:[%s259 + $0x120] sm:$0xff]
        %v1232 = vld [vmem:[%s259 + $0x128] sm:$0xff]
        %v1233 = vld [vmem:[%s259 + $0x130] sm:$0xff]
        %v1234 = vld [vmem:[%s259 + $0x138] sm:$0xff]
        %v1235 = vld [vmem:[%s259 + $0x140] sm:$0xff]
        %v1236 = vld [vmem:[%s259 + $0x148] sm:$0xff]
        %v1237 = vld [vmem:[%s259 + $0x150] sm:$0xff]
        %v1238 = vld [vmem:[%s259 + $0x158] sm:$0xff]
        %v1239 = vld [vmem:[%s259 + $0x160] sm:$0xff]
        %v1240 = vld [vmem:[%s259 + $0x168] sm:$0xff]
        %v1241 = vld [vmem:[%s259 + $0x170] sm:$0xff]
        %v1242 = vld [vmem:[%s259 + $0x178] sm:$0xff]
        %1243 = vmatpush.msra.mxu0 %v1240
        %1244 = vmatpush.msra.mxu0 %v1237
        %1245 = vmatpush.msra.mxu0 %v1234
        %1246 = vmatpush.msra.mxu0 %v1231
        %1247 = vmatpush.msra.mxu0 %v1228
        %1248 = vmatpush.msra.mxu0 %v1225
        %1249 = vmatpush.msra.mxu0 %v1222
        %1250 = vmatpush.msra.mxu0 %v1219
        %1251 = vmatpush.msra.mxu0 %v1216
        %1252 = vmatpush.msra.mxu0 %v1213
        %1253 = vmatpush.msra.mxu0 %v1210
        %1254 = vmatpush.msra.mxu0 %v1207
        %1255 = vmatpush.msra.mxu0 %v1204
        %1256 = vmatpush.msra.mxu0 %v1201
        %1257 = vmatpush.msra.mxu0 %v1198
        %1258 = vmatpush.msra.mxu0 %v1195
        %1259 = vmatmul.f32.gmra.mxu0 %v1185
        %v1260 = vpop.f32.mrf.mxu0
        %v1261 = vadd.f32 0.0, %v1260
        %1262 = vdwg.mxu0
        %1263 = vmatpush.msra.mxu0 %v1241
        %1264 = vmatpush.msra.mxu0 %v1238
        %1265 = vmatpush.msra.mxu0 %v1235
        %1266 = vmatpush.msra.mxu0 %v1232
        %1267 = vmatpush.msra.mxu0 %v1229
        %1268 = vmatpush.msra.mxu0 %v1226
        %1269 = vmatpush.msra.mxu0 %v1223
        %1270 = vmatpush.msra.mxu0 %v1220
        %1271 = vmatpush.msra.mxu0 %v1217
        %1272 = vmatpush.msra.mxu0 %v1214
        %1273 = vmatpush.msra.mxu0 %v1211
        %1274 = vmatpush.msra.mxu0 %v1208
        %1275 = vmatpush.msra.mxu0 %v1205
        %1276 = vmatpush.msra.mxu0 %v1202
        %1277 = vmatpush.msra.mxu0 %v1199
        %1278 = vmatpush.msra.mxu0 %v1196
        %1279 = vmatmul.f32.gmra.mxu0 %v1185
        %v1280 = vpop.f32.mrf.mxu0
        %v1281 = vadd.f32 0.0, %v1280
        %1282 = vdwg.mxu0
        %1283 = vmatpush.msra.mxu0 %v1242
        %1284 = vmatpush.msra.mxu0 %v1239
        %1285 = vmatpush.msra.mxu0 %v1236
        %1286 = vmatpush.msra.mxu0 %v1233
        %1287 = vmatpush.msra.mxu0 %v1230
        %1288 = vmatpush.msra.mxu0 %v1227
        %1289 = vmatpush.msra.mxu0 %v1224
        %1290 = vmatpush.msra.mxu0 %v1221
        %1291 = vmatpush.msra.mxu0 %v1218
        %1292 = vmatpush.msra.mxu0 %v1215
        %1293 = vmatpush.msra.mxu0 %v1212
        %1294 = vmatpush.msra.mxu0 %v1209
        %1295 = vmatpush.msra.mxu0 %v1206
        %1296 = vmatpush.msra.mxu0 %v1203
        %1297 = vmatpush.msra.mxu0 %v1200
        %1298 = vmatpush.msra.mxu0 %v1197
        %1299 = vmatmul.f32.gmra.mxu0 %v1185
        %v1300 = vpop.f32.mrf.mxu0
        %v1301 = vadd.f32 0.0, %v1300
        %1302 = vdwg.mxu0
        %v1303 = vadd.f32 %v1194, %v1261
        %v1304 = vxor.u32 %v1303, 2147483648
        %v1305 = vmul.f32 %v1304, 1.442695
        %v1306 = vpow.pop %v1305
        %v1307 = vadd.f32 %v1306, 1.0
        %v1308 = vrcp.pop %v1307
        %v1309 = vmul.f32 %v1307, %v1308
        %v1310 = vsub.f32 1.0, %v1309
        %v1311 = vmul.f32 %v1308, %v1310
        %v1312 = vadd.f32 %v1308, %v1311
        %vm1313 = vweird.f32 %v1307
        %vm1314 = vweird.f32 %v1308
        %vm1315 = vmor %vm1313, %vm1314
        %v1316 = vsel %vm1315, %v1308, %v1312
        %v1317 = vand.u32 2147483647, %v1307
        %vm1318 = vcmp.eq.f32.partialorder %v1317, 8.507059e+37
        %v1319 = vand.u32 %v1307, 2147483648
        %v1320 = vor.u32 1.1754944e-38, %v1319
        %v1321 = vsel %vm1318, %v1320, %v1316
        %v1322 = vmul.f32 1.0, %v1321
        %v1324 = vrot.slane %v1194, 2
        %v1326 = vadd.f32 %v1324, %v1281
        %v1327 = vxor.u32 %v1326, 2147483648
        %v1328 = vmul.f32 %v1327, 1.442695
        %v1329 = vpow.pop %v1328
        %v1330 = vadd.f32 %v1329, 1.0
        %v1331 = vrcp.pop %v1330
        %v1332 = vmul.f32 %v1330, %v1331
        %v1333 = vsub.f32 1.0, %v1332
        %v1334 = vmul.f32 %v1331, %v1333
        %v1335 = vadd.f32 %v1331, %v1334
        %vm1336 = vweird.f32 %v1330
        %vm1337 = vweird.f32 %v1331
        %vm1338 = vmor %vm1336, %vm1337
        %v1339 = vsel %vm1338, %v1331, %v1335
        %v1340 = vand.u32 2147483647, %v1330
        %vm1341 = vcmp.eq.f32.partialorder %v1340, 8.507059e+37
        %v1342 = vand.u32 %v1330, 2147483648
        %v1343 = vor.u32 1.1754944e-38, %v1342
        %v1344 = vsel %vm1341, %v1343, %v1339
        %v1345 = vmul.f32 1.0, %v1344
        %v1346 = vadd.f32 %v1301, %v501
        %v1347 = vmul.f32 %v1322, %v1346
        %v1348 = vrot.slane %v1194, 4
        %v1350 = vadd.f32 %v1348, %v1347
        %v1351 = vtanh.pop %v1350
        %v1352 = vsub.f32 %v1185, %v1351
        %v1353 = vmul.f32 %v1345, %v1352
        %v1354 = vadd.f32 %v1351, %v1353
        %s1355 = smul.u32 %s1190, 2
        %s1356 = scalar_lea.vmem %s299, %s1355 [#allocation6]
        %1357 = vst [vmem:[%s1356] sm:$0x3] %v1354
        %s1358 = smul.u32 %s26, 4294967291
        %s1359 = sadd.s32 %s1358, 6
        %s1360 = smul.u32 %s1359, 3
        %s1361 = smul.addr %s1360, 2
        %s1362 = scalar_lea.vmem %s319, %s1361
        %v1363 = vld [vmem:[%s1362] sm:$0x3f]
        %v1364 = vld [vmem:[%s259] sm:$0xff]
        %v1365 = vld [vmem:[%s259 + $0x8] sm:$0xff]
        %v1366 = vld [vmem:[%s259 + $0x10] sm:$0xff]
        %v1367 = vld [vmem:[%s259 + $0x18] sm:$0xff]
        %v1368 = vld [vmem:[%s259 + $0x20] sm:$0xff]
        %v1369 = vld [vmem:[%s259 + $0x28] sm:$0xff]
        %v1370 = vld [vmem:[%s259 + $0x30] sm:$0xff]
        %v1371 = vld [vmem:[%s259 + $0x38] sm:$0xff]
        %v1372 = vld [vmem:[%s259 + $0x40] sm:$0xff]
        %v1373 = vld [vmem:[%s259 + $0x48] sm:$0xff]
        %v1374 = vld [vmem:[%s259 + $0x50] sm:$0xff]
        %v1375 = vld [vmem:[%s259 + $0x58] sm:$0xff]
        %v1376 = vld [vmem:[%s259 + $0x60] sm:$0xff]
        %v1377 = vld [vmem:[%s259 + $0x68] sm:$0xff]
        %v1378 = vld [vmem:[%s259 + $0x70] sm:$0xff]
        %v1379 = vld [vmem:[%s259 + $0x78] sm:$0xff]
        %v1380 = vld [vmem:[%s259 + $0x80] sm:$0xff]
        %v1381 = vld [vmem:[%s259 + $0x88] sm:$0xff]
        %v1382 = vld [vmem:[%s259 + $0x90] sm:$0xff]
        %v1383 = vld [vmem:[%s259 + $0x98] sm:$0xff]
        %v1384 = vld [vmem:[%s259 + $0xa0] sm:$0xff]
        %v1385 = vld [vmem:[%s259 + $0xa8] sm:$0xff]
        %v1386 = vld [vmem:[%s259 + $0xb0] sm:$0xff]
        %v1387 = vld [vmem:[%s259 + $0xb8] sm:$0xff]
        %v1388 = vld [vmem:[%s259 + $0xc0] sm:$0xff]
        %v1389 = vld [vmem:[%s259 + $0xc8] sm:$0xff]
        %v1390 = vld [vmem:[%s259 + $0xd0] sm:$0xff]
        %v1391 = vld [vmem:[%s259 + $0xd8] sm:$0xff]
        %v1392 = vld [vmem:[%s259 + $0xe0] sm:$0xff]
        %v1393 = vld [vmem:[%s259 + $0xe8] sm:$0xff]
        %v1394 = vld [vmem:[%s259 + $0xf0] sm:$0xff]
        %v1395 = vld [vmem:[%s259 + $0xf8] sm:$0xff]
        %v1396 = vld [vmem:[%s259 + $0x100] sm:$0xff]
        %v1397 = vld [vmem:[%s259 + $0x108] sm:$0xff]
        %v1398 = vld [vmem:[%s259 + $0x110] sm:$0xff]
        %v1399 = vld [vmem:[%s259 + $0x118] sm:$0xff]
        %v1400 = vld [vmem:[%s259 + $0x120] sm:$0xff]
        %v1401 = vld [vmem:[%s259 + $0x128] sm:$0xff]
        %v1402 = vld [vmem:[%s259 + $0x130] sm:$0xff]
        %v1403 = vld [vmem:[%s259 + $0x138] sm:$0xff]
        %v1404 = vld [vmem:[%s259 + $0x140] sm:$0xff]
        %v1405 = vld [vmem:[%s259 + $0x148] sm:$0xff]
        %v1406 = vld [vmem:[%s259 + $0x150] sm:$0xff]
        %v1407 = vld [vmem:[%s259 + $0x158] sm:$0xff]
        %v1408 = vld [vmem:[%s259 + $0x160] sm:$0xff]
        %v1409 = vld [vmem:[%s259 + $0x168] sm:$0xff]
        %v1410 = vld [vmem:[%s259 + $0x170] sm:$0xff]
        %v1411 = vld [vmem:[%s259 + $0x178] sm:$0xff]
        %1412 = vmatpush.msra.mxu0 %v1409
        %1413 = vmatpush.msra.mxu0 %v1406
        %1414 = vmatpush.msra.mxu0 %v1403
        %1415 = vmatpush.msra.mxu0 %v1400
        %1416 = vmatpush.msra.mxu0 %v1397
        %1417 = vmatpush.msra.mxu0 %v1394
        %1418 = vmatpush.msra.mxu0 %v1391
        %1419 = vmatpush.msra.mxu0 %v1388
        %1420 = vmatpush.msra.mxu0 %v1385
        %1421 = vmatpush.msra.mxu0 %v1382
        %1422 = vmatpush.msra.mxu0 %v1379
        %1423 = vmatpush.msra.mxu0 %v1376
        %1424 = vmatpush.msra.mxu0 %v1373
        %1425 = vmatpush.msra.mxu0 %v1370
        %1426 = vmatpush.msra.mxu0 %v1367
        %1427 = vmatpush.msra.mxu0 %v1364
        %1428 = vmatmul.f32.gmra.mxu0 %v1354
        %v1429 = vpop.f32.mrf.mxu0
        %v1430 = vadd.f32 0.0, %v1429
        %1431 = vdwg.mxu0
        %1432 = vmatpush.msra.mxu0 %v1410
        %1433 = vmatpush.msra.mxu0 %v1407
        %1434 = vmatpush.msra.mxu0 %v1404
        %1435 = vmatpush.msra.mxu0 %v1401
        %1436 = vmatpush.msra.mxu0 %v1398
        %1437 = vmatpush.msra.mxu0 %v1395
        %1438 = vmatpush.msra.mxu0 %v1392
        %1439 = vmatpush.msra.mxu0 %v1389
        %1440 = vmatpush.msra.mxu0 %v1386
        %1441 = vmatpush.msra.mxu0 %v1383
        %1442 = vmatpush.msra.mxu0 %v1380
        %1443 = vmatpush.msra.mxu0 %v1377
        %1444 = vmatpush.msra.mxu0 %v1374
        %1445 = vmatpush.msra.mxu0 %v1371
        %1446 = vmatpush.msra.mxu0 %v1368
        %1447 = vmatpush.msra.mxu0 %v1365
        %1448 = vmatmul.f32.gmra.mxu0 %v1354
        %v1449 = vpop.f32.mrf.mxu0
        %v1450 = vadd.f32 0.0, %v1449
        %1451 = vdwg.mxu0
        %1452 = vmatpush.msra.mxu0 %v1411
        %1453 = vmatpush.msra.mxu0 %v1408
        %1454 = vmatpush.msra.mxu0 %v1405
        %1455 = vmatpush.msra.mxu0 %v1402
        %1456 = vmatpush.msra.mxu0 %v1399
        %1457 = vmatpush.msra.mxu0 %v1396
        %1458 = vmatpush.msra.mxu0 %v1393
        %1459 = vmatpush.msra.mxu0 %v1390
        %1460 = vmatpush.msra.mxu0 %v1387
        %1461 = vmatpush.msra.mxu0 %v1384
        %1462 = vmatpush.msra.mxu0 %v1381
        %1463 = vmatpush.msra.mxu0 %v1378
        %1464 = vmatpush.msra.mxu0 %v1375
        %1465 = vmatpush.msra.mxu0 %v1372
        %1466 = vmatpush.msra.mxu0 %v1369
        %1467 = vmatpush.msra.mxu0 %v1366
        %1468 = vmatmul.f32.gmra.mxu0 %v1354
        %v1469 = vpop.f32.mrf.mxu0
        %v1470 = vadd.f32 0.0, %v1469
        %1471 = vdwg.mxu0
        %v1472 = vadd.f32 %v1363, %v1430
        %v1473 = vxor.u32 %v1472, 2147483648
        %v1474 = vmul.f32 %v1473, 1.442695
        %v1475 = vpow.pop %v1474
        %v1476 = vadd.f32 %v1475, 1.0
        %v1477 = vrcp.pop %v1476
        %v1478 = vmul.f32 %v1476, %v1477
        %v1479 = vsub.f32 1.0, %v1478
        %v1480 = vmul.f32 %v1477, %v1479
        %v1481 = vadd.f32 %v1477, %v1480
        %vm1482 = vweird.f32 %v1476
        %vm1483 = vweird.f32 %v1477
        %vm1484 = vmor %vm1482, %vm1483
        %v1485 = vsel %vm1484, %v1477, %v1481
        %v1486 = vand.u32 2147483647, %v1476
        %vm1487 = vcmp.eq.f32.partialorder %v1486, 8.507059e+37
        %v1488 = vand.u32 %v1476, 2147483648
        %v1489 = vor.u32 1.1754944e-38, %v1488
        %v1490 = vsel %vm1487, %v1489, %v1485
        %v1491 = vmul.f32 1.0, %v1490
        %v1493 = vrot.slane %v1363, 2
        %v1495 = vadd.f32 %v1493, %v1450
        %v1496 = vxor.u32 %v1495, 2147483648
        %v1497 = vmul.f32 %v1496, 1.442695
        %v1498 = vpow.pop %v1497
        %v1499 = vadd.f32 %v1498, 1.0
        %v1500 = vrcp.pop %v1499
        %v1501 = vmul.f32 %v1499, %v1500
        %v1502 = vsub.f32 1.0, %v1501
        %v1503 = vmul.f32 %v1500, %v1502
        %v1504 = vadd.f32 %v1500, %v1503
        %vm1505 = vweird.f32 %v1499
        %vm1506 = vweird.f32 %v1500
        %vm1507 = vmor %vm1505, %vm1506
        %v1508 = vsel %vm1507, %v1500, %v1504
        %v1509 = vand.u32 2147483647, %v1499
        %vm1510 = vcmp.eq.f32.partialorder %v1509, 8.507059e+37
        %v1511 = vand.u32 %v1499, 2147483648
        %v1512 = vor.u32 1.1754944e-38, %v1511
        %v1513 = vsel %vm1510, %v1512, %v1508
        %v1514 = vmul.f32 1.0, %v1513
        %v1515 = vadd.f32 %v1470, %v501
        %v1516 = vmul.f32 %v1491, %v1515
        %v1517 = vrot.slane %v1363, 4
        %v1519 = vadd.f32 %v1517, %v1516
        %v1520 = vtanh.pop %v1519
        %v1521 = vsub.f32 %v1354, %v1520
        %v1522 = vmul.f32 %v1514, %v1521
        %v1523 = vadd.f32 %v1520, %v1522
        %s1524 = smul.u32 %s1359, 2
        %s1525 = scalar_lea.vmem %s299, %s1524 [#allocation6]
        %1526 = vst [vmem:[%s1525] sm:$0x3] %v1523
        %s1527 = smul.u32 %s26, 4294967289
        %s1528 = sadd.s32 %s1527, 7
        %s1529 = smul.u32 %s1528, 3
        %s1530 = smul.addr %s1529, 2
        %s1531 = scalar_lea.vmem %s319, %s1530
        %v1532 = vld [vmem:[%s1531] sm:$0x3f]
        %v1533 = vld [vmem:[%s259] sm:$0xff]
        %v1534 = vld [vmem:[%s259 + $0x8] sm:$0xff]
        %v1535 = vld [vmem:[%s259 + $0x10] sm:$0xff]
        %v1536 = vld [vmem:[%s259 + $0x18] sm:$0xff]
        %v1537 = vld [vmem:[%s259 + $0x20] sm:$0xff]
        %v1538 = vld [vmem:[%s259 + $0x28] sm:$0xff]
        %v1539 = vld [vmem:[%s259 + $0x30] sm:$0xff]
        %v1540 = vld [vmem:[%s259 + $0x38] sm:$0xff]
        %v1541 = vld [vmem:[%s259 + $0x40] sm:$0xff]
        %v1542 = vld [vmem:[%s259 + $0x48] sm:$0xff]
        %v1543 = vld [vmem:[%s259 + $0x50] sm:$0xff]
        %v1544 = vld [vmem:[%s259 + $0x58] sm:$0xff]
        %v1545 = vld [vmem:[%s259 + $0x60] sm:$0xff]
        %v1546 = vld [vmem:[%s259 + $0x68] sm:$0xff]
        %v1547 = vld [vmem:[%s259 + $0x70] sm:$0xff]
        %v1548 = vld [vmem:[%s259 + $0x78] sm:$0xff]
        %v1549 = vld [vmem:[%s259 + $0x80] sm:$0xff]
        %v1550 = vld [vmem:[%s259 + $0x88] sm:$0xff]
        %v1551 = vld [vmem:[%s259 + $0x90] sm:$0xff]
        %v1552 = vld [vmem:[%s259 + $0x98] sm:$0xff]
        %v1553 = vld [vmem:[%s259 + $0xa0] sm:$0xff]
        %v1554 = vld [vmem:[%s259 + $0xa8] sm:$0xff]
        %v1555 = vld [vmem:[%s259 + $0xb0] sm:$0xff]
        %v1556 = vld [vmem:[%s259 + $0xb8] sm:$0xff]
        %v1557 = vld [vmem:[%s259 + $0xc0] sm:$0xff]
        %v1558 = vld [vmem:[%s259 + $0xc8] sm:$0xff]
        %v1559 = vld [vmem:[%s259 + $0xd0] sm:$0xff]
        %v1560 = vld [vmem:[%s259 + $0xd8] sm:$0xff]
        %v1561 = vld [vmem:[%s259 + $0xe0] sm:$0xff]
        %v1562 = vld [vmem:[%s259 + $0xe8] sm:$0xff]
        %v1563 = vld [vmem:[%s259 + $0xf0] sm:$0xff]
        %v1564 = vld [vmem:[%s259 + $0xf8] sm:$0xff]
        %v1565 = vld [vmem:[%s259 + $0x100] sm:$0xff]
        %v1566 = vld [vmem:[%s259 + $0x108] sm:$0xff]
        %v1567 = vld [vmem:[%s259 + $0x110] sm:$0xff]
        %v1568 = vld [vmem:[%s259 + $0x118] sm:$0xff]
        %v1569 = vld [vmem:[%s259 + $0x120] sm:$0xff]
        %v1570 = vld [vmem:[%s259 + $0x128] sm:$0xff]
        %v1571 = vld [vmem:[%s259 + $0x130] sm:$0xff]
        %v1572 = vld [vmem:[%s259 + $0x138] sm:$0xff]
        %v1573 = vld [vmem:[%s259 + $0x140] sm:$0xff]
        %v1574 = vld [vmem:[%s259 + $0x148] sm:$0xff]
        %v1575 = vld [vmem:[%s259 + $0x150] sm:$0xff]
        %v1576 = vld [vmem:[%s259 + $0x158] sm:$0xff]
        %v1577 = vld [vmem:[%s259 + $0x160] sm:$0xff]
        %v1578 = vld [vmem:[%s259 + $0x168] sm:$0xff]
        %v1579 = vld [vmem:[%s259 + $0x170] sm:$0xff]
        %v1580 = vld [vmem:[%s259 + $0x178] sm:$0xff]
        %1581 = vmatpush.msra.mxu0 %v1578
        %1582 = vmatpush.msra.mxu0 %v1575
        %1583 = vmatpush.msra.mxu0 %v1572
        %1584 = vmatpush.msra.mxu0 %v1569
        %1585 = vmatpush.msra.mxu0 %v1566
        %1586 = vmatpush.msra.mxu0 %v1563
        %1587 = vmatpush.msra.mxu0 %v1560
        %1588 = vmatpush.msra.mxu0 %v1557
        %1589 = vmatpush.msra.mxu0 %v1554
        %1590 = vmatpush.msra.mxu0 %v1551
        %1591 = vmatpush.msra.mxu0 %v1548
        %1592 = vmatpush.msra.mxu0 %v1545
        %1593 = vmatpush.msra.mxu0 %v1542
        %1594 = vmatpush.msra.mxu0 %v1539
        %1595 = vmatpush.msra.mxu0 %v1536
        %1596 = vmatpush.msra.mxu0 %v1533
        %1597 = vmatmul.f32.gmra.mxu0 %v1523
        %v1598 = vpop.f32.mrf.mxu0
        %v1599 = vadd.f32 0.0, %v1598
        %1600 = vdwg.mxu0
        %1601 = vmatpush.msra.mxu0 %v1579
        %1602 = vmatpush.msra.mxu0 %v1576
        %1603 = vmatpush.msra.mxu0 %v1573
        %1604 = vmatpush.msra.mxu0 %v1570
        %1605 = vmatpush.msra.mxu0 %v1567
        %1606 = vmatpush.msra.mxu0 %v1564
        %1607 = vmatpush.msra.mxu0 %v1561
        %1608 = vmatpush.msra.mxu0 %v1558
        %1609 = vmatpush.msra.mxu0 %v1555
        %1610 = vmatpush.msra.mxu0 %v1552
        %1611 = vmatpush.msra.mxu0 %v1549
        %1612 = vmatpush.msra.mxu0 %v1546
        %1613 = vmatpush.msra.mxu0 %v1543
        %1614 = vmatpush.msra.mxu0 %v1540
        %1615 = vmatpush.msra.mxu0 %v1537
        %1616 = vmatpush.msra.mxu0 %v1534
        %1617 = vmatmul.f32.gmra.mxu0 %v1523
        %v1618 = vpop.f32.mrf.mxu0
        %v1619 = vadd.f32 0.0, %v1618
        %1620 = vdwg.mxu0
        %1621 = vmatpush.msra.mxu0 %v1580
        %1622 = vmatpush.msra.mxu0 %v1577
        %1623 = vmatpush.msra.mxu0 %v1574
        %1624 = vmatpush.msra.mxu0 %v1571
        %1625 = vmatpush.msra.mxu0 %v1568
        %1626 = vmatpush.msra.mxu0 %v1565
        %1627 = vmatpush.msra.mxu0 %v1562
        %1628 = vmatpush.msra.mxu0 %v1559
        %1629 = vmatpush.msra.mxu0 %v1556
        %1630 = vmatpush.msra.mxu0 %v1553
        %1631 = vmatpush.msra.mxu0 %v1550
        %1632 = vmatpush.msra.mxu0 %v1547
        %1633 = vmatpush.msra.mxu0 %v1544
        %1634 = vmatpush.msra.mxu0 %v1541
        %1635 = vmatpush.msra.mxu0 %v1538
        %1636 = vmatpush.msra.mxu0 %v1535
        %1637 = vmatmul.f32.gmra.mxu0 %v1523
        %v1638 = vpop.f32.mrf.mxu0
        %v1639 = vadd.f32 0.0, %v1638
        %1640 = vdwg.mxu0
        %v1641 = vadd.f32 %v1532, %v1599
        %v1642 = vxor.u32 %v1641, 2147483648
        %v1643 = vmul.f32 %v1642, 1.442695
        %v1644 = vpow.pop %v1643
        %v1645 = vadd.f32 %v1644, 1.0
        %v1646 = vrcp.pop %v1645
        %v1647 = vmul.f32 %v1645, %v1646
        %v1648 = vsub.f32 1.0, %v1647
        %v1649 = vmul.f32 %v1646, %v1648
        %v1650 = vadd.f32 %v1646, %v1649
        %vm1651 = vweird.f32 %v1645
        %vm1652 = vweird.f32 %v1646
        %vm1653 = vmor %vm1651, %vm1652
        %v1654 = vsel %vm1653, %v1646, %v1650
        %v1655 = vand.u32 2147483647, %v1645
        %vm1656 = vcmp.eq.f32.partialorder %v1655, 8.507059e+37
        %v1657 = vand.u32 %v1645, 2147483648
        %v1658 = vor.u32 1.1754944e-38, %v1657
        %v1659 = vsel %vm1656, %v1658, %v1654
        %v1660 = vmul.f32 1.0, %v1659
        %v1662 = vrot.slane %v1532, 2
        %v1664 = vadd.f32 %v1662, %v1619
        %v1665 = vxor.u32 %v1664, 2147483648
        %v1666 = vmul.f32 %v1665, 1.442695
        %v1667 = vpow.pop %v1666
        %v1668 = vadd.f32 %v1667, 1.0
        %v1669 = vrcp.pop %v1668
        %v1670 = vmul.f32 %v1668, %v1669
        %v1671 = vsub.f32 1.0, %v1670
        %v1672 = vmul.f32 %v1669, %v1671
        %v1673 = vadd.f32 %v1669, %v1672
        %vm1674 = vweird.f32 %v1668
        %vm1675 = vweird.f32 %v1669
        %vm1676 = vmor %vm1674, %vm1675
        %v1677 = vsel %vm1676, %v1669, %v1673
        %v1678 = vand.u32 2147483647, %v1668
        %vm1679 = vcmp.eq.f32.partialorder %v1678, 8.507059e+37
        %v1680 = vand.u32 %v1668, 2147483648
        %v1681 = vor.u32 1.1754944e-38, %v1680
        %v1682 = vsel %vm1679, %v1681, %v1677
        %v1683 = vmul.f32 1.0, %v1682
        %v1684 = vadd.f32 %v1639, %v501
        %v1685 = vmul.f32 %v1660, %v1684
        %v1686 = vrot.slane %v1532, 4
        %v1688 = vadd.f32 %v1686, %v1685
        %v1689 = vtanh.pop %v1688
        %v1690 = vsub.f32 %v1523, %v1689
        %v1691 = vmul.f32 %v1683, %v1690
        %v1692 = vadd.f32 %v1689, %v1691
        %s1693 = smul.u32 %s1528, 2
        %s1694 = scalar_lea.vmem %s299, %s1693 [#allocation6]
        %1695 = vst [vmem:[%s1694] sm:$0x3] %v1692
        %1696 = vst [vmem:[#allocation2] sm:$0x3] %v1692
        // Predicated region
        $region41: #{_forward_impl.7} parent=31 // pred_check
          %p1697 = pneg %p337
        $region42: #{_forward_impl.7} parent=31 // pred_check_branch
          %1699 = sbr.rel (%p1697) target = $region44
        $region43: #{_forward_impl.7} parent=31 // pred_region
          %1700 = vst [vmem:[%s336] sm:$0x3] %v1692
        $region44: #{_forward_impl.7} parent=31 // pred_fallthru
          _
        %s1701 = sand.u32 %s140, 1
        %s1702 = scalar_lea.sflag [#allocation5], %s1701
        %s1703 = sand.u32 %s140, 1
        %s1704 = smul.addr %s1703, 16
        %s1705 = scalar_lea.vmem [#allocation6], %s1704
        %p1706 = scmp.lt.s32.totalorder %s26, 1
        %s1707 = scalar_select %p1706, %s26, 1
        %s1708 = smul.addr %s1707, 2
        %s1709 = scalar_lea.vmem %s4, %s1708
        // Predicated region
        $region45: #{_forward_impl.7} parent=31 // pred_check
          %p1710 = pneg %p150
        $region46: #{_forward_impl.7} parent=31 // pred_check_branch
          %1712 = sbr.rel (%p1710) target = $region48
        $region47: #{_forward_impl.7} parent=31 // pred_region
          %s1713 = smul.u32 %s27, 2
          %s1714 = ssub.s32 0, %s1713
          %s1715 = smul.u32 %s26, %s1714
          %s1716 = sadd.s32 %s27, %s1715
          %s1717 = smul.u32 8, %s1716
          %1719 = vsyncadd %s1702, 0
          %s1720 = smul.addr %s26, 8
          %s1721 = sadd.s32 %s1717, %s1720
          %s1722 = smul.addr %s1721, 2
          %s1723 = scalar_lea.hbm %s3, %s1722
          %s1724 = sshll.u32 %s1705, 4
          %s1725 = int_to_ptr.vmem [resolvable:$true] %s1724
          %s1726 = sshll.u32 %s1723, 4
          %s1727 = int_to_ptr.hbm [resolvable:$true] %s1726
          %1732 = dma.vmem_to_hbm [thread:$0]  %s1725, 256, %s1727, %s1702, 32, 32, 2
        $region48: #{_forward_impl.7} parent=31 // pred_fallthru
          _
        // Predicated region
        $region49: #{_forward_impl.7} parent=31 // pred_check
          %p1733 = pneg %p176
        $region50: #{_forward_impl.7} parent=31 // pred_check_branch
          %1735 = sbr.rel (%p1733) target = $region52
        $region51: #{_forward_impl.7} parent=31 // pred_region
          _
        $region52: #{_forward_impl.7} parent=31 // pred_fallthru
          _
      $region32: #{_forward_impl.7} parent=5 // pred_fallthru
        _
      %p1736 = scmp.le.s32.totalorder 2, %s17
      // Predicated region
      $region53: #{_forward_impl.7} parent=5 // pred_check
        %p1737 = pneg %p1736
      $region54: #{_forward_impl.7} parent=5 // pred_check_branch
        %1739 = sbr.rel (%p1737) target = $region56
      $region55: #{_forward_impl.7} parent=5 // pred_region
        %s1740 = ssub.s32 %s17, 2
        // Predicated region
        $region57: #{_forward_impl.7} parent=55 // pred_check
          %p1741 = pneg %p156
        $region58: #{_forward_impl.7} parent=55 // pred_check_branch
          %1743 = sbr.rel (%p1741) target = $region60
        $region59: #{_forward_impl.7} parent=55 // pred_region
          %s1744 = sand.u32 %s141, 1
          %s1745 = scalar_lea.sflag [#allocation5], %s1744
          %s1746 = sand.u32 %s141, 1
          %s1747 = smul.addr %s1746, 16
          %s1748 = scalar_lea.vmem [#allocation6], %s1747
          %1750 = dma.done %s1745, 256
        $region60: #{_forward_impl.7} parent=55 // pred_fallthru
          _
        // Predicated region
        $region61: #{_forward_impl.7} parent=55 // pred_check
          %p1751 = pneg %p182
        $region62: #{_forward_impl.7} parent=55 // pred_check_branch
          %1753 = sbr.rel (%p1751) target = $region64
        $region63: #{_forward_impl.7} parent=55 // pred_region
          %p1754 = scmp.lt.s32.totalorder %s28, 1
          %s1755 = scalar_select %p1754, %s28, 1
          %s1756 = smul.addr %s1755, 2
          %s1757 = scalar_lea.vmem %s4, %s1756
        $region64: #{_forward_impl.7} parent=55 // pred_fallthru
          _
      $region56: #{_forward_impl.7} parent=5 // pred_fallthru
        _
    $region6: #{_forward_impl.7} parent=1 // loop_footer
      %s21 = sadd.s32 1, %s17
    $region7: #{_forward_impl.7} parent=1 // loop_footer_branch
      %16 = sbr.rel target = $region3
    $region8: #{_forward_impl.7} parent=1 // loop_exit
      _
    %1758 = vsyncpa [#allocation4], 1
    %s1759 = scalar_lea.sflag [#allocation4], 1
    %1760 = vsyncpa %s1759, 1
    %1761 = vsyncpa [#allocation5], 1
    %s1762 = scalar_lea.sflag [#allocation5], 1
    %1763 = vsyncpa %s1762, 1

</llo_original>
